<compile_context>
chip_gen: v7x
topology: tpu7x:2x2x1
jax: 0.10.0
libtpu: 0.0.40
codegen_flags: <defaults>
</compile_context>

<pallas_src>
import functools

import numpy as np

import jax
import jax.numpy as jnp
from jax.experimental import pallas as pl
from jax.experimental.pallas import tpu as pltpu


# ---------------------------------------------------------------------------
# Fused forward kernel
# ---------------------------------------------------------------------------
def _arcash_kernel(x_ref, mask_ref, rot_ref,
                   w1_ref, b1_ref, w2_ref, b2_ref, w3_ref, b3_ref,
                   wb1_ref, fb1_ref, wb2_ref, fb2_ref,
                   out_ref, *, shifts, gauss, n_batch):
    """Whole ArcAsh3D forward on VMEM-resident data.

    Activation layout: [C, M] with channels on sublanes and
    M = N * D * H * W (batch-major flattened voxels) on lanes.
    `shifts`/`gauss` are static Python tuples (27 taps of the 3x3x3 stencil).

    NOTE: the roll shifts + border masks are only valid for the FULL,
    UNTILED [n*sp] lane axis (a cross-batch lane wrap is always masked to
    zero).  If M is ever tiled over a grid axis or the batch layout changes,
    rebuild `shifts`/`mask` accordingly.
    """
    cin, m = x_ref.shape                 # conv1 in-channels, flattened voxels
    c2 = b2_ref.shape[0]                 # conv2 out-channels
    c3 = b3_ref.shape[0]                 # conv3 out-channels
    sp = m // n_batch                    # voxels per sample
    ntap = len(shifts)                   # 27

    def roll_mask(v, t):
        """Tap-t spatially shifted copy of v ([rows, M]); zero outside volume."""
        r = v if shifts[t] == 0 else pltpu.roll(v, shifts[t], axis=1)
        return r * mask_ref[t:t + 1, :]

    # -- conv1 + ReLU ---------------------------------------------------------
    # im2col stack built in registers (no scratch round-trip), one bf16 cast,
    # single MXU matmul [128, 27*cin] @ [27*cin, M].
    x0 = x_ref[...]
    stack = jnp.concatenate([roll_mask(x0, t) for t in range(ntap)], axis=0)
    act = jnp.dot(w1_ref[...], stack.astype(jnp.bfloat16),
                  preferred_element_type=jnp.float32)
    act = jnp.maximum(act + b1_ref[...], 0.0)                     # [128, M] f32

    # -- quaternion rotation --------------------------------------------------
    # Per-sample [sp, sp] 0/1 permutation applied as a bf16 MXU matmul on each
    # aligned lane block (block-diagonal structure of the full [M, M] matrix).
    act_bf = act.astype(jnp.bfloat16)
    rot = jnp.concatenate(
        [jnp.dot(act_bf[:, b * sp:(b + 1) * sp], rot_ref[...],
                 preferred_element_type=jnp.float32).astype(jnp.bfloat16)
         for b in range(n_batch)], axis=1)                        # [128, M] bf16

    def conv_small(w_ref, x_bf, cout, b_ref):
        """Small-Cout conv: matmul FIRST against the un-shifted input, then
        roll+mask+accumulate the tiny [cout, M] output slabs (mask commutes
        with the channel contraction)."""
        z = jnp.dot(w_ref[...], x_bf, preferred_element_type=jnp.float32)
        acc = jnp.zeros((cout, m), jnp.float32)
        for t in range(ntap):
            acc = acc + roll_mask(z[t * cout:(t + 1) * cout, :], t)
        return jnp.maximum(acc + b_ref[...], 0.0)

    # -- conv2 + ReLU: one [27*c2, 128] @ [128, M] bf16 matmul ----------------
    act = conv_small(w2_ref, rot, c2, b2_ref)                      # [c2, M] f32

    # -- gaussian diffusion: depthwise 27-tap blur on the VPU -----------------
    blur = jnp.zeros_like(act)
    for t in range(ntap):
        blur = blur + gauss[t] * roll_mask(act, t)

    # -- conv3 + ReLU: same matmul-first structure (no second im2col stack) ---
    act = conv_small(w3_ref, blur.astype(jnp.bfloat16), c3, b3_ref)  # [c3, M]

    # -- flatten + 2-layer MLP -------------------------------------------------
    # The [n, c*sp] flatten order and the per-sample Linear layers are folded
    # into block-diagonal weights (wb1: [c3, M, n*hidden], wb2:
    # [n*hidden, n*classes]) at prepare time, so this is just an accumulated
    # per-channel matmul on the existing [c, n*sp] layout.
    nhid = wb1_ref.shape[2]
    hid = jnp.zeros((1, nhid), jnp.float32)
    for c in range(c3):
        hid = hid + jnp.dot(act[c:c + 1, :], wb1_ref[c],
                            preferred_element_type=jnp.float32)
    hid = jnp.maximum(hid + fb1_ref[...], 0.0)                     # [1, n*hidden]
    out_ref[...] = (jnp.dot(hid, wb2_ref[...],
                            preferred_element_type=jnp.float32)
                    + fb2_ref[...])                                # [1, n*classes]


# ---------------------------------------------------------------------------
# Static tables (roll shifts, boundary masks, gaussian taps, rotation matrix)
# ---------------------------------------------------------------------------
_TAPS = [(dd, dh, dw) for dd in (-1, 0, 1) for dh in (-1, 0, 1)
         for dw in (-1, 0, 1)]


def build_constants(n, d, h, w, sigma=1.0):
    sp = d * h * w
    m = n * sp

    # Lane-roll amount per 3x3x3 tap (layout m = n*sp + d*H*W + h*W + w).
    # Tied to the UNTILED [n*sp] lane layout: the border mask below zeroes
    # every out-of-volume (and hence every cross-batch-wrapping) contribution.
    shifts = tuple(int((-(dd * h * w + dh * w + dw)) % m)
                   for dd, dh, dw in _TAPS)

    # Per-tap validity mask (zero padding at the volume border), [27, M], f32.
    # Kept f32: every mask multiply in the kernel is against f32 data, so f32
    # avoids per-use bf16->f32 promotes; it is a 54 KiB one-time constant.
    gd, gh, gw = np.meshgrid(np.arange(d), np.arange(h), np.arange(w),
                             indexing="ij")
    masks = []
    for dd, dh, dw in _TAPS:
        ok = ((gd + dd >= 0) & (gd + dd < d) &
              (gh + dh >= 0) & (gh + dh < h) &
              (gw + dw >= 0) & (gw + dw < w))
        masks.append(np.tile(ok.reshape(-1).astype(np.float32), n))
    mask = np.stack(masks, axis=0)

    # 3x3x3 gaussian weights (sigma fixed) as Python-float compile constants.
    g = np.array([np.exp(-(dd * dd + dh * dh + dw * dw) / (2.0 * sigma ** 2))
                  for dd, dh, dw in _TAPS], dtype=np.float64)
    gauss = tuple(float(v) for v in (g / g.sum()))

    # TODO(synk): QuaternionRotation reference not provided; stand-in is a
    # Rodrigues rotation (axis=[1,1,1], theta=0.1) about the volume center,
    # nearest-neighbor resampled, zero outside.  Built as a PER-SAMPLE [sp, sp]
    # 0/1 permutation (applied block-diagonally per batch element) in bf16
    # (0/1 entries are exact in bf16).
    axis = np.array([1.0, 1.0, 1.0], np.float64)
    axis = axis / np.linalg.norm(axis)
    theta = 0.1
    kmat = np.array([[0.0, -axis[2], axis[1]],
                     [axis[2], 0.0, -axis[0]],
                     [-axis[1], axis[0], 0.0]])
    rot = (np.eye(3) * np.cos(theta) + np.sin(theta) * kmat
           + (1.0 - np.cos(theta)) * np.outer(axis, axis))
    ctr = np.array([(d - 1) / 2.0, (h - 1) / 2.0, (w - 1) / 2.0])
    coords = np.stack([gd, gh, gw], axis=-1).reshape(-1, 3).astype(np.float64)
    src = (coords - ctr) @ rot + ctr
    src_i = np.rint(src).astype(np.int64)
    valid = np.all((src_i >= 0) & (src_i < np.array([d, h, w])), axis=-1)
    src_flat = (np.clip(src_i[:, 0], 0, d - 1) * h * w
                + np.clip(src_i[:, 1], 0, h - 1) * w
                + np.clip(src_i[:, 2], 0, w - 1))
    perm = np.zeros((sp, sp), np.float32)
    for so in range(sp):
        if valid[so]:
            perm[src_flat[so], so] = 1.0

    return dict(shifts=shifts, gauss=gauss,
                mask=jnp.asarray(mask),
                rotP=jnp.asarray(perm, jnp.bfloat16))


# ---------------------------------------------------------------------------
# Parameters: deterministic PyTorch-like init + one-time kernel re-layout
# ---------------------------------------------------------------------------
def _uniform(key, shape, fan_in):
    bound = 1.0 / np.sqrt(float(fan_in))
    return jax.random.uniform(key, shape, jnp.float32, -bound, bound)


def init_params(key, batch_size, num_classes):
    ks = jax.random.split(key, 10)
    p = {}
    p["w1"] = _uniform(ks[0], (128, batch_size, 3, 3, 3), batch_size * 27)
    p["b1"] = _uniform(ks[1], (128,), batch_size * 27)
    p["w2"] = _uniform(ks[2], (batch_size, 128, 3, 3, 3), 128 * 27)
    p["b2"] = _uniform(ks[3], (batch_size,), 128 * 27)
    p["w3"] = _uniform(ks[4], (batch_size, batch_size, 3, 3, 3), batch_size * 27)
    p["b3"] = _uniform(ks[5], (batch_size,), batch_size * 27)
    p["fw1"] = _uniform(ks[6], (512, batch_size), 512)       # [in, out]
    p["fb1"] = _uniform(ks[7], (batch_size,), 512)
    p["fw2"] = _uniform(ks[8], (batch_size, num_classes), batch_size)
    p["fb2"] = _uniform(ks[9], (num_classes,), batch_size)
    return p


def prepare_params(p, n_batch):
    """One-time weight re-layout / bf16 cast / flatten-fold (hoisted out of
    the forward)."""
    c1, cin = p["w1"].shape[:2]          # 128, conv1 in-channels (=batch_size)
    c2 = p["w2"].shape[0]                # conv2/conv3 out-channels
    hidden = p["fw1"].shape[1]
    ncls = p["fw2"].shape[1]
    feat = p["fw1"].shape[0]             # 512
    sp = feat // c2                      # voxels per sample

    w1 = np.asarray(p["w1"], np.float32)
    w2 = np.asarray(p["w2"], np.float32)
    w3 = np.asarray(p["w3"], np.float32)

    # conv1: [c1, 27*cin] LHS, columns (tap-major, cin-minor) == im2col rows.
    w1k = w1.reshape(c1, cin, 27).transpose(0, 2, 1).reshape(c1, 27 * cin)
    # conv2/conv3: [27*cout, cin] stacked LHS, rows (tap-major, cout-minor),
    # for the "matmul-first, roll the outputs" formulation.
    w2k = w2.reshape(c2, c1, 27).transpose(2, 0, 1).reshape(27 * c2, c1)
    w3k = w3.reshape(c2, c2, 27).transpose(2, 0, 1).reshape(27 * c2, c2)

    # Fold PyTorch's [n, c*sp + s] Flatten order and the per-sample Linear
    # layers into block-diagonal weights (hid/out kept in a flat [1, n*·]
    # lane layout inside the kernel).
    fw1 = np.asarray(p["fw1"], np.float32).reshape(c2, sp, hidden)
    fw2 = np.asarray(p["fw2"], np.float32)
    wb1 = np.zeros((c2, n_batch * sp, n_batch * hidden), np.float32)
    wb2 = np.zeros((n_batch * hidden, n_batch * ncls), np.float32)
    for b in range(n_batch):
        wb1[:, b * sp:(b + 1) * sp, b * hidden:(b + 1) * hidden] = fw1
        wb2[b * hidden:(b + 1) * hidden, b * ncls:(b + 1) * ncls] = fw2
    fb1 = np.tile(np.asarray(p["fb1"], np.float32), n_batch).reshape(1, -1)
    fb2 = np.tile(np.asarray(p["fb2"], np.float32), n_batch).reshape(1, -1)

    return dict(
        w1=jnp.asarray(w1k, jnp.bfloat16), b1=jnp.asarray(p["b1"]).reshape(c1, 1),
        w2=jnp.asarray(w2k, jnp.bfloat16), b2=jnp.asarray(p["b2"]).reshape(c2, 1),
        w3=jnp.asarray(w3k, jnp.bfloat16), b3=jnp.asarray(p["b3"]).reshape(c2, 1),
        wb1=jnp.asarray(wb1), fb1=jnp.asarray(fb1),
        wb2=jnp.asarray(wb2), fb2=jnp.asarray(fb2),
        num_classes=ncls)


# ---------------------------------------------------------------------------
# Forward wrapper (single fused pallas_call)
# ---------------------------------------------------------------------------
def arcash3d_forward(kparams, consts, x):
    n, c, d, h, w = x.shape
    m = n * d * h * w
    sp = d * h * w
    n_cls = int(kparams["num_classes"])
    # Layout-coupling checks (the roll/mask tables assume the untiled [n*sp]
    # lane axis and this exact sample count).
    assert consts["mask"].shape == (27, m)
    assert consts["rotP"].shape == (sp, sp)
    assert kparams["w1"].shape[1] == 27 * c, "conv1 in_channels mismatch"
    assert kparams["wb1"].shape[1] == m and kparams["wb2"].shape[1] == n * n_cls

    # NCDHW -> [C, M] (channels on sublanes, flattened batch*voxels on lanes).
    x_cm = jnp.transpose(x, (1, 0, 2, 3, 4)).reshape(c, m)

    vmem = pl.BlockSpec(memory_space=pltpu.MemorySpace.VMEM)
    kernel = functools.partial(_arcash_kernel, shifts=consts["shifts"],
                               gauss=consts["gauss"], n_batch=n)
    # Single fused, gridless invocation: the whole working set is <1 MiB of
    # VMEM on v5e/v6e/v7x.  If batch or volume grows, tile over a batch grid
    # axis marked "parallel" (rotP is already per-sample) so v7x's second
    # TensorCore is used.
    out_flat = pl.pallas_call(
        kernel,
        out_shape=jax.ShapeDtypeStruct((1, n * n_cls), jnp.float32),
        in_specs=[vmem] * 13,
        out_specs=vmem,
    )(x_cm, consts["mask"], consts["rotP"],
      kparams["w1"], kparams["b1"], kparams["w2"], kparams["b2"],
      kparams["w3"], kparams["b3"],
      kparams["wb1"], kparams["fb1"], kparams["wb2"], kparams["fb2"])
    # Free reshape back to the PyTorch [n, num_classes] output shape.
    return out_flat.reshape(n, n_cls)


if __name__ == "__main__":
    # Shapes chosen so Flatten -> 512 features (batch_size * D*H*W = 512):
    batch_size = 2
    num_classes = 10
    D, H, W = 8, 8, 4

    key = jax.random.PRNGKey(0)
    pkey, xkey = jax.random.split(key)
    params = init_params(pkey, batch_size, num_classes)
    kparams = prepare_params(params, n_batch=batch_size)   # one-time re-layout
    consts = build_constants(batch_size, D, H, W)          # one-time constants

    # Input: [N, C, D, H, W] with C = batch_size (conv1 in_channels).
    x = jax.random.normal(xkey, (batch_size, batch_size, D, H, W), jnp.float32)

    fwd = jax.jit(lambda inp: arcash3d_forward(kparams, consts, inp))
    out = jax.block_until_ready(fwd(x))
    assert out.shape == (batch_size, num_classes), out.shape
    assert bool(jnp.all(jnp.isfinite(out)))
    print("KERNEL_OK")
</pallas_src>

<mosaic_0001>
module attributes {stable_mosaic.version = 11 : i64} {
  func.func @_arcash_kernel(%arg0: memref<2x512xf32, #tpu.memory_space<vmem>>, %arg1: memref<27x512xf32, #tpu.memory_space<vmem>>, %arg2: memref<256x256xbf16, #tpu.memory_space<vmem>>, %arg3: memref<128x54xbf16, #tpu.memory_space<vmem>>, %arg4: memref<128x1xf32, #tpu.memory_space<vmem>>, %arg5: memref<54x128xbf16, #tpu.memory_space<vmem>>, %arg6: memref<2x1xf32, #tpu.memory_space<vmem>>, %arg7: memref<54x2xbf16, #tpu.memory_space<vmem>>, %arg8: memref<2x1xf32, #tpu.memory_space<vmem>>, %arg9: memref<2x512x4xf32, #tpu.memory_space<vmem>>, %arg10: memref<1x4xf32, #tpu.memory_space<vmem>>, %arg11: memref<4x20xf32, #tpu.memory_space<vmem>>, %arg12: memref<1x20xf32, #tpu.memory_space<vmem>>, %arg13: memref<1x20xf32, #tpu.memory_space<vmem>>) attributes {dimension_semantics = [], scalar_prefetch = 0 : i64, scratch_operands = 0 : i64, tpu.core_type = #tpu.core_type<tc>} {
    %c0 = arith.constant 0 : index
    %c0_0 = arith.constant 0 : index
    %0 = vector.load %arg0[%c0, %c0_0] : memref<2x512xf32, #tpu.memory_space<vmem>>, vector<2x512xf32>
    %c37_i32 = arith.constant 37 : i32
    %1 = tpu.dynamic_rotate %0 by %c37_i32 dim 1 : vector<2x512xf32>, i32 -> vector<2x512xf32>
    %c0_1 = arith.constant 0 : index
    %c0_2 = arith.constant 0 : index
    %2 = vector.load %arg1[%c0_1, %c0_2] : memref<27x512xf32, #tpu.memory_space<vmem>>, vector<1x512xf32>
    %3 = vector.broadcast %2 : vector<1x512xf32> to vector<2x512xf32>
    %4 = arith.mulf %1, %3 : vector<2x512xf32>
    %c36_i32 = arith.constant 36 : i32
    %5 = tpu.dynamic_rotate %0 by %c36_i32 dim 1 : vector<2x512xf32>, i32 -> vector<2x512xf32>
    %c1 = arith.constant 1 : index
    %c0_3 = arith.constant 0 : index
    %6 = vector.load %arg1[%c1, %c0_3] : memref<27x512xf32, #tpu.memory_space<vmem>>, vector<1x512xf32>
    %7 = vector.broadcast %6 : vector<1x512xf32> to vector<2x512xf32>
    %8 = arith.mulf %5, %7 : vector<2x512xf32>
    %c35_i32 = arith.constant 35 : i32
    %9 = tpu.dynamic_rotate %0 by %c35_i32 dim 1 : vector<2x512xf32>, i32 -> vector<2x512xf32>
    %c2 = arith.constant 2 : index
    %c0_4 = arith.constant 0 : index
    %10 = vector.load %arg1[%c2, %c0_4] : memref<27x512xf32, #tpu.memory_space<vmem>>, vector<1x512xf32>
    %11 = vector.broadcast %10 : vector<1x512xf32> to vector<2x512xf32>
    %12 = arith.mulf %9, %11 : vector<2x512xf32>
    %c33_i32 = arith.constant 33 : i32
    %13 = tpu.dynamic_rotate %0 by %c33_i32 dim 1 : vector<2x512xf32>, i32 -> vector<2x512xf32>
    %c3 = arith.constant 3 : index
    %c0_5 = arith.constant 0 : index
    %14 = vector.load %arg1[%c3, %c0_5] : memref<27x512xf32, #tpu.memory_space<vmem>>, vector<1x512xf32>
    %15 = vector.broadcast %14 : vector<1x512xf32> to vector<2x512xf32>
    %16 = arith.mulf %13, %15 : vector<2x512xf32>
    %c32_i32 = arith.constant 32 : i32
    %17 = tpu.dynamic_rotate %0 by %c32_i32 dim 1 : vector<2x512xf32>, i32 -> vector<2x512xf32>
    %c4 = arith.constant 4 : index
    %c0_6 = arith.constant 0 : index
    %18 = vector.load %arg1[%c4, %c0_6] : memref<27x512xf32, #tpu.memory_space<vmem>>, vector<1x512xf32>
    %19 = vector.broadcast %18 : vector<1x512xf32> to vector<2x512xf32>
    %20 = arith.mulf %17, %19 : vector<2x512xf32>
    %c31_i32 = arith.constant 31 : i32
    %21 = tpu.dynamic_rotate %0 by %c31_i32 dim 1 : vector<2x512xf32>, i32 -> vector<2x512xf32>
    %c5 = arith.constant 5 : index
    %c0_7 = arith.constant 0 : index
    %22 = vector.load %arg1[%c5, %c0_7] : memref<27x512xf32, #tpu.memory_space<vmem>>, vector<1x512xf32>
    %23 = vector.broadcast %22 : vector<1x512xf32> to vector<2x512xf32>
    %24 = arith.mulf %21, %23 : vector<2x512xf32>
    %c29_i32 = arith.constant 29 : i32
    %25 = tpu.dynamic_rotate %0 by %c29_i32 dim 1 : vector<2x512xf32>, i32 -> vector<2x512xf32>
    %c6 = arith.constant 6 : index
    %c0_8 = arith.constant 0 : index
    %26 = vector.load %arg1[%c6, %c0_8] : memref<27x512xf32, #tpu.memory_space<vmem>>, vector<1x512xf32>
    %27 = vector.broadcast %26 : vector<1x512xf32> to vector<2x512xf32>
    %28 = arith.mulf %25, %27 : vector<2x512xf32>
    %c28_i32 = arith.constant 28 : i32
    %29 = tpu.dynamic_rotate %0 by %c28_i32 dim 1 : vector<2x512xf32>, i32 -> vector<2x512xf32>
    %c7 = arith.constant 7 : index
    %c0_9 = arith.constant 0 : index
    %30 = vector.load %arg1[%c7, %c0_9] : memref<27x512xf32, #tpu.memory_space<vmem>>, vector<1x512xf32>
    %31 = vector.broadcast %30 : vector<1x512xf32> to vector<2x512xf32>
    %32 = arith.mulf %29, %31 : vector<2x512xf32>
    %c27_i32 = arith.constant 27 : i32
    %33 = tpu.dynamic_rotate %0 by %c27_i32 dim 1 : vector<2x512xf32>, i32 -> vector<2x512xf32>
    %c8 = arith.constant 8 : index
    %c0_10 = arith.constant 0 : index
    %34 = vector.load %arg1[%c8, %c0_10] : memref<27x512xf32, #tpu.memory_space<vmem>>, vector<1x512xf32>
    %35 = vector.broadcast %34 : vector<1x512xf32> to vector<2x512xf32>
    %36 = arith.mulf %33, %35 : vector<2x512xf32>
    %c5_i32 = arith.constant 5 : i32
    %37 = tpu.dynamic_rotate %0 by %c5_i32 dim 1 : vector<2x512xf32>, i32 -> vector<2x512xf32>
    %c9 = arith.constant 9 : index
    %c0_11 = arith.constant 0 : index
    %38 = vector.load %arg1[%c9, %c0_11] : memref<27x512xf32, #tpu.memory_space<vmem>>, vector<1x512xf32>
    %39 = vector.broadcast %38 : vector<1x512xf32> to vector<2x512xf32>
    %40 = arith.mulf %37, %39 : vector<2x512xf32>
    %c4_i32 = arith.constant 4 : i32
    %41 = tpu.dynamic_rotate %0 by %c4_i32 dim 1 : vector<2x512xf32>, i32 -> vector<2x512xf32>
    %c10 = arith.constant 10 : index
    %c0_12 = arith.constant 0 : index
    %42 = vector.load %arg1[%c10, %c0_12] : memref<27x512xf32, #tpu.memory_space<vmem>>, vector<1x512xf32>
    %43 = vector.broadcast %42 : vector<1x512xf32> to vector<2x512xf32>
    %44 = arith.mulf %41, %43 : vector<2x512xf32>
    %c3_i32 = arith.constant 3 : i32
    %45 = tpu.dynamic_rotate %0 by %c3_i32 dim 1 : vector<2x512xf32>, i32 -> vector<2x512xf32>
    %c11 = arith.constant 11 : index
    %c0_13 = arith.constant 0 : index
    %46 = vector.load %arg1[%c11, %c0_13] : memref<27x512xf32, #tpu.memory_space<vmem>>, vector<1x512xf32>
    %47 = vector.broadcast %46 : vector<1x512xf32> to vector<2x512xf32>
    %48 = arith.mulf %45, %47 : vector<2x512xf32>
    %c1_i32 = arith.constant 1 : i32
    %49 = tpu.dynamic_rotate %0 by %c1_i32 dim 1 : vector<2x512xf32>, i32 -> vector<2x512xf32>
    %c12 = arith.constant 12 : index
    %c0_14 = arith.constant 0 : index
    %50 = vector.load %arg1[%c12, %c0_14] : memref<27x512xf32, #tpu.memory_space<vmem>>, vector<1x512xf32>
    %51 = vector.broadcast %50 : vector<1x512xf32> to vector<2x512xf32>
    %52 = arith.mulf %49, %51 : vector<2x512xf32>
    %c13 = arith.constant 13 : index
    %c0_15 = arith.constant 0 : index
    %53 = vector.load %arg1[%c13, %c0_15] : memref<27x512xf32, #tpu.memory_space<vmem>>, vector<1x512xf32>
    %54 = vector.broadcast %53 : vector<1x512xf32> to vector<2x512xf32>
    %55 = arith.mulf %0, %54 : vector<2x512xf32>
    %c511_i32 = arith.constant 511 : i32
    %56 = tpu.dynamic_rotate %0 by %c511_i32 dim 1 : vector<2x512xf32>, i32 -> vector<2x512xf32>
    %c14 = arith.constant 14 : index
    %c0_16 = arith.constant 0 : index
    %57 = vector.load %arg1[%c14, %c0_16] : memref<27x512xf32, #tpu.memory_space<vmem>>, vector<1x512xf32>
    %58 = vector.broadcast %57 : vector<1x512xf32> to vector<2x512xf32>
    %59 = arith.mulf %56, %58 : vector<2x512xf32>
    %c509_i32 = arith.constant 509 : i32
    %60 = tpu.dynamic_rotate %0 by %c509_i32 dim 1 : vector<2x512xf32>, i32 -> vector<2x512xf32>
    %c15 = arith.constant 15 : index
    %c0_17 = arith.constant 0 : index
    %61 = vector.load %arg1[%c15, %c0_17] : memref<27x512xf32, #tpu.memory_space<vmem>>, vector<1x512xf32>
    %62 = vector.broadcast %61 : vector<1x512xf32> to vector<2x512xf32>
    %63 = arith.mulf %60, %62 : vector<2x512xf32>
    %c508_i32 = arith.constant 508 : i32
    %64 = tpu.dynamic_rotate %0 by %c508_i32 dim 1 : vector<2x512xf32>, i32 -> vector<2x512xf32>
    %c16 = arith.constant 16 : index
    %c0_18 = arith.constant 0 : index
    %65 = vector.load %arg1[%c16, %c0_18] : memref<27x512xf32, #tpu.memory_space<vmem>>, vector<1x512xf32>
    %66 = vector.broadcast %65 : vector<1x512xf32> to vector<2x512xf32>
    %67 = arith.mulf %64, %66 : vector<2x512xf32>
    %c507_i32 = arith.constant 507 : i32
    %68 = tpu.dynamic_rotate %0 by %c507_i32 dim 1 : vector<2x512xf32>, i32 -> vector<2x512xf32>
    %c17 = arith.constant 17 : index
    %c0_19 = arith.constant 0 : index
    %69 = vector.load %arg1[%c17, %c0_19] : memref<27x512xf32, #tpu.memory_space<vmem>>, vector<1x512xf32>
    %70 = vector.broadcast %69 : vector<1x512xf32> to vector<2x512xf32>
    %71 = arith.mulf %68, %70 : vector<2x512xf32>
    %c485_i32 = arith.constant 485 : i32
    %72 = tpu.dynamic_rotate %0 by %c485_i32 dim 1 : vector<2x512xf32>, i32 -> vector<2x512xf32>
    %c18 = arith.constant 18 : index
    %c0_20 = arith.constant 0 : index
    %73 = vector.load %arg1[%c18, %c0_20] : memref<27x512xf32, #tpu.memory_space<vmem>>, vector<1x512xf32>
    %74 = vector.broadcast %73 : vector<1x512xf32> to vector<2x512xf32>
    %75 = arith.mulf %72, %74 : vector<2x512xf32>
    %c484_i32 = arith.constant 484 : i32
    %76 = tpu.dynamic_rotate %0 by %c484_i32 dim 1 : vector<2x512xf32>, i32 -> vector<2x512xf32>
    %c19 = arith.constant 19 : index
    %c0_21 = arith.constant 0 : index
    %77 = vector.load %arg1[%c19, %c0_21] : memref<27x512xf32, #tpu.memory_space<vmem>>, vector<1x512xf32>
    %78 = vector.broadcast %77 : vector<1x512xf32> to vector<2x512xf32>
    %79 = arith.mulf %76, %78 : vector<2x512xf32>
    %c483_i32 = arith.constant 483 : i32
    %80 = tpu.dynamic_rotate %0 by %c483_i32 dim 1 : vector<2x512xf32>, i32 -> vector<2x512xf32>
    %c20 = arith.constant 20 : index
    %c0_22 = arith.constant 0 : index
    %81 = vector.load %arg1[%c20, %c0_22] : memref<27x512xf32, #tpu.memory_space<vmem>>, vector<1x512xf32>
    %82 = vector.broadcast %81 : vector<1x512xf32> to vector<2x512xf32>
    %83 = arith.mulf %80, %82 : vector<2x512xf32>
    %c481_i32 = arith.constant 481 : i32
    %84 = tpu.dynamic_rotate %0 by %c481_i32 dim 1 : vector<2x512xf32>, i32 -> vector<2x512xf32>
    %c21 = arith.constant 21 : index
    %c0_23 = arith.constant 0 : index
    %85 = vector.load %arg1[%c21, %c0_23] : memref<27x512xf32, #tpu.memory_space<vmem>>, vector<1x512xf32>
    %86 = vector.broadcast %85 : vector<1x512xf32> to vector<2x512xf32>
    %87 = arith.mulf %84, %86 : vector<2x512xf32>
    %c480_i32 = arith.constant 480 : i32
    %88 = tpu.dynamic_rotate %0 by %c480_i32 dim 1 : vector<2x512xf32>, i32 -> vector<2x512xf32>
    %c22 = arith.constant 22 : index
    %c0_24 = arith.constant 0 : index
    %89 = vector.load %arg1[%c22, %c0_24] : memref<27x512xf32, #tpu.memory_space<vmem>>, vector<1x512xf32>
    %90 = vector.broadcast %89 : vector<1x512xf32> to vector<2x512xf32>
    %91 = arith.mulf %88, %90 : vector<2x512xf32>
    %c479_i32 = arith.constant 479 : i32
    %92 = tpu.dynamic_rotate %0 by %c479_i32 dim 1 : vector<2x512xf32>, i32 -> vector<2x512xf32>
    %c23 = arith.constant 23 : index
    %c0_25 = arith.constant 0 : index
    %93 = vector.load %arg1[%c23, %c0_25] : memref<27x512xf32, #tpu.memory_space<vmem>>, vector<1x512xf32>
    %94 = vector.broadcast %93 : vector<1x512xf32> to vector<2x512xf32>
    %95 = arith.mulf %92, %94 : vector<2x512xf32>
    %c477_i32 = arith.constant 477 : i32
    %96 = tpu.dynamic_rotate %0 by %c477_i32 dim 1 : vector<2x512xf32>, i32 -> vector<2x512xf32>
    %c24 = arith.constant 24 : index
    %c0_26 = arith.constant 0 : index
    %97 = vector.load %arg1[%c24, %c0_26] : memref<27x512xf32, #tpu.memory_space<vmem>>, vector<1x512xf32>
    %98 = vector.broadcast %97 : vector<1x512xf32> to vector<2x512xf32>
    %99 = arith.mulf %96, %98 : vector<2x512xf32>
    %c476_i32 = arith.constant 476 : i32
    %100 = tpu.dynamic_rotate %0 by %c476_i32 dim 1 : vector<2x512xf32>, i32 -> vector<2x512xf32>
    %c25 = arith.constant 25 : index
    %c0_27 = arith.constant 0 : index
    %101 = vector.load %arg1[%c25, %c0_27] : memref<27x512xf32, #tpu.memory_space<vmem>>, vector<1x512xf32>
    %102 = vector.broadcast %101 : vector<1x512xf32> to vector<2x512xf32>
    %103 = arith.mulf %100, %102 : vector<2x512xf32>
    %c475_i32 = arith.constant 475 : i32
    %104 = tpu.dynamic_rotate %0 by %c475_i32 dim 1 : vector<2x512xf32>, i32 -> vector<2x512xf32>
    %c26 = arith.constant 26 : index
    %c0_28 = arith.constant 0 : index
    %105 = vector.load %arg1[%c26, %c0_28] : memref<27x512xf32, #tpu.memory_space<vmem>>, vector<1x512xf32>
    %106 = vector.broadcast %105 : vector<1x512xf32> to vector<2x512xf32>
    %107 = arith.mulf %104, %106 : vector<2x512xf32>
    %108 = tpu.concatenate %4, %8, %12, %16, %20, %24, %28, %32, %36, %40, %44, %48, %52, %55, %59, %63 in 0 : vector<2x512xf32>, vector<2x512xf32>, vector<2x512xf32>, vector<2x512xf32>, vector<2x512xf32>, vector<2x512xf32>, vector<2x512xf32>, vector<2x512xf32>, vector<2x512xf32>, vector<2x512xf32>, vector<2x512xf32>, vector<2x512xf32>, vector<2x512xf32>, vector<2x512xf32>, vector<2x512xf32>, vector<2x512xf32> -> vector<32x512xf32>
    %109 = tpu.concatenate %67, %71, %75, %79, %83, %87, %91, %95, %99, %103, %107 in 0 : vector<2x512xf32>, vector<2x512xf32>, vector<2x512xf32>, vector<2x512xf32>, vector<2x512xf32>, vector<2x512xf32>, vector<2x512xf32>, vector<2x512xf32>, vector<2x512xf32>, vector<2x512xf32>, vector<2x512xf32> -> vector<22x512xf32>
    %110 = tpu.concatenate %108, %109 in 0 : vector<32x512xf32>, vector<22x512xf32> -> vector<54x512xf32>
    %c0_29 = arith.constant 0 : index
    %c0_30 = arith.constant 0 : index
    %111 = vector.load %arg3[%c0_29, %c0_30] : memref<128x54xbf16, #tpu.memory_space<vmem>>, vector<128x54xbf16>
    %112 = arith.truncf %110 : vector<54x512xf32> to vector<54x512xbf16>
    %cst = arith.constant dense<0.000000e+00> : vector<128x512xf32>
    %113 = tpu.matmul %111, %112, %cst {dimension_numbers = #tpu.dot_dimension_numbers<[1], [0], [0], [1], [0, 0, 1, 1], [], []>} : vector<128x54xbf16>, vector<54x512xbf16>, vector<128x512xf32> -> vector<128x512xf32>
    %c0_31 = arith.constant 0 : index
    %c0_32 = arith.constant 0 : index
    %114 = vector.load %arg4[%c0_31, %c0_32] : memref<128x1xf32, #tpu.memory_space<vmem>>, vector<128x1xf32>
    %115 = vector.broadcast %114 : vector<128x1xf32> to vector<128x512xf32>
    %116 = arith.addf %113, %115 : vector<128x512xf32>
    %cst_33 = arith.constant 0.000000e+00 : f32
    %117 = vector.broadcast %cst_33 : f32 to vector<128x512xf32>
    %118 = arith.maximumf %116, %117 : vector<128x512xf32>
    %119 = arith.truncf %118 : vector<128x512xf32> to vector<128x512xbf16>
    %120 = vector.extract_strided_slice %119 {offsets = [0, 0], sizes = [128, 256], strides = [1, 1]} : vector<128x512xbf16> to vector<128x256xbf16>
    %c0_34 = arith.constant 0 : index
    %c0_35 = arith.constant 0 : index
    %121 = vector.load %arg2[%c0_34, %c0_35] : memref<256x256xbf16, #tpu.memory_space<vmem>>, vector<256x256xbf16>
    %cst_36 = arith.constant dense<0.000000e+00> : vector<128x256xf32>
    %122 = tpu.matmul %120, %121, %cst_36 {dimension_numbers = #tpu.dot_dimension_numbers<[1], [0], [0], [1], [0, 0, 1, 1], [], []>} : vector<128x256xbf16>, vector<256x256xbf16>, vector<128x256xf32> -> vector<128x256xf32>
    %123 = arith.truncf %122 : vector<128x256xf32> to vector<128x256xbf16>
    %124 = vector.extract_strided_slice %119 {offsets = [0, 256], sizes = [128, 256], strides = [1, 1]} : vector<128x512xbf16> to vector<128x256xbf16>
    %c0_37 = arith.constant 0 : index
    %c0_38 = arith.constant 0 : index
    %125 = vector.load %arg2[%c0_37, %c0_38] : memref<256x256xbf16, #tpu.memory_space<vmem>>, vector<256x256xbf16>
    %cst_39 = arith.constant dense<0.000000e+00> : vector<128x256xf32>
    %126 = tpu.matmul %124, %125, %cst_39 {dimension_numbers = #tpu.dot_dimension_numbers<[1], [0], [0], [1], [0, 0, 1, 1], [], []>} : vector<128x256xbf16>, vector<256x256xbf16>, vector<128x256xf32> -> vector<128x256xf32>
    %127 = arith.truncf %126 : vector<128x256xf32> to vector<128x256xbf16>
    %128 = tpu.concatenate %123, %127 in 1 : vector<128x256xbf16>, vector<128x256xbf16> -> vector<128x512xbf16>
    %c0_40 = arith.constant 0 : index
    %c0_41 = arith.constant 0 : index
    %129 = vector.load %arg5[%c0_40, %c0_41] : memref<54x128xbf16, #tpu.memory_space<vmem>>, vector<54x128xbf16>
    %cst_42 = arith.constant dense<0.000000e+00> : vector<54x512xf32>
    %130 = tpu.matmul %129, %128, %cst_42 {dimension_numbers = #tpu.dot_dimension_numbers<[1], [0], [0], [1], [0, 0, 1, 1], [], []>} : vector<54x128xbf16>, vector<128x512xbf16>, vector<54x512xf32> -> vector<54x512xf32>
    %cst_43 = arith.constant 0.000000e+00 : f32
    %131 = vector.broadcast %cst_43 : f32 to vector<2x512xf32>
    %132 = vector.extract_strided_slice %130 {offsets = [0, 0], sizes = [2, 512], strides = [1, 1]} : vector<54x512xf32> to vector<2x512xf32>
    %c37_i32_44 = arith.constant 37 : i32
    %133 = tpu.dynamic_rotate %132 by %c37_i32_44 dim 1 : vector<2x512xf32>, i32 -> vector<2x512xf32>
    %c0_45 = arith.constant 0 : index
    %c0_46 = arith.constant 0 : index
    %134 = vector.load %arg1[%c0_45, %c0_46] : memref<27x512xf32, #tpu.memory_space<vmem>>, vector<1x512xf32>
    %135 = vector.broadcast %134 : vector<1x512xf32> to vector<2x512xf32>
    %136 = arith.mulf %133, %135 : vector<2x512xf32>
    %137 = arith.addf %131, %136 : vector<2x512xf32>
    %138 = vector.extract_strided_slice %130 {offsets = [2, 0], sizes = [2, 512], strides = [1, 1]} : vector<54x512xf32> to vector<2x512xf32>
    %c36_i32_47 = arith.constant 36 : i32
    %139 = tpu.dynamic_rotate %138 by %c36_i32_47 dim 1 : vector<2x512xf32>, i32 -> vector<2x512xf32>
    %c1_48 = arith.constant 1 : index
    %c0_49 = arith.constant 0 : index
    %140 = vector.load %arg1[%c1_48, %c0_49] : memref<27x512xf32, #tpu.memory_space<vmem>>, vector<1x512xf32>
    %141 = vector.broadcast %140 : vector<1x512xf32> to vector<2x512xf32>
    %142 = arith.mulf %139, %141 : vector<2x512xf32>
    %143 = arith.addf %137, %142 : vector<2x512xf32>
    %144 = vector.extract_strided_slice %130 {offsets = [4, 0], sizes = [2, 512], strides = [1, 1]} : vector<54x512xf32> to vector<2x512xf32>
    %c35_i32_50 = arith.constant 35 : i32
    %145 = tpu.dynamic_rotate %144 by %c35_i32_50 dim 1 : vector<2x512xf32>, i32 -> vector<2x512xf32>
    %c2_51 = arith.constant 2 : index
    %c0_52 = arith.constant 0 : index
    %146 = vector.load %arg1[%c2_51, %c0_52] : memref<27x512xf32, #tpu.memory_space<vmem>>, vector<1x512xf32>
    %147 = vector.broadcast %146 : vector<1x512xf32> to vector<2x512xf32>
    %148 = arith.mulf %145, %147 : vector<2x512xf32>
    %149 = arith.addf %143, %148 : vector<2x512xf32>
    %150 = vector.extract_strided_slice %130 {offsets = [6, 0], sizes = [2, 512], strides = [1, 1]} : vector<54x512xf32> to vector<2x512xf32>
    %c33_i32_53 = arith.constant 33 : i32
    %151 = tpu.dynamic_rotate %150 by %c33_i32_53 dim 1 : vector<2x512xf32>, i32 -> vector<2x512xf32>
    %c3_54 = arith.constant 3 : index
    %c0_55 = arith.constant 0 : index
    %152 = vector.load %arg1[%c3_54, %c0_55] : memref<27x512xf32, #tpu.memory_space<vmem>>, vector<1x512xf32>
    %153 = vector.broadcast %152 : vector<1x512xf32> to vector<2x512xf32>
    %154 = arith.mulf %151, %153 : vector<2x512xf32>
    %155 = arith.addf %149, %154 : vector<2x512xf32>
    %156 = vector.extract_strided_slice %130 {offsets = [8, 0], sizes = [2, 512], strides = [1, 1]} : vector<54x512xf32> to vector<2x512xf32>
    %c32_i32_56 = arith.constant 32 : i32
    %157 = tpu.dynamic_rotate %156 by %c32_i32_56 dim 1 : vector<2x512xf32>, i32 -> vector<2x512xf32>
    %c4_57 = arith.constant 4 : index
    %c0_58 = arith.constant 0 : index
    %158 = vector.load %arg1[%c4_57, %c0_58] : memref<27x512xf32, #tpu.memory_space<vmem>>, vector<1x512xf32>
    %159 = vector.broadcast %158 : vector<1x512xf32> to vector<2x512xf32>
    %160 = arith.mulf %157, %159 : vector<2x512xf32>
    %161 = arith.addf %155, %160 : vector<2x512xf32>
    %162 = vector.extract_strided_slice %130 {offsets = [10, 0], sizes = [2, 512], strides = [1, 1]} : vector<54x512xf32> to vector<2x512xf32>
    %c31_i32_59 = arith.constant 31 : i32
    %163 = tpu.dynamic_rotate %162 by %c31_i32_59 dim 1 : vector<2x512xf32>, i32 -> vector<2x512xf32>
    %c5_60 = arith.constant 5 : index
    %c0_61 = arith.constant 0 : index
    %164 = vector.load %arg1[%c5_60, %c0_61] : memref<27x512xf32, #tpu.memory_space<vmem>>, vector<1x512xf32>
    %165 = vector.broadcast %164 : vector<1x512xf32> to vector<2x512xf32>
    %166 = arith.mulf %163, %165 : vector<2x512xf32>
    %167 = arith.addf %161, %166 : vector<2x512xf32>
    %168 = vector.extract_strided_slice %130 {offsets = [12, 0], sizes = [2, 512], strides = [1, 1]} : vector<54x512xf32> to vector<2x512xf32>
    %c29_i32_62 = arith.constant 29 : i32
    %169 = tpu.dynamic_rotate %168 by %c29_i32_62 dim 1 : vector<2x512xf32>, i32 -> vector<2x512xf32>
    %c6_63 = arith.constant 6 : index
    %c0_64 = arith.constant 0 : index
    %170 = vector.load %arg1[%c6_63, %c0_64] : memref<27x512xf32, #tpu.memory_space<vmem>>, vector<1x512xf32>
    %171 = vector.broadcast %170 : vector<1x512xf32> to vector<2x512xf32>
    %172 = arith.mulf %169, %171 : vector<2x512xf32>
    %173 = arith.addf %167, %172 : vector<2x512xf32>
    %174 = vector.extract_strided_slice %130 {offsets = [14, 0], sizes = [2, 512], strides = [1, 1]} : vector<54x512xf32> to vector<2x512xf32>
    %c28_i32_65 = arith.constant 28 : i32
    %175 = tpu.dynamic_rotate %174 by %c28_i32_65 dim 1 : vector<2x512xf32>, i32 -> vector<2x512xf32>
    %c7_66 = arith.constant 7 : index
    %c0_67 = arith.constant 0 : index
    %176 = vector.load %arg1[%c7_66, %c0_67] : memref<27x512xf32, #tpu.memory_space<vmem>>, vector<1x512xf32>
    %177 = vector.broadcast %176 : vector<1x512xf32> to vector<2x512xf32>
    %178 = arith.mulf %175, %177 : vector<2x512xf32>
    %179 = arith.addf %173, %178 : vector<2x512xf32>
    %180 = vector.extract_strided_slice %130 {offsets = [16, 0], sizes = [2, 512], strides = [1, 1]} : vector<54x512xf32> to vector<2x512xf32>
    %c27_i32_68 = arith.constant 27 : i32
    %181 = tpu.dynamic_rotate %180 by %c27_i32_68 dim 1 : vector<2x512xf32>, i32 -> vector<2x512xf32>
    %c8_69 = arith.constant 8 : index
    %c0_70 = arith.constant 0 : index
    %182 = vector.load %arg1[%c8_69, %c0_70] : memref<27x512xf32, #tpu.memory_space<vmem>>, vector<1x512xf32>
    %183 = vector.broadcast %182 : vector<1x512xf32> to vector<2x512xf32>
    %184 = arith.mulf %181, %183 : vector<2x512xf32>
    %185 = arith.addf %179, %184 : vector<2x512xf32>
    %186 = vector.extract_strided_slice %130 {offsets = [18, 0], sizes = [2, 512], strides = [1, 1]} : vector<54x512xf32> to vector<2x512xf32>
    %c5_i32_71 = arith.constant 5 : i32
    %187 = tpu.dynamic_rotate %186 by %c5_i32_71 dim 1 : vector<2x512xf32>, i32 -> vector<2x512xf32>
    %c9_72 = arith.constant 9 : index
    %c0_73 = arith.constant 0 : index
    %188 = vector.load %arg1[%c9_72, %c0_73] : memref<27x512xf32, #tpu.memory_space<vmem>>, vector<1x512xf32>
    %189 = vector.broadcast %188 : vector<1x512xf32> to vector<2x512xf32>
    %190 = arith.mulf %187, %189 : vector<2x512xf32>
    %191 = arith.addf %185, %190 : vector<2x512xf32>
    %192 = vector.extract_strided_slice %130 {offsets = [20, 0], sizes = [2, 512], strides = [1, 1]} : vector<54x512xf32> to vector<2x512xf32>
    %c4_i32_74 = arith.constant 4 : i32
    %193 = tpu.dynamic_rotate %192 by %c4_i32_74 dim 1 : vector<2x512xf32>, i32 -> vector<2x512xf32>
    %c10_75 = arith.constant 10 : index
    %c0_76 = arith.constant 0 : index
    %194 = vector.load %arg1[%c10_75, %c0_76] : memref<27x512xf32, #tpu.memory_space<vmem>>, vector<1x512xf32>
    %195 = vector.broadcast %194 : vector<1x512xf32> to vector<2x512xf32>
    %196 = arith.mulf %193, %195 : vector<2x512xf32>
    %197 = arith.addf %191, %196 : vector<2x512xf32>
    %198 = vector.extract_strided_slice %130 {offsets = [22, 0], sizes = [2, 512], strides = [1, 1]} : vector<54x512xf32> to vector<2x512xf32>
    %c3_i32_77 = arith.constant 3 : i32
    %199 = tpu.dynamic_rotate %198 by %c3_i32_77 dim 1 : vector<2x512xf32>, i32 -> vector<2x512xf32>
    %c11_78 = arith.constant 11 : index
    %c0_79 = arith.constant 0 : index
    %200 = vector.load %arg1[%c11_78, %c0_79] : memref<27x512xf32, #tpu.memory_space<vmem>>, vector<1x512xf32>
    %201 = vector.broadcast %200 : vector<1x512xf32> to vector<2x512xf32>
    %202 = arith.mulf %199, %201 : vector<2x512xf32>
    %203 = arith.addf %197, %202 : vector<2x512xf32>
    %204 = vector.extract_strided_slice %130 {offsets = [24, 0], sizes = [2, 512], strides = [1, 1]} : vector<54x512xf32> to vector<2x512xf32>
    %c1_i32_80 = arith.constant 1 : i32
    %205 = tpu.dynamic_rotate %204 by %c1_i32_80 dim 1 : vector<2x512xf32>, i32 -> vector<2x512xf32>
    %c12_81 = arith.constant 12 : index
    %c0_82 = arith.constant 0 : index
    %206 = vector.load %arg1[%c12_81, %c0_82] : memref<27x512xf32, #tpu.memory_space<vmem>>, vector<1x512xf32>
    %207 = vector.broadcast %206 : vector<1x512xf32> to vector<2x512xf32>
    %208 = arith.mulf %205, %207 : vector<2x512xf32>
    %209 = arith.addf %203, %208 : vector<2x512xf32>
    %210 = vector.extract_strided_slice %130 {offsets = [26, 0], sizes = [2, 512], strides = [1, 1]} : vector<54x512xf32> to vector<2x512xf32>
    %c13_83 = arith.constant 13 : index
    %c0_84 = arith.constant 0 : index
    %211 = vector.load %arg1[%c13_83, %c0_84] : memref<27x512xf32, #tpu.memory_space<vmem>>, vector<1x512xf32>
    %212 = vector.broadcast %211 : vector<1x512xf32> to vector<2x512xf32>
    %213 = arith.mulf %210, %212 : vector<2x512xf32>
    %214 = arith.addf %209, %213 : vector<2x512xf32>
    %215 = vector.extract_strided_slice %130 {offsets = [28, 0], sizes = [2, 512], strides = [1, 1]} : vector<54x512xf32> to vector<2x512xf32>
    %c511_i32_85 = arith.constant 511 : i32
    %216 = tpu.dynamic_rotate %215 by %c511_i32_85 dim 1 : vector<2x512xf32>, i32 -> vector<2x512xf32>
    %c14_86 = arith.constant 14 : index
    %c0_87 = arith.constant 0 : index
    %217 = vector.load %arg1[%c14_86, %c0_87] : memref<27x512xf32, #tpu.memory_space<vmem>>, vector<1x512xf32>
    %218 = vector.broadcast %217 : vector<1x512xf32> to vector<2x512xf32>
    %219 = arith.mulf %216, %218 : vector<2x512xf32>
    %220 = arith.addf %214, %219 : vector<2x512xf32>
    %221 = vector.extract_strided_slice %130 {offsets = [30, 0], sizes = [2, 512], strides = [1, 1]} : vector<54x512xf32> to vector<2x512xf32>
    %c509_i32_88 = arith.constant 509 : i32
    %222 = tpu.dynamic_rotate %221 by %c509_i32_88 dim 1 : vector<2x512xf32>, i32 -> vector<2x512xf32>
    %c15_89 = arith.constant 15 : index
    %c0_90 = arith.constant 0 : index
    %223 = vector.load %arg1[%c15_89, %c0_90] : memref<27x512xf32, #tpu.memory_space<vmem>>, vector<1x512xf32>
    %224 = vector.broadcast %223 : vector<1x512xf32> to vector<2x512xf32>
    %225 = arith.mulf %222, %224 : vector<2x512xf32>
    %226 = arith.addf %220, %225 : vector<2x512xf32>
    %227 = vector.extract_strided_slice %130 {offsets = [32, 0], sizes = [2, 512], strides = [1, 1]} : vector<54x512xf32> to vector<2x512xf32>
    %c508_i32_91 = arith.constant 508 : i32
    %228 = tpu.dynamic_rotate %227 by %c508_i32_91 dim 1 : vector<2x512xf32>, i32 -> vector<2x512xf32>
    %c16_92 = arith.constant 16 : index
    %c0_93 = arith.constant 0 : index
    %229 = vector.load %arg1[%c16_92, %c0_93] : memref<27x512xf32, #tpu.memory_space<vmem>>, vector<1x512xf32>
    %230 = vector.broadcast %229 : vector<1x512xf32> to vector<2x512xf32>
    %231 = arith.mulf %228, %230 : vector<2x512xf32>
    %232 = arith.addf %226, %231 : vector<2x512xf32>
    %233 = vector.extract_strided_slice %130 {offsets = [34, 0], sizes = [2, 512], strides = [1, 1]} : vector<54x512xf32> to vector<2x512xf32>
    %c507_i32_94 = arith.constant 507 : i32
    %234 = tpu.dynamic_rotate %233 by %c507_i32_94 dim 1 : vector<2x512xf32>, i32 -> vector<2x512xf32>
    %c17_95 = arith.constant 17 : index
    %c0_96 = arith.constant 0 : index
    %235 = vector.load %arg1[%c17_95, %c0_96] : memref<27x512xf32, #tpu.memory_space<vmem>>, vector<1x512xf32>
    %236 = vector.broadcast %235 : vector<1x512xf32> to vector<2x512xf32>
    %237 = arith.mulf %234, %236 : vector<2x512xf32>
    %238 = arith.addf %232, %237 : vector<2x512xf32>
    %239 = vector.extract_strided_slice %130 {offsets = [36, 0], sizes = [2, 512], strides = [1, 1]} : vector<54x512xf32> to vector<2x512xf32>
    %c485_i32_97 = arith.constant 485 : i32
    %240 = tpu.dynamic_rotate %239 by %c485_i32_97 dim 1 : vector<2x512xf32>, i32 -> vector<2x512xf32>
    %c18_98 = arith.constant 18 : index
    %c0_99 = arith.constant 0 : index
    %241 = vector.load %arg1[%c18_98, %c0_99] : memref<27x512xf32, #tpu.memory_space<vmem>>, vector<1x512xf32>
    %242 = vector.broadcast %241 : vector<1x512xf32> to vector<2x512xf32>
    %243 = arith.mulf %240, %242 : vector<2x512xf32>
    %244 = arith.addf %238, %243 : vector<2x512xf32>
    %245 = vector.extract_strided_slice %130 {offsets = [38, 0], sizes = [2, 512], strides = [1, 1]} : vector<54x512xf32> to vector<2x512xf32>
    %c484_i32_100 = arith.constant 484 : i32
    %246 = tpu.dynamic_rotate %245 by %c484_i32_100 dim 1 : vector<2x512xf32>, i32 -> vector<2x512xf32>
    %c19_101 = arith.constant 19 : index
    %c0_102 = arith.constant 0 : index
    %247 = vector.load %arg1[%c19_101, %c0_102] : memref<27x512xf32, #tpu.memory_space<vmem>>, vector<1x512xf32>
    %248 = vector.broadcast %247 : vector<1x512xf32> to vector<2x512xf32>
    %249 = arith.mulf %246, %248 : vector<2x512xf32>
    %250 = arith.addf %244, %249 : vector<2x512xf32>
    %251 = vector.extract_strided_slice %130 {offsets = [40, 0], sizes = [2, 512], strides = [1, 1]} : vector<54x512xf32> to vector<2x512xf32>
    %c483_i32_103 = arith.constant 483 : i32
    %252 = tpu.dynamic_rotate %251 by %c483_i32_103 dim 1 : vector<2x512xf32>, i32 -> vector<2x512xf32>
    %c20_104 = arith.constant 20 : index
    %c0_105 = arith.constant 0 : index
    %253 = vector.load %arg1[%c20_104, %c0_105] : memref<27x512xf32, #tpu.memory_space<vmem>>, vector<1x512xf32>
    %254 = vector.broadcast %253 : vector<1x512xf32> to vector<2x512xf32>
    %255 = arith.mulf %252, %254 : vector<2x512xf32>
    %256 = arith.addf %250, %255 : vector<2x512xf32>
    %257 = vector.extract_strided_slice %130 {offsets = [42, 0], sizes = [2, 512], strides = [1, 1]} : vector<54x512xf32> to vector<2x512xf32>
    %c481_i32_106 = arith.constant 481 : i32
    %258 = tpu.dynamic_rotate %257 by %c481_i32_106 dim 1 : vector<2x512xf32>, i32 -> vector<2x512xf32>
    %c21_107 = arith.constant 21 : index
    %c0_108 = arith.constant 0 : index
    %259 = vector.load %arg1[%c21_107, %c0_108] : memref<27x512xf32, #tpu.memory_space<vmem>>, vector<1x512xf32>
    %260 = vector.broadcast %259 : vector<1x512xf32> to vector<2x512xf32>
    %261 = arith.mulf %258, %260 : vector<2x512xf32>
    %262 = arith.addf %256, %261 : vector<2x512xf32>
    %263 = vector.extract_strided_slice %130 {offsets = [44, 0], sizes = [2, 512], strides = [1, 1]} : vector<54x512xf32> to vector<2x512xf32>
    %c480_i32_109 = arith.constant 480 : i32
    %264 = tpu.dynamic_rotate %263 by %c480_i32_109 dim 1 : vector<2x512xf32>, i32 -> vector<2x512xf32>
    %c22_110 = arith.constant 22 : index
    %c0_111 = arith.constant 0 : index
    %265 = vector.load %arg1[%c22_110, %c0_111] : memref<27x512xf32, #tpu.memory_space<vmem>>, vector<1x512xf32>
    %266 = vector.broadcast %265 : vector<1x512xf32> to vector<2x512xf32>
    %267 = arith.mulf %264, %266 : vector<2x512xf32>
    %268 = arith.addf %262, %267 : vector<2x512xf32>
    %269 = vector.extract_strided_slice %130 {offsets = [46, 0], sizes = [2, 512], strides = [1, 1]} : vector<54x512xf32> to vector<2x512xf32>
    %c479_i32_112 = arith.constant 479 : i32
    %270 = tpu.dynamic_rotate %269 by %c479_i32_112 dim 1 : vector<2x512xf32>, i32 -> vector<2x512xf32>
    %c23_113 = arith.constant 23 : index
    %c0_114 = arith.constant 0 : index
    %271 = vector.load %arg1[%c23_113, %c0_114] : memref<27x512xf32, #tpu.memory_space<vmem>>, vector<1x512xf32>
    %272 = vector.broadcast %271 : vector<1x512xf32> to vector<2x512xf32>
    %273 = arith.mulf %270, %272 : vector<2x512xf32>
    %274 = arith.addf %268, %273 : vector<2x512xf32>
    %275 = vector.extract_strided_slice %130 {offsets = [48, 0], sizes = [2, 512], strides = [1, 1]} : vector<54x512xf32> to vector<2x512xf32>
    %c477_i32_115 = arith.constant 477 : i32
    %276 = tpu.dynamic_rotate %275 by %c477_i32_115 dim 1 : vector<2x512xf32>, i32 -> vector<2x512xf32>
    %c24_116 = arith.constant 24 : index
    %c0_117 = arith.constant 0 : index
    %277 = vector.load %arg1[%c24_116, %c0_117] : memref<27x512xf32, #tpu.memory_space<vmem>>, vector<1x512xf32>
    %278 = vector.broadcast %277 : vector<1x512xf32> to vector<2x512xf32>
    %279 = arith.mulf %276, %278 : vector<2x512xf32>
    %280 = arith.addf %274, %279 : vector<2x512xf32>
    %281 = vector.extract_strided_slice %130 {offsets = [50, 0], sizes = [2, 512], strides = [1, 1]} : vector<54x512xf32> to vector<2x512xf32>
    %c476_i32_118 = arith.constant 476 : i32
    %282 = tpu.dynamic_rotate %281 by %c476_i32_118 dim 1 : vector<2x512xf32>, i32 -> vector<2x512xf32>
    %c25_119 = arith.constant 25 : index
    %c0_120 = arith.constant 0 : index
    %283 = vector.load %arg1[%c25_119, %c0_120] : memref<27x512xf32, #tpu.memory_space<vmem>>, vector<1x512xf32>
    %284 = vector.broadcast %283 : vector<1x512xf32> to vector<2x512xf32>
    %285 = arith.mulf %282, %284 : vector<2x512xf32>
    %286 = arith.addf %280, %285 : vector<2x512xf32>
    %287 = vector.extract_strided_slice %130 {offsets = [52, 0], sizes = [2, 512], strides = [1, 1]} : vector<54x512xf32> to vector<2x512xf32>
    %c475_i32_121 = arith.constant 475 : i32
    %288 = tpu.dynamic_rotate %287 by %c475_i32_121 dim 1 : vector<2x512xf32>, i32 -> vector<2x512xf32>
    %c26_122 = arith.constant 26 : index
    %c0_123 = arith.constant 0 : index
    %289 = vector.load %arg1[%c26_122, %c0_123] : memref<27x512xf32, #tpu.memory_space<vmem>>, vector<1x512xf32>
    %290 = vector.broadcast %289 : vector<1x512xf32> to vector<2x512xf32>
    %291 = arith.mulf %288, %290 : vector<2x512xf32>
    %292 = arith.addf %286, %291 : vector<2x512xf32>
    %c0_124 = arith.constant 0 : index
    %c0_125 = arith.constant 0 : index
    %293 = vector.load %arg6[%c0_124, %c0_125] : memref<2x1xf32, #tpu.memory_space<vmem>>, vector<2x1xf32>
    %294 = vector.broadcast %293 : vector<2x1xf32> to vector<2x512xf32>
    %295 = arith.addf %292, %294 : vector<2x512xf32>
    %cst_126 = arith.constant 0.000000e+00 : f32
    %296 = vector.broadcast %cst_126 : f32 to vector<2x512xf32>
    %297 = arith.maximumf %295, %296 : vector<2x512xf32>
    %cst_127 = arith.constant 0.000000e+00 : f32
    %298 = vector.broadcast %cst_127 : f32 to vector<2x512xf32>
    %c37_i32_128 = arith.constant 37 : i32
    %299 = tpu.dynamic_rotate %297 by %c37_i32_128 dim 1 : vector<2x512xf32>, i32 -> vector<2x512xf32>
    %c0_129 = arith.constant 0 : index
    %c0_130 = arith.constant 0 : index
    %300 = vector.load %arg1[%c0_129, %c0_130] : memref<27x512xf32, #tpu.memory_space<vmem>>, vector<1x512xf32>
    %301 = vector.broadcast %300 : vector<1x512xf32> to vector<2x512xf32>
    %302 = arith.mulf %299, %301 : vector<2x512xf32>
    %cst_131 = arith.constant 0.020586282 : f32
    %303 = vector.broadcast %cst_131 : f32 to vector<2x512xf32>
    %304 = arith.mulf %303, %302 : vector<2x512xf32>
    %305 = arith.addf %298, %304 : vector<2x512xf32>
    %c36_i32_132 = arith.constant 36 : i32
    %306 = tpu.dynamic_rotate %297 by %c36_i32_132 dim 1 : vector<2x512xf32>, i32 -> vector<2x512xf32>
    %c1_133 = arith.constant 1 : index
    %c0_134 = arith.constant 0 : index
    %307 = vector.load %arg1[%c1_133, %c0_134] : memref<27x512xf32, #tpu.memory_space<vmem>>, vector<1x512xf32>
    %308 = vector.broadcast %307 : vector<1x512xf32> to vector<2x512xf32>
    %309 = arith.mulf %306, %308 : vector<2x512xf32>
    %cst_135 = arith.constant 0.0339410417 : f32
    %310 = vector.broadcast %cst_135 : f32 to vector<2x512xf32>
    %311 = arith.mulf %310, %309 : vector<2x512xf32>
    %312 = arith.addf %305, %311 : vector<2x512xf32>
    %c35_i32_136 = arith.constant 35 : i32
    %313 = tpu.dynamic_rotate %297 by %c35_i32_136 dim 1 : vector<2x512xf32>, i32 -> vector<2x512xf32>
    %c2_137 = arith.constant 2 : index
    %c0_138 = arith.constant 0 : index
    %314 = vector.load %arg1[%c2_137, %c0_138] : memref<27x512xf32, #tpu.memory_space<vmem>>, vector<1x512xf32>
    %315 = vector.broadcast %314 : vector<1x512xf32> to vector<2x512xf32>
    %316 = arith.mulf %313, %315 : vector<2x512xf32>
    %cst_139 = arith.constant 0.020586282 : f32
    %317 = vector.broadcast %cst_139 : f32 to vector<2x512xf32>
    %318 = arith.mulf %317, %316 : vector<2x512xf32>
    %319 = arith.addf %312, %318 : vector<2x512xf32>
    %c33_i32_140 = arith.constant 33 : i32
    %320 = tpu.dynamic_rotate %297 by %c33_i32_140 dim 1 : vector<2x512xf32>, i32 -> vector<2x512xf32>
    %c3_141 = arith.constant 3 : index
    %c0_142 = arith.constant 0 : index
    %321 = vector.load %arg1[%c3_141, %c0_142] : memref<27x512xf32, #tpu.memory_space<vmem>>, vector<1x512xf32>
    %322 = vector.broadcast %321 : vector<1x512xf32> to vector<2x512xf32>
    %323 = arith.mulf %320, %322 : vector<2x512xf32>
    %cst_143 = arith.constant 0.0339410417 : f32
    %324 = vector.broadcast %cst_143 : f32 to vector<2x512xf32>
    %325 = arith.mulf %324, %323 : vector<2x512xf32>
    %326 = arith.addf %319, %325 : vector<2x512xf32>
    %c32_i32_144 = arith.constant 32 : i32
    %327 = tpu.dynamic_rotate %297 by %c32_i32_144 dim 1 : vector<2x512xf32>, i32 -> vector<2x512xf32>
    %c4_145 = arith.constant 4 : index
    %c0_146 = arith.constant 0 : index
    %328 = vector.load %arg1[%c4_145, %c0_146] : memref<27x512xf32, #tpu.memory_space<vmem>>, vector<1x512xf32>
    %329 = vector.broadcast %328 : vector<1x512xf32> to vector<2x512xf32>
    %330 = arith.mulf %327, %329 : vector<2x512xf32>
    %cst_147 = arith.constant 0.0559593178 : f32
    %331 = vector.broadcast %cst_147 : f32 to vector<2x512xf32>
    %332 = arith.mulf %331, %330 : vector<2x512xf32>
    %333 = arith.addf %326, %332 : vector<2x512xf32>
    %c31_i32_148 = arith.constant 31 : i32
    %334 = tpu.dynamic_rotate %297 by %c31_i32_148 dim 1 : vector<2x512xf32>, i32 -> vector<2x512xf32>
    %c5_149 = arith.constant 5 : index
    %c0_150 = arith.constant 0 : index
    %335 = vector.load %arg1[%c5_149, %c0_150] : memref<27x512xf32, #tpu.memory_space<vmem>>, vector<1x512xf32>
    %336 = vector.broadcast %335 : vector<1x512xf32> to vector<2x512xf32>
    %337 = arith.mulf %334, %336 : vector<2x512xf32>
    %cst_151 = arith.constant 0.0339410417 : f32
    %338 = vector.broadcast %cst_151 : f32 to vector<2x512xf32>
    %339 = arith.mulf %338, %337 : vector<2x512xf32>
    %340 = arith.addf %333, %339 : vector<2x512xf32>
    %c29_i32_152 = arith.constant 29 : i32
    %341 = tpu.dynamic_rotate %297 by %c29_i32_152 dim 1 : vector<2x512xf32>, i32 -> vector<2x512xf32>
    %c6_153 = arith.constant 6 : index
    %c0_154 = arith.constant 0 : index
    %342 = vector.load %arg1[%c6_153, %c0_154] : memref<27x512xf32, #tpu.memory_space<vmem>>, vector<1x512xf32>
    %343 = vector.broadcast %342 : vector<1x512xf32> to vector<2x512xf32>
    %344 = arith.mulf %341, %343 : vector<2x512xf32>
    %cst_155 = arith.constant 0.020586282 : f32
    %345 = vector.broadcast %cst_155 : f32 to vector<2x512xf32>
    %346 = arith.mulf %345, %344 : vector<2x512xf32>
    %347 = arith.addf %340, %346 : vector<2x512xf32>
    %c28_i32_156 = arith.constant 28 : i32
    %348 = tpu.dynamic_rotate %297 by %c28_i32_156 dim 1 : vector<2x512xf32>, i32 -> vector<2x512xf32>
    %c7_157 = arith.constant 7 : index
    %c0_158 = arith.constant 0 : index
    %349 = vector.load %arg1[%c7_157, %c0_158] : memref<27x512xf32, #tpu.memory_space<vmem>>, vector<1x512xf32>
    %350 = vector.broadcast %349 : vector<1x512xf32> to vector<2x512xf32>
    %351 = arith.mulf %348, %350 : vector<2x512xf32>
    %cst_159 = arith.constant 0.0339410417 : f32
    %352 = vector.broadcast %cst_159 : f32 to vector<2x512xf32>
    %353 = arith.mulf %352, %351 : vector<2x512xf32>
    %354 = arith.addf %347, %353 : vector<2x512xf32>
    %c27_i32_160 = arith.constant 27 : i32
    %355 = tpu.dynamic_rotate %297 by %c27_i32_160 dim 1 : vector<2x512xf32>, i32 -> vector<2x512xf32>
    %c8_161 = arith.constant 8 : index
    %c0_162 = arith.constant 0 : index
    %356 = vector.load %arg1[%c8_161, %c0_162] : memref<27x512xf32, #tpu.memory_space<vmem>>, vector<1x512xf32>
    %357 = vector.broadcast %356 : vector<1x512xf32> to vector<2x512xf32>
    %358 = arith.mulf %355, %357 : vector<2x512xf32>
    %cst_163 = arith.constant 0.020586282 : f32
    %359 = vector.broadcast %cst_163 : f32 to vector<2x512xf32>
    %360 = arith.mulf %359, %358 : vector<2x512xf32>
    %361 = arith.addf %354, %360 : vector<2x512xf32>
    %c5_i32_164 = arith.constant 5 : i32
    %362 = tpu.dynamic_rotate %297 by %c5_i32_164 dim 1 : vector<2x512xf32>, i32 -> vector<2x512xf32>
    %c9_165 = arith.constant 9 : index
    %c0_166 = arith.constant 0 : index
    %363 = vector.load %arg1[%c9_165, %c0_166] : memref<27x512xf32, #tpu.memory_space<vmem>>, vector<1x512xf32>
    %364 = vector.broadcast %363 : vector<1x512xf32> to vector<2x512xf32>
    %365 = arith.mulf %362, %364 : vector<2x512xf32>
    %cst_167 = arith.constant 0.0339410417 : f32
    %366 = vector.broadcast %cst_167 : f32 to vector<2x512xf32>
    %367 = arith.mulf %366, %365 : vector<2x512xf32>
    %368 = arith.addf %361, %367 : vector<2x512xf32>
    %c4_i32_168 = arith.constant 4 : i32
    %369 = tpu.dynamic_rotate %297 by %c4_i32_168 dim 1 : vector<2x512xf32>, i32 -> vector<2x512xf32>
    %c10_169 = arith.constant 10 : index
    %c0_170 = arith.constant 0 : index
    %370 = vector.load %arg1[%c10_169, %c0_170] : memref<27x512xf32, #tpu.memory_space<vmem>>, vector<1x512xf32>
    %371 = vector.broadcast %370 : vector<1x512xf32> to vector<2x512xf32>
    %372 = arith.mulf %369, %371 : vector<2x512xf32>
    %cst_171 = arith.constant 0.0559593178 : f32
    %373 = vector.broadcast %cst_171 : f32 to vector<2x512xf32>
    %374 = arith.mulf %373, %372 : vector<2x512xf32>
    %375 = arith.addf %368, %374 : vector<2x512xf32>
    %c3_i32_172 = arith.constant 3 : i32
    %376 = tpu.dynamic_rotate %297 by %c3_i32_172 dim 1 : vector<2x512xf32>, i32 -> vector<2x512xf32>
    %c11_173 = arith.constant 11 : index
    %c0_174 = arith.constant 0 : index
    %377 = vector.load %arg1[%c11_173, %c0_174] : memref<27x512xf32, #tpu.memory_space<vmem>>, vector<1x512xf32>
    %378 = vector.broadcast %377 : vector<1x512xf32> to vector<2x512xf32>
    %379 = arith.mulf %376, %378 : vector<2x512xf32>
    %cst_175 = arith.constant 0.0339410417 : f32
    %380 = vector.broadcast %cst_175 : f32 to vector<2x512xf32>
    %381 = arith.mulf %380, %379 : vector<2x512xf32>
    %382 = arith.addf %375, %381 : vector<2x512xf32>
    %c1_i32_176 = arith.constant 1 : i32
    %383 = tpu.dynamic_rotate %297 by %c1_i32_176 dim 1 : vector<2x512xf32>, i32 -> vector<2x512xf32>
    %c12_177 = arith.constant 12 : index
    %c0_178 = arith.constant 0 : index
    %384 = vector.load %arg1[%c12_177, %c0_178] : memref<27x512xf32, #tpu.memory_space<vmem>>, vector<1x512xf32>
    %385 = vector.broadcast %384 : vector<1x512xf32> to vector<2x512xf32>
    %386 = arith.mulf %383, %385 : vector<2x512xf32>
    %cst_179 = arith.constant 0.0559593178 : f32
    %387 = vector.broadcast %cst_179 : f32 to vector<2x512xf32>
    %388 = arith.mulf %387, %386 : vector<2x512xf32>
    %389 = arith.addf %382, %388 : vector<2x512xf32>
    %c13_180 = arith.constant 13 : index
    %c0_181 = arith.constant 0 : index
    %390 = vector.load %arg1[%c13_180, %c0_181] : memref<27x512xf32, #tpu.memory_space<vmem>>, vector<1x512xf32>
    %391 = vector.broadcast %390 : vector<1x512xf32> to vector<2x512xf32>
    %392 = arith.mulf %297, %391 : vector<2x512xf32>
    %cst_182 = arith.constant 0.0922613218 : f32
    %393 = vector.broadcast %cst_182 : f32 to vector<2x512xf32>
    %394 = arith.mulf %393, %392 : vector<2x512xf32>
    %395 = arith.addf %389, %394 : vector<2x512xf32>
    %c511_i32_183 = arith.constant 511 : i32
    %396 = tpu.dynamic_rotate %297 by %c511_i32_183 dim 1 : vector<2x512xf32>, i32 -> vector<2x512xf32>
    %c14_184 = arith.constant 14 : index
    %c0_185 = arith.constant 0 : index
    %397 = vector.load %arg1[%c14_184, %c0_185] : memref<27x512xf32, #tpu.memory_space<vmem>>, vector<1x512xf32>
    %398 = vector.broadcast %397 : vector<1x512xf32> to vector<2x512xf32>
    %399 = arith.mulf %396, %398 : vector<2x512xf32>
    %cst_186 = arith.constant 0.0559593178 : f32
    %400 = vector.broadcast %cst_186 : f32 to vector<2x512xf32>
    %401 = arith.mulf %400, %399 : vector<2x512xf32>
    %402 = arith.addf %395, %401 : vector<2x512xf32>
    %c509_i32_187 = arith.constant 509 : i32
    %403 = tpu.dynamic_rotate %297 by %c509_i32_187 dim 1 : vector<2x512xf32>, i32 -> vector<2x512xf32>
    %c15_188 = arith.constant 15 : index
    %c0_189 = arith.constant 0 : index
    %404 = vector.load %arg1[%c15_188, %c0_189] : memref<27x512xf32, #tpu.memory_space<vmem>>, vector<1x512xf32>
    %405 = vector.broadcast %404 : vector<1x512xf32> to vector<2x512xf32>
    %406 = arith.mulf %403, %405 : vector<2x512xf32>
    %cst_190 = arith.constant 0.0339410417 : f32
    %407 = vector.broadcast %cst_190 : f32 to vector<2x512xf32>
    %408 = arith.mulf %407, %406 : vector<2x512xf32>
    %409 = arith.addf %402, %408 : vector<2x512xf32>
    %c508_i32_191 = arith.constant 508 : i32
    %410 = tpu.dynamic_rotate %297 by %c508_i32_191 dim 1 : vector<2x512xf32>, i32 -> vector<2x512xf32>
    %c16_192 = arith.constant 16 : index
    %c0_193 = arith.constant 0 : index
    %411 = vector.load %arg1[%c16_192, %c0_193] : memref<27x512xf32, #tpu.memory_space<vmem>>, vector<1x512xf32>
    %412 = vector.broadcast %411 : vector<1x512xf32> to vector<2x512xf32>
    %413 = arith.mulf %410, %412 : vector<2x512xf32>
    %cst_194 = arith.constant 0.0559593178 : f32
    %414 = vector.broadcast %cst_194 : f32 to vector<2x512xf32>
    %415 = arith.mulf %414, %413 : vector<2x512xf32>
    %416 = arith.addf %409, %415 : vector<2x512xf32>
    %c507_i32_195 = arith.constant 507 : i32
    %417 = tpu.dynamic_rotate %297 by %c507_i32_195 dim 1 : vector<2x512xf32>, i32 -> vector<2x512xf32>
    %c17_196 = arith.constant 17 : index
    %c0_197 = arith.constant 0 : index
    %418 = vector.load %arg1[%c17_196, %c0_197] : memref<27x512xf32, #tpu.memory_space<vmem>>, vector<1x512xf32>
    %419 = vector.broadcast %418 : vector<1x512xf32> to vector<2x512xf32>
    %420 = arith.mulf %417, %419 : vector<2x512xf32>
    %cst_198 = arith.constant 0.0339410417 : f32
    %421 = vector.broadcast %cst_198 : f32 to vector<2x512xf32>
    %422 = arith.mulf %421, %420 : vector<2x512xf32>
    %423 = arith.addf %416, %422 : vector<2x512xf32>
    %c485_i32_199 = arith.constant 485 : i32
    %424 = tpu.dynamic_rotate %297 by %c485_i32_199 dim 1 : vector<2x512xf32>, i32 -> vector<2x512xf32>
    %c18_200 = arith.constant 18 : index
    %c0_201 = arith.constant 0 : index
    %425 = vector.load %arg1[%c18_200, %c0_201] : memref<27x512xf32, #tpu.memory_space<vmem>>, vector<1x512xf32>
    %426 = vector.broadcast %425 : vector<1x512xf32> to vector<2x512xf32>
    %427 = arith.mulf %424, %426 : vector<2x512xf32>
    %cst_202 = arith.constant 0.020586282 : f32
    %428 = vector.broadcast %cst_202 : f32 to vector<2x512xf32>
    %429 = arith.mulf %428, %427 : vector<2x512xf32>
    %430 = arith.addf %423, %429 : vector<2x512xf32>
    %c484_i32_203 = arith.constant 484 : i32
    %431 = tpu.dynamic_rotate %297 by %c484_i32_203 dim 1 : vector<2x512xf32>, i32 -> vector<2x512xf32>
    %c19_204 = arith.constant 19 : index
    %c0_205 = arith.constant 0 : index
    %432 = vector.load %arg1[%c19_204, %c0_205] : memref<27x512xf32, #tpu.memory_space<vmem>>, vector<1x512xf32>
    %433 = vector.broadcast %432 : vector<1x512xf32> to vector<2x512xf32>
    %434 = arith.mulf %431, %433 : vector<2x512xf32>
    %cst_206 = arith.constant 0.0339410417 : f32
    %435 = vector.broadcast %cst_206 : f32 to vector<2x512xf32>
    %436 = arith.mulf %435, %434 : vector<2x512xf32>
    %437 = arith.addf %430, %436 : vector<2x512xf32>
    %c483_i32_207 = arith.constant 483 : i32
    %438 = tpu.dynamic_rotate %297 by %c483_i32_207 dim 1 : vector<2x512xf32>, i32 -> vector<2x512xf32>
    %c20_208 = arith.constant 20 : index
    %c0_209 = arith.constant 0 : index
    %439 = vector.load %arg1[%c20_208, %c0_209] : memref<27x512xf32, #tpu.memory_space<vmem>>, vector<1x512xf32>
    %440 = vector.broadcast %439 : vector<1x512xf32> to vector<2x512xf32>
    %441 = arith.mulf %438, %440 : vector<2x512xf32>
    %cst_210 = arith.constant 0.020586282 : f32
    %442 = vector.broadcast %cst_210 : f32 to vector<2x512xf32>
    %443 = arith.mulf %442, %441 : vector<2x512xf32>
    %444 = arith.addf %437, %443 : vector<2x512xf32>
    %c481_i32_211 = arith.constant 481 : i32
    %445 = tpu.dynamic_rotate %297 by %c481_i32_211 dim 1 : vector<2x512xf32>, i32 -> vector<2x512xf32>
    %c21_212 = arith.constant 21 : index
    %c0_213 = arith.constant 0 : index
    %446 = vector.load %arg1[%c21_212, %c0_213] : memref<27x512xf32, #tpu.memory_space<vmem>>, vector<1x512xf32>
    %447 = vector.broadcast %446 : vector<1x512xf32> to vector<2x512xf32>
    %448 = arith.mulf %445, %447 : vector<2x512xf32>
    %cst_214 = arith.constant 0.0339410417 : f32
    %449 = vector.broadcast %cst_214 : f32 to vector<2x512xf32>
    %450 = arith.mulf %449, %448 : vector<2x512xf32>
    %451 = arith.addf %444, %450 : vector<2x512xf32>
    %c480_i32_215 = arith.constant 480 : i32
    %452 = tpu.dynamic_rotate %297 by %c480_i32_215 dim 1 : vector<2x512xf32>, i32 -> vector<2x512xf32>
    %c22_216 = arith.constant 22 : index
    %c0_217 = arith.constant 0 : index
    %453 = vector.load %arg1[%c22_216, %c0_217] : memref<27x512xf32, #tpu.memory_space<vmem>>, vector<1x512xf32>
    %454 = vector.broadcast %453 : vector<1x512xf32> to vector<2x512xf32>
    %455 = arith.mulf %452, %454 : vector<2x512xf32>
    %cst_218 = arith.constant 0.0559593178 : f32
    %456 = vector.broadcast %cst_218 : f32 to vector<2x512xf32>
    %457 = arith.mulf %456, %455 : vector<2x512xf32>
    %458 = arith.addf %451, %457 : vector<2x512xf32>
    %c479_i32_219 = arith.constant 479 : i32
    %459 = tpu.dynamic_rotate %297 by %c479_i32_219 dim 1 : vector<2x512xf32>, i32 -> vector<2x512xf32>
    %c23_220 = arith.constant 23 : index
    %c0_221 = arith.constant 0 : index
    %460 = vector.load %arg1[%c23_220, %c0_221] : memref<27x512xf32, #tpu.memory_space<vmem>>, vector<1x512xf32>
    %461 = vector.broadcast %460 : vector<1x512xf32> to vector<2x512xf32>
    %462 = arith.mulf %459, %461 : vector<2x512xf32>
    %cst_222 = arith.constant 0.0339410417 : f32
    %463 = vector.broadcast %cst_222 : f32 to vector<2x512xf32>
    %464 = arith.mulf %463, %462 : vector<2x512xf32>
    %465 = arith.addf %458, %464 : vector<2x512xf32>
    %c477_i32_223 = arith.constant 477 : i32
    %466 = tpu.dynamic_rotate %297 by %c477_i32_223 dim 1 : vector<2x512xf32>, i32 -> vector<2x512xf32>
    %c24_224 = arith.constant 24 : index
    %c0_225 = arith.constant 0 : index
    %467 = vector.load %arg1[%c24_224, %c0_225] : memref<27x512xf32, #tpu.memory_space<vmem>>, vector<1x512xf32>
    %468 = vector.broadcast %467 : vector<1x512xf32> to vector<2x512xf32>
    %469 = arith.mulf %466, %468 : vector<2x512xf32>
    %cst_226 = arith.constant 0.020586282 : f32
    %470 = vector.broadcast %cst_226 : f32 to vector<2x512xf32>
    %471 = arith.mulf %470, %469 : vector<2x512xf32>
    %472 = arith.addf %465, %471 : vector<2x512xf32>
    %c476_i32_227 = arith.constant 476 : i32
    %473 = tpu.dynamic_rotate %297 by %c476_i32_227 dim 1 : vector<2x512xf32>, i32 -> vector<2x512xf32>
    %c25_228 = arith.constant 25 : index
    %c0_229 = arith.constant 0 : index
    %474 = vector.load %arg1[%c25_228, %c0_229] : memref<27x512xf32, #tpu.memory_space<vmem>>, vector<1x512xf32>
    %475 = vector.broadcast %474 : vector<1x512xf32> to vector<2x512xf32>
    %476 = arith.mulf %473, %475 : vector<2x512xf32>
    %cst_230 = arith.constant 0.0339410417 : f32
    %477 = vector.broadcast %cst_230 : f32 to vector<2x512xf32>
    %478 = arith.mulf %477, %476 : vector<2x512xf32>
    %479 = arith.addf %472, %478 : vector<2x512xf32>
    %c475_i32_231 = arith.constant 475 : i32
    %480 = tpu.dynamic_rotate %297 by %c475_i32_231 dim 1 : vector<2x512xf32>, i32 -> vector<2x512xf32>
    %c26_232 = arith.constant 26 : index
    %c0_233 = arith.constant 0 : index
    %481 = vector.load %arg1[%c26_232, %c0_233] : memref<27x512xf32, #tpu.memory_space<vmem>>, vector<1x512xf32>
    %482 = vector.broadcast %481 : vector<1x512xf32> to vector<2x512xf32>
    %483 = arith.mulf %480, %482 : vector<2x512xf32>
    %cst_234 = arith.constant 0.020586282 : f32
    %484 = vector.broadcast %cst_234 : f32 to vector<2x512xf32>
    %485 = arith.mulf %484, %483 : vector<2x512xf32>
    %486 = arith.addf %479, %485 : vector<2x512xf32>
    %487 = arith.truncf %486 : vector<2x512xf32> to vector<2x512xbf16>
    %c0_235 = arith.constant 0 : index
    %c0_236 = arith.constant 0 : index
    %488 = vector.load %arg7[%c0_235, %c0_236] : memref<54x2xbf16, #tpu.memory_space<vmem>>, vector<54x2xbf16>
    %cst_237 = arith.constant dense<0.000000e+00> : vector<54x512xf32>
    %489 = tpu.matmul %488, %487, %cst_237 {dimension_numbers = #tpu.dot_dimension_numbers<[1], [0], [0], [1], [0, 0, 1, 1], [], []>} : vector<54x2xbf16>, vector<2x512xbf16>, vector<54x512xf32> -> vector<54x512xf32>
    %cst_238 = arith.constant 0.000000e+00 : f32
    %490 = vector.broadcast %cst_238 : f32 to vector<2x512xf32>
    %491 = vector.extract_strided_slice %489 {offsets = [0, 0], sizes = [2, 512], strides = [1, 1]} : vector<54x512xf32> to vector<2x512xf32>
    %c37_i32_239 = arith.constant 37 : i32
    %492 = tpu.dynamic_rotate %491 by %c37_i32_239 dim 1 : vector<2x512xf32>, i32 -> vector<2x512xf32>
    %c0_240 = arith.constant 0 : index
    %c0_241 = arith.constant 0 : index
    %493 = vector.load %arg1[%c0_240, %c0_241] : memref<27x512xf32, #tpu.memory_space<vmem>>, vector<1x512xf32>
    %494 = vector.broadcast %493 : vector<1x512xf32> to vector<2x512xf32>
    %495 = arith.mulf %492, %494 : vector<2x512xf32>
    %496 = arith.addf %490, %495 : vector<2x512xf32>
    %497 = vector.extract_strided_slice %489 {offsets = [2, 0], sizes = [2, 512], strides = [1, 1]} : vector<54x512xf32> to vector<2x512xf32>
    %c36_i32_242 = arith.constant 36 : i32
    %498 = tpu.dynamic_rotate %497 by %c36_i32_242 dim 1 : vector<2x512xf32>, i32 -> vector<2x512xf32>
    %c1_243 = arith.constant 1 : index
    %c0_244 = arith.constant 0 : index
    %499 = vector.load %arg1[%c1_243, %c0_244] : memref<27x512xf32, #tpu.memory_space<vmem>>, vector<1x512xf32>
    %500 = vector.broadcast %499 : vector<1x512xf32> to vector<2x512xf32>
    %501 = arith.mulf %498, %500 : vector<2x512xf32>
    %502 = arith.addf %496, %501 : vector<2x512xf32>
    %503 = vector.extract_strided_slice %489 {offsets = [4, 0], sizes = [2, 512], strides = [1, 1]} : vector<54x512xf32> to vector<2x512xf32>
    %c35_i32_245 = arith.constant 35 : i32
    %504 = tpu.dynamic_rotate %503 by %c35_i32_245 dim 1 : vector<2x512xf32>, i32 -> vector<2x512xf32>
    %c2_246 = arith.constant 2 : index
    %c0_247 = arith.constant 0 : index
    %505 = vector.load %arg1[%c2_246, %c0_247] : memref<27x512xf32, #tpu.memory_space<vmem>>, vector<1x512xf32>
    %506 = vector.broadcast %505 : vector<1x512xf32> to vector<2x512xf32>
    %507 = arith.mulf %504, %506 : vector<2x512xf32>
    %508 = arith.addf %502, %507 : vector<2x512xf32>
    %509 = vector.extract_strided_slice %489 {offsets = [6, 0], sizes = [2, 512], strides = [1, 1]} : vector<54x512xf32> to vector<2x512xf32>
    %c33_i32_248 = arith.constant 33 : i32
    %510 = tpu.dynamic_rotate %509 by %c33_i32_248 dim 1 : vector<2x512xf32>, i32 -> vector<2x512xf32>
    %c3_249 = arith.constant 3 : index
    %c0_250 = arith.constant 0 : index
    %511 = vector.load %arg1[%c3_249, %c0_250] : memref<27x512xf32, #tpu.memory_space<vmem>>, vector<1x512xf32>
    %512 = vector.broadcast %511 : vector<1x512xf32> to vector<2x512xf32>
    %513 = arith.mulf %510, %512 : vector<2x512xf32>
    %514 = arith.addf %508, %513 : vector<2x512xf32>
    %515 = vector.extract_strided_slice %489 {offsets = [8, 0], sizes = [2, 512], strides = [1, 1]} : vector<54x512xf32> to vector<2x512xf32>
    %c32_i32_251 = arith.constant 32 : i32
    %516 = tpu.dynamic_rotate %515 by %c32_i32_251 dim 1 : vector<2x512xf32>, i32 -> vector<2x512xf32>
    %c4_252 = arith.constant 4 : index
    %c0_253 = arith.constant 0 : index
    %517 = vector.load %arg1[%c4_252, %c0_253] : memref<27x512xf32, #tpu.memory_space<vmem>>, vector<1x512xf32>
    %518 = vector.broadcast %517 : vector<1x512xf32> to vector<2x512xf32>
    %519 = arith.mulf %516, %518 : vector<2x512xf32>
    %520 = arith.addf %514, %519 : vector<2x512xf32>
    %521 = vector.extract_strided_slice %489 {offsets = [10, 0], sizes = [2, 512], strides = [1, 1]} : vector<54x512xf32> to vector<2x512xf32>
    %c31_i32_254 = arith.constant 31 : i32
    %522 = tpu.dynamic_rotate %521 by %c31_i32_254 dim 1 : vector<2x512xf32>, i32 -> vector<2x512xf32>
    %c5_255 = arith.constant 5 : index
    %c0_256 = arith.constant 0 : index
    %523 = vector.load %arg1[%c5_255, %c0_256] : memref<27x512xf32, #tpu.memory_space<vmem>>, vector<1x512xf32>
    %524 = vector.broadcast %523 : vector<1x512xf32> to vector<2x512xf32>
    %525 = arith.mulf %522, %524 : vector<2x512xf32>
    %526 = arith.addf %520, %525 : vector<2x512xf32>
    %527 = vector.extract_strided_slice %489 {offsets = [12, 0], sizes = [2, 512], strides = [1, 1]} : vector<54x512xf32> to vector<2x512xf32>
    %c29_i32_257 = arith.constant 29 : i32
    %528 = tpu.dynamic_rotate %527 by %c29_i32_257 dim 1 : vector<2x512xf32>, i32 -> vector<2x512xf32>
    %c6_258 = arith.constant 6 : index
    %c0_259 = arith.constant 0 : index
    %529 = vector.load %arg1[%c6_258, %c0_259] : memref<27x512xf32, #tpu.memory_space<vmem>>, vector<1x512xf32>
    %530 = vector.broadcast %529 : vector<1x512xf32> to vector<2x512xf32>
    %531 = arith.mulf %528, %530 : vector<2x512xf32>
    %532 = arith.addf %526, %531 : vector<2x512xf32>
    %533 = vector.extract_strided_slice %489 {offsets = [14, 0], sizes = [2, 512], strides = [1, 1]} : vector<54x512xf32> to vector<2x512xf32>
    %c28_i32_260 = arith.constant 28 : i32
    %534 = tpu.dynamic_rotate %533 by %c28_i32_260 dim 1 : vector<2x512xf32>, i32 -> vector<2x512xf32>
    %c7_261 = arith.constant 7 : index
    %c0_262 = arith.constant 0 : index
    %535 = vector.load %arg1[%c7_261, %c0_262] : memref<27x512xf32, #tpu.memory_space<vmem>>, vector<1x512xf32>
    %536 = vector.broadcast %535 : vector<1x512xf32> to vector<2x512xf32>
    %537 = arith.mulf %534, %536 : vector<2x512xf32>
    %538 = arith.addf %532, %537 : vector<2x512xf32>
    %539 = vector.extract_strided_slice %489 {offsets = [16, 0], sizes = [2, 512], strides = [1, 1]} : vector<54x512xf32> to vector<2x512xf32>
    %c27_i32_263 = arith.constant 27 : i32
    %540 = tpu.dynamic_rotate %539 by %c27_i32_263 dim 1 : vector<2x512xf32>, i32 -> vector<2x512xf32>
    %c8_264 = arith.constant 8 : index
    %c0_265 = arith.constant 0 : index
    %541 = vector.load %arg1[%c8_264, %c0_265] : memref<27x512xf32, #tpu.memory_space<vmem>>, vector<1x512xf32>
    %542 = vector.broadcast %541 : vector<1x512xf32> to vector<2x512xf32>
    %543 = arith.mulf %540, %542 : vector<2x512xf32>
    %544 = arith.addf %538, %543 : vector<2x512xf32>
    %545 = vector.extract_strided_slice %489 {offsets = [18, 0], sizes = [2, 512], strides = [1, 1]} : vector<54x512xf32> to vector<2x512xf32>
    %c5_i32_266 = arith.constant 5 : i32
    %546 = tpu.dynamic_rotate %545 by %c5_i32_266 dim 1 : vector<2x512xf32>, i32 -> vector<2x512xf32>
    %c9_267 = arith.constant 9 : index
    %c0_268 = arith.constant 0 : index
    %547 = vector.load %arg1[%c9_267, %c0_268] : memref<27x512xf32, #tpu.memory_space<vmem>>, vector<1x512xf32>
    %548 = vector.broadcast %547 : vector<1x512xf32> to vector<2x512xf32>
    %549 = arith.mulf %546, %548 : vector<2x512xf32>
    %550 = arith.addf %544, %549 : vector<2x512xf32>
    %551 = vector.extract_strided_slice %489 {offsets = [20, 0], sizes = [2, 512], strides = [1, 1]} : vector<54x512xf32> to vector<2x512xf32>
    %c4_i32_269 = arith.constant 4 : i32
    %552 = tpu.dynamic_rotate %551 by %c4_i32_269 dim 1 : vector<2x512xf32>, i32 -> vector<2x512xf32>
    %c10_270 = arith.constant 10 : index
    %c0_271 = arith.constant 0 : index
    %553 = vector.load %arg1[%c10_270, %c0_271] : memref<27x512xf32, #tpu.memory_space<vmem>>, vector<1x512xf32>
    %554 = vector.broadcast %553 : vector<1x512xf32> to vector<2x512xf32>
    %555 = arith.mulf %552, %554 : vector<2x512xf32>
    %556 = arith.addf %550, %555 : vector<2x512xf32>
    %557 = vector.extract_strided_slice %489 {offsets = [22, 0], sizes = [2, 512], strides = [1, 1]} : vector<54x512xf32> to vector<2x512xf32>
    %c3_i32_272 = arith.constant 3 : i32
    %558 = tpu.dynamic_rotate %557 by %c3_i32_272 dim 1 : vector<2x512xf32>, i32 -> vector<2x512xf32>
    %c11_273 = arith.constant 11 : index
    %c0_274 = arith.constant 0 : index
    %559 = vector.load %arg1[%c11_273, %c0_274] : memref<27x512xf32, #tpu.memory_space<vmem>>, vector<1x512xf32>
    %560 = vector.broadcast %559 : vector<1x512xf32> to vector<2x512xf32>
    %561 = arith.mulf %558, %560 : vector<2x512xf32>
    %562 = arith.addf %556, %561 : vector<2x512xf32>
    %563 = vector.extract_strided_slice %489 {offsets = [24, 0], sizes = [2, 512], strides = [1, 1]} : vector<54x512xf32> to vector<2x512xf32>
    %c1_i32_275 = arith.constant 1 : i32
    %564 = tpu.dynamic_rotate %563 by %c1_i32_275 dim 1 : vector<2x512xf32>, i32 -> vector<2x512xf32>
    %c12_276 = arith.constant 12 : index
    %c0_277 = arith.constant 0 : index
    %565 = vector.load %arg1[%c12_276, %c0_277] : memref<27x512xf32, #tpu.memory_space<vmem>>, vector<1x512xf32>
    %566 = vector.broadcast %565 : vector<1x512xf32> to vector<2x512xf32>
    %567 = arith.mulf %564, %566 : vector<2x512xf32>
    %568 = arith.addf %562, %567 : vector<2x512xf32>
    %569 = vector.extract_strided_slice %489 {offsets = [26, 0], sizes = [2, 512], strides = [1, 1]} : vector<54x512xf32> to vector<2x512xf32>
    %c13_278 = arith.constant 13 : index
    %c0_279 = arith.constant 0 : index
    %570 = vector.load %arg1[%c13_278, %c0_279] : memref<27x512xf32, #tpu.memory_space<vmem>>, vector<1x512xf32>
    %571 = vector.broadcast %570 : vector<1x512xf32> to vector<2x512xf32>
    %572 = arith.mulf %569, %571 : vector<2x512xf32>
    %573 = arith.addf %568, %572 : vector<2x512xf32>
    %574 = vector.extract_strided_slice %489 {offsets = [28, 0], sizes = [2, 512], strides = [1, 1]} : vector<54x512xf32> to vector<2x512xf32>
    %c511_i32_280 = arith.constant 511 : i32
    %575 = tpu.dynamic_rotate %574 by %c511_i32_280 dim 1 : vector<2x512xf32>, i32 -> vector<2x512xf32>
    %c14_281 = arith.constant 14 : index
    %c0_282 = arith.constant 0 : index
    %576 = vector.load %arg1[%c14_281, %c0_282] : memref<27x512xf32, #tpu.memory_space<vmem>>, vector<1x512xf32>
    %577 = vector.broadcast %576 : vector<1x512xf32> to vector<2x512xf32>
    %578 = arith.mulf %575, %577 : vector<2x512xf32>
    %579 = arith.addf %573, %578 : vector<2x512xf32>
    %580 = vector.extract_strided_slice %489 {offsets = [30, 0], sizes = [2, 512], strides = [1, 1]} : vector<54x512xf32> to vector<2x512xf32>
    %c509_i32_283 = arith.constant 509 : i32
    %581 = tpu.dynamic_rotate %580 by %c509_i32_283 dim 1 : vector<2x512xf32>, i32 -> vector<2x512xf32>
    %c15_284 = arith.constant 15 : index
    %c0_285 = arith.constant 0 : index
    %582 = vector.load %arg1[%c15_284, %c0_285] : memref<27x512xf32, #tpu.memory_space<vmem>>, vector<1x512xf32>
    %583 = vector.broadcast %582 : vector<1x512xf32> to vector<2x512xf32>
    %584 = arith.mulf %581, %583 : vector<2x512xf32>
    %585 = arith.addf %579, %584 : vector<2x512xf32>
    %586 = vector.extract_strided_slice %489 {offsets = [32, 0], sizes = [2, 512], strides = [1, 1]} : vector<54x512xf32> to vector<2x512xf32>
    %c508_i32_286 = arith.constant 508 : i32
    %587 = tpu.dynamic_rotate %586 by %c508_i32_286 dim 1 : vector<2x512xf32>, i32 -> vector<2x512xf32>
    %c16_287 = arith.constant 16 : index
    %c0_288 = arith.constant 0 : index
    %588 = vector.load %arg1[%c16_287, %c0_288] : memref<27x512xf32, #tpu.memory_space<vmem>>, vector<1x512xf32>
    %589 = vector.broadcast %588 : vector<1x512xf32> to vector<2x512xf32>
    %590 = arith.mulf %587, %589 : vector<2x512xf32>
    %591 = arith.addf %585, %590 : vector<2x512xf32>
    %592 = vector.extract_strided_slice %489 {offsets = [34, 0], sizes = [2, 512], strides = [1, 1]} : vector<54x512xf32> to vector<2x512xf32>
    %c507_i32_289 = arith.constant 507 : i32
    %593 = tpu.dynamic_rotate %592 by %c507_i32_289 dim 1 : vector<2x512xf32>, i32 -> vector<2x512xf32>
    %c17_290 = arith.constant 17 : index
    %c0_291 = arith.constant 0 : index
    %594 = vector.load %arg1[%c17_290, %c0_291] : memref<27x512xf32, #tpu.memory_space<vmem>>, vector<1x512xf32>
    %595 = vector.broadcast %594 : vector<1x512xf32> to vector<2x512xf32>
    %596 = arith.mulf %593, %595 : vector<2x512xf32>
    %597 = arith.addf %591, %596 : vector<2x512xf32>
    %598 = vector.extract_strided_slice %489 {offsets = [36, 0], sizes = [2, 512], strides = [1, 1]} : vector<54x512xf32> to vector<2x512xf32>
    %c485_i32_292 = arith.constant 485 : i32
    %599 = tpu.dynamic_rotate %598 by %c485_i32_292 dim 1 : vector<2x512xf32>, i32 -> vector<2x512xf32>
    %c18_293 = arith.constant 18 : index
    %c0_294 = arith.constant 0 : index
    %600 = vector.load %arg1[%c18_293, %c0_294] : memref<27x512xf32, #tpu.memory_space<vmem>>, vector<1x512xf32>
    %601 = vector.broadcast %600 : vector<1x512xf32> to vector<2x512xf32>
    %602 = arith.mulf %599, %601 : vector<2x512xf32>
    %603 = arith.addf %597, %602 : vector<2x512xf32>
    %604 = vector.extract_strided_slice %489 {offsets = [38, 0], sizes = [2, 512], strides = [1, 1]} : vector<54x512xf32> to vector<2x512xf32>
    %c484_i32_295 = arith.constant 484 : i32
    %605 = tpu.dynamic_rotate %604 by %c484_i32_295 dim 1 : vector<2x512xf32>, i32 -> vector<2x512xf32>
    %c19_296 = arith.constant 19 : index
    %c0_297 = arith.constant 0 : index
    %606 = vector.load %arg1[%c19_296, %c0_297] : memref<27x512xf32, #tpu.memory_space<vmem>>, vector<1x512xf32>
    %607 = vector.broadcast %606 : vector<1x512xf32> to vector<2x512xf32>
    %608 = arith.mulf %605, %607 : vector<2x512xf32>
    %609 = arith.addf %603, %608 : vector<2x512xf32>
    %610 = vector.extract_strided_slice %489 {offsets = [40, 0], sizes = [2, 512], strides = [1, 1]} : vector<54x512xf32> to vector<2x512xf32>
    %c483_i32_298 = arith.constant 483 : i32
    %611 = tpu.dynamic_rotate %610 by %c483_i32_298 dim 1 : vector<2x512xf32>, i32 -> vector<2x512xf32>
    %c20_299 = arith.constant 20 : index
    %c0_300 = arith.constant 0 : index
    %612 = vector.load %arg1[%c20_299, %c0_300] : memref<27x512xf32, #tpu.memory_space<vmem>>, vector<1x512xf32>
    %613 = vector.broadcast %612 : vector<1x512xf32> to vector<2x512xf32>
    %614 = arith.mulf %611, %613 : vector<2x512xf32>
    %615 = arith.addf %609, %614 : vector<2x512xf32>
    %616 = vector.extract_strided_slice %489 {offsets = [42, 0], sizes = [2, 512], strides = [1, 1]} : vector<54x512xf32> to vector<2x512xf32>
    %c481_i32_301 = arith.constant 481 : i32
    %617 = tpu.dynamic_rotate %616 by %c481_i32_301 dim 1 : vector<2x512xf32>, i32 -> vector<2x512xf32>
    %c21_302 = arith.constant 21 : index
    %c0_303 = arith.constant 0 : index
    %618 = vector.load %arg1[%c21_302, %c0_303] : memref<27x512xf32, #tpu.memory_space<vmem>>, vector<1x512xf32>
    %619 = vector.broadcast %618 : vector<1x512xf32> to vector<2x512xf32>
    %620 = arith.mulf %617, %619 : vector<2x512xf32>
    %621 = arith.addf %615, %620 : vector<2x512xf32>
    %622 = vector.extract_strided_slice %489 {offsets = [44, 0], sizes = [2, 512], strides = [1, 1]} : vector<54x512xf32> to vector<2x512xf32>
    %c480_i32_304 = arith.constant 480 : i32
    %623 = tpu.dynamic_rotate %622 by %c480_i32_304 dim 1 : vector<2x512xf32>, i32 -> vector<2x512xf32>
    %c22_305 = arith.constant 22 : index
    %c0_306 = arith.constant 0 : index
    %624 = vector.load %arg1[%c22_305, %c0_306] : memref<27x512xf32, #tpu.memory_space<vmem>>, vector<1x512xf32>
    %625 = vector.broadcast %624 : vector<1x512xf32> to vector<2x512xf32>
    %626 = arith.mulf %623, %625 : vector<2x512xf32>
    %627 = arith.addf %621, %626 : vector<2x512xf32>
    %628 = vector.extract_strided_slice %489 {offsets = [46, 0], sizes = [2, 512], strides = [1, 1]} : vector<54x512xf32> to vector<2x512xf32>
    %c479_i32_307 = arith.constant 479 : i32
    %629 = tpu.dynamic_rotate %628 by %c479_i32_307 dim 1 : vector<2x512xf32>, i32 -> vector<2x512xf32>
    %c23_308 = arith.constant 23 : index
    %c0_309 = arith.constant 0 : index
    %630 = vector.load %arg1[%c23_308, %c0_309] : memref<27x512xf32, #tpu.memory_space<vmem>>, vector<1x512xf32>
    %631 = vector.broadcast %630 : vector<1x512xf32> to vector<2x512xf32>
    %632 = arith.mulf %629, %631 : vector<2x512xf32>
    %633 = arith.addf %627, %632 : vector<2x512xf32>
    %634 = vector.extract_strided_slice %489 {offsets = [48, 0], sizes = [2, 512], strides = [1, 1]} : vector<54x512xf32> to vector<2x512xf32>
    %c477_i32_310 = arith.constant 477 : i32
    %635 = tpu.dynamic_rotate %634 by %c477_i32_310 dim 1 : vector<2x512xf32>, i32 -> vector<2x512xf32>
    %c24_311 = arith.constant 24 : index
    %c0_312 = arith.constant 0 : index
    %636 = vector.load %arg1[%c24_311, %c0_312] : memref<27x512xf32, #tpu.memory_space<vmem>>, vector<1x512xf32>
    %637 = vector.broadcast %636 : vector<1x512xf32> to vector<2x512xf32>
    %638 = arith.mulf %635, %637 : vector<2x512xf32>
    %639 = arith.addf %633, %638 : vector<2x512xf32>
    %640 = vector.extract_strided_slice %489 {offsets = [50, 0], sizes = [2, 512], strides = [1, 1]} : vector<54x512xf32> to vector<2x512xf32>
    %c476_i32_313 = arith.constant 476 : i32
    %641 = tpu.dynamic_rotate %640 by %c476_i32_313 dim 1 : vector<2x512xf32>, i32 -> vector<2x512xf32>
    %c25_314 = arith.constant 25 : index
    %c0_315 = arith.constant 0 : index
    %642 = vector.load %arg1[%c25_314, %c0_315] : memref<27x512xf32, #tpu.memory_space<vmem>>, vector<1x512xf32>
    %643 = vector.broadcast %642 : vector<1x512xf32> to vector<2x512xf32>
    %644 = arith.mulf %641, %643 : vector<2x512xf32>
    %645 = arith.addf %639, %644 : vector<2x512xf32>
    %646 = vector.extract_strided_slice %489 {offsets = [52, 0], sizes = [2, 512], strides = [1, 1]} : vector<54x512xf32> to vector<2x512xf32>
    %c475_i32_316 = arith.constant 475 : i32
    %647 = tpu.dynamic_rotate %646 by %c475_i32_316 dim 1 : vector<2x512xf32>, i32 -> vector<2x512xf32>
    %c26_317 = arith.constant 26 : index
    %c0_318 = arith.constant 0 : index
    %648 = vector.load %arg1[%c26_317, %c0_318] : memref<27x512xf32, #tpu.memory_space<vmem>>, vector<1x512xf32>
    %649 = vector.broadcast %648 : vector<1x512xf32> to vector<2x512xf32>
    %650 = arith.mulf %647, %649 : vector<2x512xf32>
    %651 = arith.addf %645, %650 : vector<2x512xf32>
    %c0_319 = arith.constant 0 : index
    %c0_320 = arith.constant 0 : index
    %652 = vector.load %arg8[%c0_319, %c0_320] : memref<2x1xf32, #tpu.memory_space<vmem>>, vector<2x1xf32>
    %653 = vector.broadcast %652 : vector<2x1xf32> to vector<2x512xf32>
    %654 = arith.addf %651, %653 : vector<2x512xf32>
    %cst_321 = arith.constant 0.000000e+00 : f32
    %655 = vector.broadcast %cst_321 : f32 to vector<2x512xf32>
    %656 = arith.maximumf %654, %655 : vector<2x512xf32>
    %cst_322 = arith.constant 0.000000e+00 : f32
    %657 = vector.broadcast %cst_322 : f32 to vector<1x4xf32>
    %658 = vector.extract_strided_slice %656 {offsets = [0, 0], sizes = [1, 512], strides = [1, 1]} : vector<2x512xf32> to vector<1x512xf32>
    %c0_323 = arith.constant 0 : index
    %c0_324 = arith.constant 0 : index
    %c0_325 = arith.constant 0 : index
    %659 = vector.load %arg9[%c0_323, %c0_324, %c0_325] : memref<2x512x4xf32, #tpu.memory_space<vmem>>, vector<1x512x4xf32>
    %660 = vector.shape_cast %659 : vector<1x512x4xf32> to vector<512x4xf32>
    %cst_326 = arith.constant dense<0.000000e+00> : vector<1x4xf32>
    %661 = tpu.matmul %658, %660, %cst_326 {dimension_numbers = #tpu.dot_dimension_numbers<[1], [0], [0], [1], [0, 0, 1, 1], [], []>} : vector<1x512xf32>, vector<512x4xf32>, vector<1x4xf32> -> vector<1x4xf32>
    %662 = arith.addf %657, %661 : vector<1x4xf32>
    %663 = vector.extract_strided_slice %656 {offsets = [1, 0], sizes = [1, 512], strides = [1, 1]} : vector<2x512xf32> to vector<1x512xf32>
    %c1_327 = arith.constant 1 : index
    %c0_328 = arith.constant 0 : index
    %c0_329 = arith.constant 0 : index
    %664 = vector.load %arg9[%c1_327, %c0_328, %c0_329] : memref<2x512x4xf32, #tpu.memory_space<vmem>>, vector<1x512x4xf32>
    %665 = vector.shape_cast %664 : vector<1x512x4xf32> to vector<512x4xf32>
    %cst_330 = arith.constant dense<0.000000e+00> : vector<1x4xf32>
    %666 = tpu.matmul %663, %665, %cst_330 {dimension_numbers = #tpu.dot_dimension_numbers<[1], [0], [0], [1], [0, 0, 1, 1], [], []>} : vector<1x512xf32>, vector<512x4xf32>, vector<1x4xf32> -> vector<1x4xf32>
    %667 = arith.addf %662, %666 : vector<1x4xf32>
    %c0_331 = arith.constant 0 : index
    %c0_332 = arith.constant 0 : index
    %668 = vector.load %arg10[%c0_331, %c0_332] : memref<1x4xf32, #tpu.memory_space<vmem>>, vector<1x4xf32>
    %669 = arith.addf %667, %668 : vector<1x4xf32>
    %cst_333 = arith.constant 0.000000e+00 : f32
    %670 = vector.broadcast %cst_333 : f32 to vector<1x4xf32>
    %671 = arith.maximumf %669, %670 : vector<1x4xf32>
    %c0_334 = arith.constant 0 : index
    %c0_335 = arith.constant 0 : index
    %672 = vector.load %arg11[%c0_334, %c0_335] : memref<4x20xf32, #tpu.memory_space<vmem>>, vector<4x20xf32>
    %cst_336 = arith.constant dense<0.000000e+00> : vector<1x20xf32>
    %673 = tpu.matmul %671, %672, %cst_336 {dimension_numbers = #tpu.dot_dimension_numbers<[1], [0], [0], [1], [0, 0, 1, 1], [], []>} : vector<1x4xf32>, vector<4x20xf32>, vector<1x20xf32> -> vector<1x20xf32>
    %c0_337 = arith.constant 0 : index
    %c0_338 = arith.constant 0 : index
    %674 = vector.load %arg12[%c0_337, %c0_338] : memref<1x20xf32, #tpu.memory_space<vmem>>, vector<1x20xf32>
    %675 = arith.addf %673, %674 : vector<1x20xf32>
    %c0_339 = arith.constant 0 : index
    %c0_340 = arith.constant 0 : index
    %676 = vector.load %arg13[%c0_339, %c0_340] : memref<1x20xf32, #tpu.memory_space<vmem>>, vector<1x20xf32>
    tpu.vector_store %arg13[%c0_339, %c0_340], %675 {strides = array<i32>} : memref<1x20xf32, #tpu.memory_space<vmem>>, vector<1x20xf32>,
    return
  }
}

</mosaic_0001>

<llo_original>
// kernel: _lambda_.1
$region0: #{_lambda_.1}
  #allocation0 [shape = 'u32[]', space=smem, size = 0x4, offset = 0x4, fixed_abs, tag = 'smem constant byte address 0x4 - core index']
  #allocation1 [shape = 'u32[144,128]{1,0:T(1,128)}', space=vmem, size = 0x12000, scoped, tag = 'internal scratch']
  %s0 = inlined_call_operand.vmem [shape: f32[2,512], index: 0, kind: input, shape index: {}]
  %s1 = inlined_call_operand.vmem [shape: f32[27,512], index: 1, kind: input, shape index: {}]
  %s2 = inlined_call_operand.vmem [shape: bf16[256,256], index: 2, kind: input, shape index: {}]
  %s3 = inlined_call_operand.hbm [shape: bf16[128,54], index: 3, kind: input, shape index: {}]
  %s4 = inlined_call_operand.hbm [shape: f32[128,1], index: 4, kind: input, shape index: {}]
  %s5 = inlined_call_operand.vmem [shape: bf16[54,128], index: 5, kind: input, shape index: {}]
  %s6 = inlined_call_operand.vmem [shape: f32[2,1], index: 6, kind: input, shape index: {}]
  %s7 = inlined_call_operand.hbm [shape: bf16[54,2], index: 7, kind: input, shape index: {}]
  %s8 = inlined_call_operand.hbm [shape: f32[2,1], index: 8, kind: input, shape index: {}]
  %s9 = inlined_call_operand.vmem [shape: f32[2,512,4], index: 9, kind: input, shape index: {}]
  %s10 = inlined_call_operand.hbm [shape: f32[1,4], index: 10, kind: input, shape index: {}]
  %s11 = inlined_call_operand.vmem [shape: f32[4,20], index: 11, kind: input, shape index: {}]
  %s12 = inlined_call_operand.hbm [shape: f32[1,20], index: 12, kind: input, shape index: {}]
  %s13 = inlined_call_operand.vmem [shape: f32[1,20], index: 13, kind: output, shape index: {}]
  %s14 = sld [smem:[#allocation0]]
  $region86: #{_lambda_.1} parent=0
    _
  %s16 = ssub.s32 1, %s14
  %s17 = scalar_select 0, %s16, %s14
  $region1: #{_lambda_.1} parent=0
    #allocation2 [shape = 'u8[32768]{0}', space=vmem, size = 0x8000, scoped, tag = 'input window, operand 3, single buffered']
    #allocation3 [shape = 's32[1]{0}', space=sflag, size = 0x4, scoped, tag = 'scoped memory for _lambda_.1']
    #allocation4 [shape = 'u8[65536]{0}', space=vmem, size = 0x10000, scoped, tag = 'input window, operand 4, single buffered']
    #allocation5 [shape = 's32[1]{0}', space=sflag, size = 0x4, scoped, tag = 'scoped memory for _lambda_.1']
    #allocation6 [shape = 'u8[14336]{0}', space=vmem, size = 0x3800, scoped, tag = 'input window, operand 7, single buffered']
    #allocation7 [shape = 'u8[1024]{0}', space=vmem, size = 0x400, scoped, tag = 'input window, operand 8, single buffered']
    #allocation8 [shape = 's32[1]{0}', space=sflag, size = 0x4, scoped, tag = 'scoped memory for _lambda_.1']
    #allocation9 [shape = 'u8[512]{0}', space=vmem, size = 0x400, scoped, tag = 'input window, operand 10, single buffered']
    #allocation10 [shape = 'u8[512]{0}', space=vmem, size = 0x400, scoped, tag = 'input window, operand 12, single buffered']
    #allocation11 [shape = 's32[1]{0}', space=sflag, size = 0x4, scoped, tag = 'scoped memory for _lambda_.1']
    %18 = vsyncpa [#allocation3], 0
    %19 = vsyncpa [#allocation5], 0
    %20 = vsyncpa [#allocation8], 0
    %21 = vsyncpa [#allocation11], 0
    // Predicated region
    $region2: #{_lambda_.1} parent=1 // pred_check
      _
    $region3: #{_lambda_.1} parent=1 // pred_check_branch
      %23 = sbr.rel (0) target = $region5
    $region4: #{_lambda_.1} parent=1 // pred_region
      _
    $region5: #{_lambda_.1} parent=1 // pred_fallthru
      _
    // Predicated region
    $region6: #{_lambda_.1} parent=1 // pred_check
      _
    $region7: #{_lambda_.1} parent=1 // pred_check_branch
      %25 = sbr.rel (0) target = $region9
    $region8: #{_lambda_.1} parent=1 // pred_region
      _
    $region9: #{_lambda_.1} parent=1 // pred_fallthru
      _
    // Predicated region
    $region10: #{_lambda_.1} parent=1 // pred_check
      _
    $region11: #{_lambda_.1} parent=1 // pred_check_branch
      %27 = sbr.rel (0) target = $region13
    $region12: #{_lambda_.1} parent=1 // pred_region
      _
    $region13: #{_lambda_.1} parent=1 // pred_fallthru
      _
    // Predicated region
    $region14: #{_lambda_.1} parent=1 // pred_check
      _
    $region15: #{_lambda_.1} parent=1 // pred_check_branch
      %29 = sbr.rel (0) target = $region17
    $region16: #{_lambda_.1} parent=1 // pred_region
      %s31 = ssub.s32 1024, 1024
      %32 = vsyncadd [#allocation3], %s31
      %s33 = sshll.u32 [#allocation2], 4
      %s34 = int_to_ptr.vmem [resolvable:$true] %s33
      %39 = dma.hbm_to_vmem [thread:$0]  %s3, 1024, %s34, [#allocation3], 64, 64, 4
    $region17: #{_lambda_.1} parent=1 // pred_fallthru
      _
    // Predicated region
    $region18: #{_lambda_.1} parent=1 // pred_check
      _
    $region19: #{_lambda_.1} parent=1 // pred_check_branch
      %41 = sbr.rel (0) target = $region21
    $region20: #{_lambda_.1} parent=1 // pred_region
      %s43 = ssub.s32 2048, 2048
      %44 = vsyncadd [#allocation5], %s43
      %s45 = sshll.u32 [#allocation4], 4
      %s46 = int_to_ptr.vmem [resolvable:$true] %s45
      %51 = dma.hbm_to_vmem [thread:$0]  %s4, 2048, %s46, [#allocation5], 128, 128, 8
    $region21: #{_lambda_.1} parent=1 // pred_fallthru
      _
    // Predicated region
    $region22: #{_lambda_.1} parent=1 // pred_check
      _
    $region23: #{_lambda_.1} parent=1 // pred_check_branch
      %53 = sbr.rel (0) target = $region25
    $region24: #{_lambda_.1} parent=1 // pred_region
      _
    $region25: #{_lambda_.1} parent=1 // pred_fallthru
      _
    // Predicated region
    $region26: #{_lambda_.1} parent=1 // pred_check
      _
    $region27: #{_lambda_.1} parent=1 // pred_check_branch
      %55 = sbr.rel (0) target = $region29
    $region28: #{_lambda_.1} parent=1 // pred_region
      _
    $region29: #{_lambda_.1} parent=1 // pred_fallthru
      _
    // Predicated region
    $region30: #{_lambda_.1} parent=1 // pred_check
      _
    $region31: #{_lambda_.1} parent=1 // pred_check_branch
      %57 = sbr.rel (0) target = $region33
    $region32: #{_lambda_.1} parent=1 // pred_region
      %s59 = ssub.s32 448, 448
      %60 = vsyncadd [#allocation5], %s59
      %s61 = sshll.u32 [#allocation6], 4
      %s62 = int_to_ptr.vmem [resolvable:$true] %s61
      %67 = dma.hbm_to_vmem [thread:$0]  %s7, 448, %s62, [#allocation5], 64, 64, 4
    $region33: #{_lambda_.1} parent=1 // pred_fallthru
      _
    // Predicated region
    $region34: #{_lambda_.1} parent=1 // pred_check
      _
    $region35: #{_lambda_.1} parent=1 // pred_check_branch
      %69 = sbr.rel (0) target = $region37
    $region36: #{_lambda_.1} parent=1 // pred_region
      %s71 = ssub.s32 32, 32
      %72 = vsyncadd [#allocation8], %s71
      %s74 = sshll.u32 [#allocation7], 4
      %s75 = int_to_ptr.vmem [resolvable:$true] %s74
      %77 = dma.hbm_to_vmem [thread:$0]  %s8, 32, %s75, [#allocation8]
    $region37: #{_lambda_.1} parent=1 // pred_fallthru
      _
    // Predicated region
    $region38: #{_lambda_.1} parent=1 // pred_check
      _
    $region39: #{_lambda_.1} parent=1 // pred_check_branch
      %79 = sbr.rel (0) target = $region41
    $region40: #{_lambda_.1} parent=1 // pred_region
      _
    $region41: #{_lambda_.1} parent=1 // pred_fallthru
      _
    // Predicated region
    $region42: #{_lambda_.1} parent=1 // pred_check
      _
    $region43: #{_lambda_.1} parent=1 // pred_check_branch
      %81 = sbr.rel (0) target = $region45
    $region44: #{_lambda_.1} parent=1 // pred_region
      %s83 = ssub.s32 16, 16
      %84 = vsyncadd [#allocation8], %s83
      %s86 = sshll.u32 [#allocation9], 4
      %s87 = int_to_ptr.vmem [resolvable:$true] %s86
      %89 = dma.hbm_to_vmem [thread:$0]  %s10, 16, %s87, [#allocation8]
    $region45: #{_lambda_.1} parent=1 // pred_fallthru
      _
    // Predicated region
    $region46: #{_lambda_.1} parent=1 // pred_check
      _
    $region47: #{_lambda_.1} parent=1 // pred_check_branch
      %91 = sbr.rel (0) target = $region49
    $region48: #{_lambda_.1} parent=1 // pred_region
      _
    $region49: #{_lambda_.1} parent=1 // pred_fallthru
      _
    // Predicated region
    $region50: #{_lambda_.1} parent=1 // pred_check
      _
    $region51: #{_lambda_.1} parent=1 // pred_check_branch
      %93 = sbr.rel (0) target = $region53
    $region52: #{_lambda_.1} parent=1 // pred_region
      %s95 = ssub.s32 16, 16
      %96 = vsyncadd [#allocation11], %s95
      %s98 = sshll.u32 [#allocation10], 4
      %s99 = int_to_ptr.vmem [resolvable:$true] %s98
      %101 = dma.hbm_to_vmem [thread:$0]  %s12, 16, %s99, [#allocation11]
    $region53: #{_lambda_.1} parent=1 // pred_fallthru
      _
    // Predicated region
    $region54: #{_lambda_.1} parent=1 // pred_check
      _
    $region55: #{_lambda_.1} parent=1 // pred_check_branch
      %103 = sbr.rel (0) target = $region57
    $region56: #{_lambda_.1} parent=1 // pred_region
      %104 = dma.done [#allocation3], 1024
    $region57: #{_lambda_.1} parent=1 // pred_fallthru
      _
    // Predicated region
    $region58: #{_lambda_.1} parent=1 // pred_check
      _
    $region59: #{_lambda_.1} parent=1 // pred_check_branch
      %106 = sbr.rel (0) target = $region61
    $region60: #{_lambda_.1} parent=1 // pred_region
      %107 = dma.done [#allocation5], 2048
    $region61: #{_lambda_.1} parent=1 // pred_fallthru
      _
    // Predicated region
    $region62: #{_lambda_.1} parent=1 // pred_check
      _
    $region63: #{_lambda_.1} parent=1 // pred_check_branch
      %109 = sbr.rel (0) target = $region65
    $region64: #{_lambda_.1} parent=1 // pred_region
      %110 = dma.done [#allocation5], 448
    $region65: #{_lambda_.1} parent=1 // pred_fallthru
      _
    // Predicated region
    $region66: #{_lambda_.1} parent=1 // pred_check
      _
    $region67: #{_lambda_.1} parent=1 // pred_check_branch
      %112 = sbr.rel (0) target = $region69
    $region68: #{_lambda_.1} parent=1 // pred_region
      %113 = dma.done [#allocation8], 32
    $region69: #{_lambda_.1} parent=1 // pred_fallthru
      _
    // Predicated region
    $region70: #{_lambda_.1} parent=1 // pred_check
      _
    $region71: #{_lambda_.1} parent=1 // pred_check_branch
      %115 = sbr.rel (0) target = $region73
    $region72: #{_lambda_.1} parent=1 // pred_region
      %116 = dma.done [#allocation8], 16
    $region73: #{_lambda_.1} parent=1 // pred_fallthru
      _
    // Predicated region
    $region74: #{_lambda_.1} parent=1 // pred_check
      _
    $region75: #{_lambda_.1} parent=1 // pred_check_branch
      %118 = sbr.rel (0) target = $region77
    $region76: #{_lambda_.1} parent=1 // pred_region
      %119 = dma.done [#allocation11], 16
    $region77: #{_lambda_.1} parent=1 // pred_fallthru
      _
    %v121 = vld [vmem:[%s0] sm:$0xff]
    %v123 = vcombine.high %v121, %v121
    %v125 = vunpack.c.l.s4 1983009808
    %v126 = vunpack.c.0.s8 %v125
    %v127 = vlaneseq
    %v128 = vshrl.u32 %v127, 7
    %v129 = vsub.s32 %v126, %v128
    %v130 = vrot.slane %v121, %v129
    %v132 = vunpack.c.l.s4 1983009808
    %v133 = vunpack.c.0.s8 %v132
    %v134 = vlaneseq
    %v135 = vshrl.u32 %v134, 7
    %v136 = vsub.s32 %v133, %v135
    %v137 = vrot.slane %v123, %v136
    %v138 = vcombine.high %v130, %v130
    %v139 = vcombine.high %v137, %v137
    %144 = vrot.lane.b32.xlu0 %v130, 37
    %v145 = vpop.permute.xlu0 %144
    %146 = vrot.lane.b32.xlu0 %v138, 37
    %v147 = vpop.permute.xlu0 %146
    %148 = vrot.lane.b32.xlu0 %v137, 37
    %v149 = vpop.permute.xlu0 %148
    %150 = vrot.lane.b32.xlu0 %v139, 37
    %v151 = vpop.permute.xlu0 %150
    %v152 = vlaneseq
    %v153 = vand.u32 %v152, 127
    %vm154 = vcmp.lt.s32.totalorder %v153, 37
    %v155 = vsel %vm154, %v149, %v151
    %v156 = vsel %vm154, %v147, %v149
    %v157 = vsel %vm154, %v145, %v147
    %v158 = vsel %vm154, %v151, %v145
    %v159 = vld [vmem:[%s1] ss:$8 sm:$0xf]
    %v161 = vlaneseq
    %v162 = vshrl.u32 %v161, 7
    %v163 = vsub.s32 0, %v162
    %v164 = vrot.slane %v159, %v163
    %v165 = vlaneseq
    %v166 = vshrl.u32 %v165, 7
    %v167 = vsub.s32 1, %v166
    %v168 = vrot.slane %v159, %v167
    %v169 = vlaneseq
    %v170 = vshrl.u32 %v169, 7
    %v171 = vsub.s32 2, %v170
    %v172 = vrot.slane %v159, %v171
    %v173 = vlaneseq
    %v174 = vshrl.u32 %v173, 7
    %v175 = vsub.s32 3, %v174
    %v176 = vrot.slane %v159, %v175
    %v181 = vmul.f32 %v158, %v164
    %v182 = vmul.f32 %v157, %v168
    %v183 = vmul.f32 %v156, %v172
    %v184 = vmul.f32 %v155, %v176
    %185 = vrot.lane.b32.xlu0 %v130, 36
    %v186 = vpop.permute.xlu0 %185
    %187 = vrot.lane.b32.xlu0 %v138, 36
    %v188 = vpop.permute.xlu0 %187
    %189 = vrot.lane.b32.xlu0 %v137, 36
    %v190 = vpop.permute.xlu0 %189
    %191 = vrot.lane.b32.xlu0 %v139, 36
    %v192 = vpop.permute.xlu0 %191
    %vm193 = vcmp.lt.s32.totalorder %v153, 36
    %v194 = vsel %vm193, %v190, %v192
    %v195 = vsel %vm193, %v188, %v190
    %v196 = vsel %vm193, %v186, %v188
    %v197 = vsel %vm193, %v192, %v186
    %s198 = scalar_lea.vmem %s1, 1
    %v199 = vld [vmem:[%s198] ss:$8 sm:$0xf]
    %v201 = vlaneseq
    %v202 = vshrl.u32 %v201, 7
    %v203 = vsub.s32 0, %v202
    %v204 = vrot.slane %v199, %v203
    %v205 = vlaneseq
    %v206 = vshrl.u32 %v205, 7
    %v207 = vsub.s32 1, %v206
    %v208 = vrot.slane %v199, %v207
    %v209 = vlaneseq
    %v210 = vshrl.u32 %v209, 7
    %v211 = vsub.s32 2, %v210
    %v212 = vrot.slane %v199, %v211
    %v213 = vlaneseq
    %v214 = vshrl.u32 %v213, 7
    %v215 = vsub.s32 3, %v214
    %v216 = vrot.slane %v199, %v215
    %v221 = vmul.f32 %v197, %v204
    %v222 = vmul.f32 %v196, %v208
    %v223 = vmul.f32 %v195, %v212
    %v224 = vmul.f32 %v194, %v216
    %225 = vrot.lane.b32.xlu0 %v130, 35
    %v226 = vpop.permute.xlu0 %225
    %227 = vrot.lane.b32.xlu0 %v138, 35
    %v228 = vpop.permute.xlu0 %227
    %229 = vrot.lane.b32.xlu0 %v137, 35
    %v230 = vpop.permute.xlu0 %229
    %231 = vrot.lane.b32.xlu0 %v139, 35
    %v232 = vpop.permute.xlu0 %231
    %vm233 = vcmp.lt.s32.totalorder %v153, 35
    %v234 = vsel %vm233, %v230, %v232
    %v235 = vsel %vm233, %v228, %v230
    %v236 = vsel %vm233, %v226, %v228
    %v237 = vsel %vm233, %v232, %v226
    %s238 = scalar_lea.vmem %s1, 2
    %v239 = vld [vmem:[%s238] ss:$8 sm:$0xf]
    %v241 = vlaneseq
    %v242 = vshrl.u32 %v241, 7
    %v243 = vsub.s32 0, %v242
    %v244 = vrot.slane %v239, %v243
    %v245 = vlaneseq
    %v246 = vshrl.u32 %v245, 7
    %v247 = vsub.s32 1, %v246
    %v248 = vrot.slane %v239, %v247
    %v249 = vlaneseq
    %v250 = vshrl.u32 %v249, 7
    %v251 = vsub.s32 2, %v250
    %v252 = vrot.slane %v239, %v251
    %v253 = vlaneseq
    %v254 = vshrl.u32 %v253, 7
    %v255 = vsub.s32 3, %v254
    %v256 = vrot.slane %v239, %v255
    %v261 = vmul.f32 %v237, %v244
    %v262 = vmul.f32 %v236, %v248
    %v263 = vmul.f32 %v235, %v252
    %v264 = vmul.f32 %v234, %v256
    %265 = vrot.lane.b32.xlu0 %v130, 33
    %v266 = vpop.permute.xlu0 %265
    %267 = vrot.lane.b32.xlu0 %v138, 33
    %v268 = vpop.permute.xlu0 %267
    %269 = vrot.lane.b32.xlu0 %v137, 33
    %v270 = vpop.permute.xlu0 %269
    %271 = vrot.lane.b32.xlu0 %v139, 33
    %v272 = vpop.permute.xlu0 %271
    %vm273 = vcmp.lt.s32.totalorder %v153, 33
    %v274 = vsel %vm273, %v270, %v272
    %v275 = vsel %vm273, %v268, %v270
    %v276 = vsel %vm273, %v266, %v268
    %v277 = vsel %vm273, %v272, %v266
    %s278 = scalar_lea.vmem %s1, 3
    %v279 = vld [vmem:[%s278] ss:$8 sm:$0xf]
    %v281 = vlaneseq
    %v282 = vshrl.u32 %v281, 7
    %v283 = vsub.s32 0, %v282
    %v284 = vrot.slane %v279, %v283
    %v285 = vlaneseq
    %v286 = vshrl.u32 %v285, 7
    %v287 = vsub.s32 1, %v286
    %v288 = vrot.slane %v279, %v287
    %v289 = vlaneseq
    %v290 = vshrl.u32 %v289, 7
    %v291 = vsub.s32 2, %v290
    %v292 = vrot.slane %v279, %v291
    %v293 = vlaneseq
    %v294 = vshrl.u32 %v293, 7
    %v295 = vsub.s32 3, %v294
    %v296 = vrot.slane %v279, %v295
    %v301 = vmul.f32 %v277, %v284
    %v302 = vmul.f32 %v276, %v288
    %v303 = vmul.f32 %v275, %v292
    %v304 = vmul.f32 %v274, %v296
    %305 = vrot.lane.b32.xlu0 %v130, 32
    %v306 = vpop.permute.xlu0 %305
    %307 = vrot.lane.b32.xlu0 %v138, 32
    %v308 = vpop.permute.xlu0 %307
    %309 = vrot.lane.b32.xlu0 %v137, 32
    %v310 = vpop.permute.xlu0 %309
    %311 = vrot.lane.b32.xlu0 %v139, 32
    %v312 = vpop.permute.xlu0 %311
    %vm313 = vcmp.lt.s32.totalorder %v153, 32
    %v314 = vsel %vm313, %v310, %v312
    %v315 = vsel %vm313, %v308, %v310
    %v316 = vsel %vm313, %v306, %v308
    %v317 = vsel %vm313, %v312, %v306
    %s318 = scalar_lea.vmem %s1, 4
    %v319 = vld [vmem:[%s318] ss:$8 sm:$0xf]
    %v321 = vlaneseq
    %v322 = vshrl.u32 %v321, 7
    %v323 = vsub.s32 0, %v322
    %v324 = vrot.slane %v319, %v323
    %v325 = vlaneseq
    %v326 = vshrl.u32 %v325, 7
    %v327 = vsub.s32 1, %v326
    %v328 = vrot.slane %v319, %v327
    %v329 = vlaneseq
    %v330 = vshrl.u32 %v329, 7
    %v331 = vsub.s32 2, %v330
    %v332 = vrot.slane %v319, %v331
    %v333 = vlaneseq
    %v334 = vshrl.u32 %v333, 7
    %v335 = vsub.s32 3, %v334
    %v336 = vrot.slane %v319, %v335
    %v341 = vmul.f32 %v317, %v324
    %v342 = vmul.f32 %v316, %v328
    %v343 = vmul.f32 %v315, %v332
    %v344 = vmul.f32 %v314, %v336
    %345 = vrot.lane.b32.xlu0 %v130, 31
    %v346 = vpop.permute.xlu0 %345
    %347 = vrot.lane.b32.xlu0 %v138, 31
    %v348 = vpop.permute.xlu0 %347
    %349 = vrot.lane.b32.xlu0 %v137, 31
    %v350 = vpop.permute.xlu0 %349
    %351 = vrot.lane.b32.xlu0 %v139, 31
    %v352 = vpop.permute.xlu0 %351
    %vm353 = vcmp.lt.s32.totalorder %v153, 31
    %v354 = vsel %vm353, %v350, %v352
    %v355 = vsel %vm353, %v348, %v350
    %v356 = vsel %vm353, %v346, %v348
    %v357 = vsel %vm353, %v352, %v346
    %s358 = scalar_lea.vmem %s1, 5
    %v359 = vld [vmem:[%s358] ss:$8 sm:$0xf]
    %v361 = vlaneseq
    %v362 = vshrl.u32 %v361, 7
    %v363 = vsub.s32 0, %v362
    %v364 = vrot.slane %v359, %v363
    %v365 = vlaneseq
    %v366 = vshrl.u32 %v365, 7
    %v367 = vsub.s32 1, %v366
    %v368 = vrot.slane %v359, %v367
    %v369 = vlaneseq
    %v370 = vshrl.u32 %v369, 7
    %v371 = vsub.s32 2, %v370
    %v372 = vrot.slane %v359, %v371
    %v373 = vlaneseq
    %v374 = vshrl.u32 %v373, 7
    %v375 = vsub.s32 3, %v374
    %v376 = vrot.slane %v359, %v375
    %v381 = vmul.f32 %v357, %v364
    %v382 = vmul.f32 %v356, %v368
    %v383 = vmul.f32 %v355, %v372
    %v384 = vmul.f32 %v354, %v376
    %385 = vrot.lane.b32.xlu0 %v130, 29
    %v386 = vpop.permute.xlu0 %385
    %387 = vrot.lane.b32.xlu0 %v138, 29
    %v388 = vpop.permute.xlu0 %387
    %389 = vrot.lane.b32.xlu0 %v137, 29
    %v390 = vpop.permute.xlu0 %389
    %391 = vrot.lane.b32.xlu0 %v139, 29
    %v392 = vpop.permute.xlu0 %391
    %vm393 = vcmp.lt.s32.totalorder %v153, 29
    %v394 = vsel %vm393, %v390, %v392
    %v395 = vsel %vm393, %v388, %v390
    %v396 = vsel %vm393, %v386, %v388
    %v397 = vsel %vm393, %v392, %v386
    %s398 = scalar_lea.vmem %s1, 6
    %v399 = vld [vmem:[%s398] ss:$8 sm:$0xf]
    %v401 = vlaneseq
    %v402 = vshrl.u32 %v401, 7
    %v403 = vsub.s32 0, %v402
    %v404 = vrot.slane %v399, %v403
    %v405 = vlaneseq
    %v406 = vshrl.u32 %v405, 7
    %v407 = vsub.s32 1, %v406
    %v408 = vrot.slane %v399, %v407
    %v409 = vlaneseq
    %v410 = vshrl.u32 %v409, 7
    %v411 = vsub.s32 2, %v410
    %v412 = vrot.slane %v399, %v411
    %v413 = vlaneseq
    %v414 = vshrl.u32 %v413, 7
    %v415 = vsub.s32 3, %v414
    %v416 = vrot.slane %v399, %v415
    %v421 = vmul.f32 %v397, %v404
    %v422 = vmul.f32 %v396, %v408
    %v423 = vmul.f32 %v395, %v412
    %v424 = vmul.f32 %v394, %v416
    %425 = vrot.lane.b32.xlu0 %v130, 28
    %v426 = vpop.permute.xlu0 %425
    %427 = vrot.lane.b32.xlu0 %v138, 28
    %v428 = vpop.permute.xlu0 %427
    %429 = vrot.lane.b32.xlu0 %v137, 28
    %v430 = vpop.permute.xlu0 %429
    %431 = vrot.lane.b32.xlu0 %v139, 28
    %v432 = vpop.permute.xlu0 %431
    %vm433 = vcmp.lt.s32.totalorder %v153, 28
    %v434 = vsel %vm433, %v430, %v432
    %v435 = vsel %vm433, %v428, %v430
    %v436 = vsel %vm433, %v426, %v428
    %v437 = vsel %vm433, %v432, %v426
    %s438 = scalar_lea.vmem %s1, 7
    %v439 = vld [vmem:[%s438] ss:$8 sm:$0xf]
    %v441 = vlaneseq
    %v442 = vshrl.u32 %v441, 7
    %v443 = vsub.s32 0, %v442
    %v444 = vrot.slane %v439, %v443
    %v445 = vlaneseq
    %v446 = vshrl.u32 %v445, 7
    %v447 = vsub.s32 1, %v446
    %v448 = vrot.slane %v439, %v447
    %v449 = vlaneseq
    %v450 = vshrl.u32 %v449, 7
    %v451 = vsub.s32 2, %v450
    %v452 = vrot.slane %v439, %v451
    %v453 = vlaneseq
    %v454 = vshrl.u32 %v453, 7
    %v455 = vsub.s32 3, %v454
    %v456 = vrot.slane %v439, %v455
    %v461 = vmul.f32 %v437, %v444
    %v462 = vmul.f32 %v436, %v448
    %v463 = vmul.f32 %v435, %v452
    %v464 = vmul.f32 %v434, %v456
    %465 = vrot.lane.b32.xlu0 %v130, 27
    %v466 = vpop.permute.xlu0 %465
    %467 = vrot.lane.b32.xlu0 %v138, 27
    %v468 = vpop.permute.xlu0 %467
    %469 = vrot.lane.b32.xlu0 %v137, 27
    %v470 = vpop.permute.xlu0 %469
    %471 = vrot.lane.b32.xlu0 %v139, 27
    %v472 = vpop.permute.xlu0 %471
    %vm473 = vcmp.lt.s32.totalorder %v153, 27
    %v474 = vsel %vm473, %v470, %v472
    %v475 = vsel %vm473, %v468, %v470
    %v476 = vsel %vm473, %v466, %v468
    %v477 = vsel %vm473, %v472, %v466
    %s478 = scalar_lea.vmem %s1, 32
    %v479 = vld [vmem:[%s478] ss:$8 sm:$0xf]
    %v481 = vlaneseq
    %v482 = vshrl.u32 %v481, 7
    %v483 = vsub.s32 0, %v482
    %v484 = vrot.slane %v479, %v483
    %v485 = vlaneseq
    %v486 = vshrl.u32 %v485, 7
    %v487 = vsub.s32 1, %v486
    %v488 = vrot.slane %v479, %v487
    %v489 = vlaneseq
    %v490 = vshrl.u32 %v489, 7
    %v491 = vsub.s32 2, %v490
    %v492 = vrot.slane %v479, %v491
    %v493 = vlaneseq
    %v494 = vshrl.u32 %v493, 7
    %v495 = vsub.s32 3, %v494
    %v496 = vrot.slane %v479, %v495
    %v501 = vmul.f32 %v477, %v484
    %v502 = vmul.f32 %v476, %v488
    %v503 = vmul.f32 %v475, %v492
    %v504 = vmul.f32 %v474, %v496
    %505 = vrot.lane.b32.xlu0 %v130, 5
    %v506 = vpop.permute.xlu0 %505
    %507 = vrot.lane.b32.xlu0 %v138, 5
    %v508 = vpop.permute.xlu0 %507
    %509 = vrot.lane.b32.xlu0 %v137, 5
    %v510 = vpop.permute.xlu0 %509
    %511 = vrot.lane.b32.xlu0 %v139, 5
    %v512 = vpop.permute.xlu0 %511
    %vm513 = vcmp.lt.s32.totalorder %v153, 5
    %v514 = vsel %vm513, %v510, %v512
    %v515 = vsel %vm513, %v508, %v510
    %v516 = vsel %vm513, %v506, %v508
    %v517 = vsel %vm513, %v512, %v506
    %s518 = scalar_lea.vmem %s1, 33
    %v519 = vld [vmem:[%s518] ss:$8 sm:$0xf]
    %v521 = vlaneseq
    %v522 = vshrl.u32 %v521, 7
    %v523 = vsub.s32 0, %v522
    %v524 = vrot.slane %v519, %v523
    %v525 = vlaneseq
    %v526 = vshrl.u32 %v525, 7
    %v527 = vsub.s32 1, %v526
    %v528 = vrot.slane %v519, %v527
    %v529 = vlaneseq
    %v530 = vshrl.u32 %v529, 7
    %v531 = vsub.s32 2, %v530
    %v532 = vrot.slane %v519, %v531
    %v533 = vlaneseq
    %v534 = vshrl.u32 %v533, 7
    %v535 = vsub.s32 3, %v534
    %v536 = vrot.slane %v519, %v535
    %v541 = vmul.f32 %v517, %v524
    %v542 = vmul.f32 %v516, %v528
    %v543 = vmul.f32 %v515, %v532
    %v544 = vmul.f32 %v514, %v536
    %545 = vrot.lane.b32.xlu0 %v130, 4
    %v546 = vpop.permute.xlu0 %545
    %547 = vrot.lane.b32.xlu0 %v138, 4
    %v548 = vpop.permute.xlu0 %547
    %549 = vrot.lane.b32.xlu0 %v137, 4
    %v550 = vpop.permute.xlu0 %549
    %551 = vrot.lane.b32.xlu0 %v139, 4
    %v552 = vpop.permute.xlu0 %551
    %vm553 = vcmp.lt.s32.totalorder %v153, 4
    %v554 = vsel %vm553, %v550, %v552
    %v555 = vsel %vm553, %v548, %v550
    %v556 = vsel %vm553, %v546, %v548
    %v557 = vsel %vm553, %v552, %v546
    %s558 = scalar_lea.vmem %s1, 34
    %v559 = vld [vmem:[%s558] ss:$8 sm:$0xf]
    %v561 = vlaneseq
    %v562 = vshrl.u32 %v561, 7
    %v563 = vsub.s32 0, %v562
    %v564 = vrot.slane %v559, %v563
    %v565 = vlaneseq
    %v566 = vshrl.u32 %v565, 7
    %v567 = vsub.s32 1, %v566
    %v568 = vrot.slane %v559, %v567
    %v569 = vlaneseq
    %v570 = vshrl.u32 %v569, 7
    %v571 = vsub.s32 2, %v570
    %v572 = vrot.slane %v559, %v571
    %v573 = vlaneseq
    %v574 = vshrl.u32 %v573, 7
    %v575 = vsub.s32 3, %v574
    %v576 = vrot.slane %v559, %v575
    %v581 = vmul.f32 %v557, %v564
    %v582 = vmul.f32 %v556, %v568
    %v583 = vmul.f32 %v555, %v572
    %v584 = vmul.f32 %v554, %v576
    %585 = vrot.lane.b32.xlu0 %v130, 3
    %v586 = vpop.permute.xlu0 %585
    %587 = vrot.lane.b32.xlu0 %v138, 3
    %v588 = vpop.permute.xlu0 %587
    %589 = vrot.lane.b32.xlu0 %v137, 3
    %v590 = vpop.permute.xlu0 %589
    %591 = vrot.lane.b32.xlu0 %v139, 3
    %v592 = vpop.permute.xlu0 %591
    %vm593 = vcmp.lt.s32.totalorder %v153, 3
    %v594 = vsel %vm593, %v590, %v592
    %v595 = vsel %vm593, %v588, %v590
    %v596 = vsel %vm593, %v586, %v588
    %v597 = vsel %vm593, %v592, %v586
    %s598 = scalar_lea.vmem %s1, 35
    %v599 = vld [vmem:[%s598] ss:$8 sm:$0xf]
    %v601 = vlaneseq
    %v602 = vshrl.u32 %v601, 7
    %v603 = vsub.s32 0, %v602
    %v604 = vrot.slane %v599, %v603
    %v605 = vlaneseq
    %v606 = vshrl.u32 %v605, 7
    %v607 = vsub.s32 1, %v606
    %v608 = vrot.slane %v599, %v607
    %v609 = vlaneseq
    %v610 = vshrl.u32 %v609, 7
    %v611 = vsub.s32 2, %v610
    %v612 = vrot.slane %v599, %v611
    %v613 = vlaneseq
    %v614 = vshrl.u32 %v613, 7
    %v615 = vsub.s32 3, %v614
    %v616 = vrot.slane %v599, %v615
    %v621 = vmul.f32 %v597, %v604
    %v622 = vmul.f32 %v596, %v608
    %v623 = vmul.f32 %v595, %v612
    %v624 = vmul.f32 %v594, %v616
    %625 = vrot.lane.b32.xlu0 %v130, 1
    %v626 = vpop.permute.xlu0 %625
    %627 = vrot.lane.b32.xlu0 %v138, 1
    %v628 = vpop.permute.xlu0 %627
    %629 = vrot.lane.b32.xlu0 %v137, 1
    %v630 = vpop.permute.xlu0 %629
    %631 = vrot.lane.b32.xlu0 %v139, 1
    %v632 = vpop.permute.xlu0 %631
    %vm633 = vcmp.lt.s32.totalorder %v153, 1
    %v634 = vsel %vm633, %v630, %v632
    %v635 = vsel %vm633, %v628, %v630
    %v636 = vsel %vm633, %v626, %v628
    %v637 = vsel %vm633, %v632, %v626
    %s638 = scalar_lea.vmem %s1, 36
    %v639 = vld [vmem:[%s638] ss:$8 sm:$0xf]
    %v641 = vlaneseq
    %v642 = vshrl.u32 %v641, 7
    %v643 = vsub.s32 0, %v642
    %v644 = vrot.slane %v639, %v643
    %v645 = vlaneseq
    %v646 = vshrl.u32 %v645, 7
    %v647 = vsub.s32 1, %v646
    %v648 = vrot.slane %v639, %v647
    %v649 = vlaneseq
    %v650 = vshrl.u32 %v649, 7
    %v651 = vsub.s32 2, %v650
    %v652 = vrot.slane %v639, %v651
    %v653 = vlaneseq
    %v654 = vshrl.u32 %v653, 7
    %v655 = vsub.s32 3, %v654
    %v656 = vrot.slane %v639, %v655
    %v661 = vmul.f32 %v637, %v644
    %v662 = vmul.f32 %v636, %v648
    %v663 = vmul.f32 %v635, %v652
    %v664 = vmul.f32 %v634, %v656
    %s665 = scalar_lea.vmem %s1, 37
    %v666 = vld [vmem:[%s665] ss:$8 sm:$0xf]
    %v668 = vlaneseq
    %v669 = vshrl.u32 %v668, 7
    %v670 = vsub.s32 0, %v669
    %v671 = vrot.slane %v666, %v670
    %v672 = vlaneseq
    %v673 = vshrl.u32 %v672, 7
    %v674 = vsub.s32 1, %v673
    %v675 = vrot.slane %v666, %v674
    %v676 = vlaneseq
    %v677 = vshrl.u32 %v676, 7
    %v678 = vsub.s32 2, %v677
    %v679 = vrot.slane %v666, %v678
    %v680 = vlaneseq
    %v681 = vshrl.u32 %v680, 7
    %v682 = vsub.s32 3, %v681
    %v683 = vrot.slane %v666, %v682
    %v688 = vcombine.low %v671, %v675
    %v689 = vcombine.low %v679, %v683
    %v691 = vunpack.c.l.s4 1983009808
    %v692 = vunpack.c.0.s8 %v691
    %v693 = vlaneseq
    %v694 = vshrl.u32 %v693, 7
    %v695 = vsub.s32 %v692, %v694
    %v696 = vrot.slane %v688, %v695
    %v698 = vunpack.c.l.s4 1983009808
    %v699 = vunpack.c.0.s8 %v698
    %v700 = vlaneseq
    %v701 = vshrl.u32 %v700, 7
    %v702 = vsub.s32 %v699, %v701
    %v703 = vrot.slane %v689, %v702
    %v704 = vcombine.low %v696, %v703
    %v706 = vmul.f32 %v121, %v704
    %707 = vrot.lane.b32.xlu0 %v130, 127
    %v708 = vpop.permute.xlu0 %707
    %709 = vrot.lane.b32.xlu0 %v138, 127
    %v710 = vpop.permute.xlu0 %709
    %711 = vrot.lane.b32.xlu0 %v137, 127
    %v712 = vpop.permute.xlu0 %711
    %713 = vrot.lane.b32.xlu0 %v139, 127
    %v714 = vpop.permute.xlu0 %713
    %vm715 = vcmp.lt.s32.totalorder %v153, 127
    %v716 = vsel %vm715, %v712, %v714
    %v717 = vsel %vm715, %v710, %v712
    %v718 = vsel %vm715, %v708, %v710
    %v719 = vsel %vm715, %v714, %v708
    %s720 = scalar_lea.vmem %s1, 38
    %v721 = vld [vmem:[%s720] ss:$8 sm:$0xf]
    %v723 = vlaneseq
    %v724 = vshrl.u32 %v723, 7
    %v725 = vsub.s32 0, %v724
    %v726 = vrot.slane %v721, %v725
    %v727 = vlaneseq
    %v728 = vshrl.u32 %v727, 7
    %v729 = vsub.s32 1, %v728
    %v730 = vrot.slane %v721, %v729
    %v731 = vlaneseq
    %v732 = vshrl.u32 %v731, 7
    %v733 = vsub.s32 2, %v732
    %v734 = vrot.slane %v721, %v733
    %v735 = vlaneseq
    %v736 = vshrl.u32 %v735, 7
    %v737 = vsub.s32 3, %v736
    %v738 = vrot.slane %v721, %v737
    %v743 = vmul.f32 %v718, %v726
    %v744 = vmul.f32 %v717, %v730
    %v745 = vmul.f32 %v716, %v734
    %v746 = vmul.f32 %v719, %v738
    %747 = vrot.lane.b32.xlu0 %v130, 125
    %v748 = vpop.permute.xlu0 %747
    %749 = vrot.lane.b32.xlu0 %v138, 125
    %v750 = vpop.permute.xlu0 %749
    %751 = vrot.lane.b32.xlu0 %v137, 125
    %v752 = vpop.permute.xlu0 %751
    %753 = vrot.lane.b32.xlu0 %v139, 125
    %v754 = vpop.permute.xlu0 %753
    %vm755 = vcmp.lt.s32.totalorder %v153, 125
    %v756 = vsel %vm755, %v752, %v754
    %v757 = vsel %vm755, %v750, %v752
    %v758 = vsel %vm755, %v748, %v750
    %v759 = vsel %vm755, %v754, %v748
    %s760 = scalar_lea.vmem %s1, 39
    %v761 = vld [vmem:[%s760] ss:$8 sm:$0xf]
    %v763 = vlaneseq
    %v764 = vshrl.u32 %v763, 7
    %v765 = vsub.s32 0, %v764
    %v766 = vrot.slane %v761, %v765
    %v767 = vlaneseq
    %v768 = vshrl.u32 %v767, 7
    %v769 = vsub.s32 1, %v768
    %v770 = vrot.slane %v761, %v769
    %v771 = vlaneseq
    %v772 = vshrl.u32 %v771, 7
    %v773 = vsub.s32 2, %v772
    %v774 = vrot.slane %v761, %v773
    %v775 = vlaneseq
    %v776 = vshrl.u32 %v775, 7
    %v777 = vsub.s32 3, %v776
    %v778 = vrot.slane %v761, %v777
    %v783 = vmul.f32 %v758, %v766
    %v784 = vmul.f32 %v757, %v770
    %v785 = vmul.f32 %v756, %v774
    %v786 = vmul.f32 %v759, %v778
    %787 = vrot.lane.b32.xlu0 %v130, 124
    %v788 = vpop.permute.xlu0 %787
    %789 = vrot.lane.b32.xlu0 %v138, 124
    %v790 = vpop.permute.xlu0 %789
    %791 = vrot.lane.b32.xlu0 %v137, 124
    %v792 = vpop.permute.xlu0 %791
    %793 = vrot.lane.b32.xlu0 %v139, 124
    %v794 = vpop.permute.xlu0 %793
    %vm795 = vcmp.lt.s32.totalorder %v153, 124
    %v796 = vsel %vm795, %v792, %v794
    %v797 = vsel %vm795, %v790, %v792
    %v798 = vsel %vm795, %v788, %v790
    %v799 = vsel %vm795, %v794, %v788
    %s800 = scalar_lea.vmem %s1, 64
    %v801 = vld [vmem:[%s800] ss:$8 sm:$0xf]
    %v803 = vlaneseq
    %v804 = vshrl.u32 %v803, 7
    %v805 = vsub.s32 0, %v804
    %v806 = vrot.slane %v801, %v805
    %v807 = vlaneseq
    %v808 = vshrl.u32 %v807, 7
    %v809 = vsub.s32 1, %v808
    %v810 = vrot.slane %v801, %v809
    %v811 = vlaneseq
    %v812 = vshrl.u32 %v811, 7
    %v813 = vsub.s32 2, %v812
    %v814 = vrot.slane %v801, %v813
    %v815 = vlaneseq
    %v816 = vshrl.u32 %v815, 7
    %v817 = vsub.s32 3, %v816
    %v818 = vrot.slane %v801, %v817
    %v823 = vmul.f32 %v798, %v806
    %v824 = vmul.f32 %v797, %v810
    %v825 = vmul.f32 %v796, %v814
    %v826 = vmul.f32 %v799, %v818
    %827 = vrot.lane.b32.xlu0 %v130, 123
    %v828 = vpop.permute.xlu0 %827
    %829 = vrot.lane.b32.xlu0 %v138, 123
    %v830 = vpop.permute.xlu0 %829
    %831 = vrot.lane.b32.xlu0 %v137, 123
    %v832 = vpop.permute.xlu0 %831
    %833 = vrot.lane.b32.xlu0 %v139, 123
    %v834 = vpop.permute.xlu0 %833
    %vm835 = vcmp.lt.s32.totalorder %v153, 123
    %v836 = vsel %vm835, %v832, %v834
    %v837 = vsel %vm835, %v830, %v832
    %v838 = vsel %vm835, %v828, %v830
    %v839 = vsel %vm835, %v834, %v828
    %s840 = scalar_lea.vmem %s1, 65
    %v841 = vld [vmem:[%s840] ss:$8 sm:$0xf]
    %v843 = vlaneseq
    %v844 = vshrl.u32 %v843, 7
    %v845 = vsub.s32 0, %v844
    %v846 = vrot.slane %v841, %v845
    %v847 = vlaneseq
    %v848 = vshrl.u32 %v847, 7
    %v849 = vsub.s32 1, %v848
    %v850 = vrot.slane %v841, %v849
    %v851 = vlaneseq
    %v852 = vshrl.u32 %v851, 7
    %v853 = vsub.s32 2, %v852
    %v854 = vrot.slane %v841, %v853
    %v855 = vlaneseq
    %v856 = vshrl.u32 %v855, 7
    %v857 = vsub.s32 3, %v856
    %v858 = vrot.slane %v841, %v857
    %v863 = vmul.f32 %v838, %v846
    %v864 = vmul.f32 %v837, %v850
    %v865 = vmul.f32 %v836, %v854
    %v866 = vmul.f32 %v839, %v858
    %867 = vrot.lane.b32.xlu0 %v130, 101
    %v868 = vpop.permute.xlu0 %867
    %869 = vrot.lane.b32.xlu0 %v138, 101
    %v870 = vpop.permute.xlu0 %869
    %871 = vrot.lane.b32.xlu0 %v137, 101
    %v872 = vpop.permute.xlu0 %871
    %873 = vrot.lane.b32.xlu0 %v139, 101
    %v874 = vpop.permute.xlu0 %873
    %vm875 = vcmp.lt.s32.totalorder %v153, 101
    %v876 = vsel %vm875, %v872, %v874
    %v877 = vsel %vm875, %v870, %v872
    %v878 = vsel %vm875, %v868, %v870
    %v879 = vsel %vm875, %v874, %v868
    %s880 = scalar_lea.vmem %s1, 66
    %v881 = vld [vmem:[%s880] ss:$8 sm:$0xf]
    %v883 = vlaneseq
    %v884 = vshrl.u32 %v883, 7
    %v885 = vsub.s32 0, %v884
    %v886 = vrot.slane %v881, %v885
    %v887 = vlaneseq
    %v888 = vshrl.u32 %v887, 7
    %v889 = vsub.s32 1, %v888
    %v890 = vrot.slane %v881, %v889
    %v891 = vlaneseq
    %v892 = vshrl.u32 %v891, 7
    %v893 = vsub.s32 2, %v892
    %v894 = vrot.slane %v881, %v893
    %v895 = vlaneseq
    %v896 = vshrl.u32 %v895, 7
    %v897 = vsub.s32 3, %v896
    %v898 = vrot.slane %v881, %v897
    %v903 = vmul.f32 %v878, %v886
    %v904 = vmul.f32 %v877, %v890
    %v905 = vmul.f32 %v876, %v894
    %v906 = vmul.f32 %v879, %v898
    %907 = vrot.lane.b32.xlu0 %v130, 100
    %v908 = vpop.permute.xlu0 %907
    %909 = vrot.lane.b32.xlu0 %v138, 100
    %v910 = vpop.permute.xlu0 %909
    %911 = vrot.lane.b32.xlu0 %v137, 100
    %v912 = vpop.permute.xlu0 %911
    %913 = vrot.lane.b32.xlu0 %v139, 100
    %v914 = vpop.permute.xlu0 %913
    %vm915 = vcmp.lt.s32.totalorder %v153, 100
    %v916 = vsel %vm915, %v912, %v914
    %v917 = vsel %vm915, %v910, %v912
    %v918 = vsel %vm915, %v908, %v910
    %v919 = vsel %vm915, %v914, %v908
    %s920 = scalar_lea.vmem %s1, 67
    %v921 = vld [vmem:[%s920] ss:$8 sm:$0xf]
    %v923 = vlaneseq
    %v924 = vshrl.u32 %v923, 7
    %v925 = vsub.s32 0, %v924
    %v926 = vrot.slane %v921, %v925
    %v927 = vlaneseq
    %v928 = vshrl.u32 %v927, 7
    %v929 = vsub.s32 1, %v928
    %v930 = vrot.slane %v921, %v929
    %v931 = vlaneseq
    %v932 = vshrl.u32 %v931, 7
    %v933 = vsub.s32 2, %v932
    %v934 = vrot.slane %v921, %v933
    %v935 = vlaneseq
    %v936 = vshrl.u32 %v935, 7
    %v937 = vsub.s32 3, %v936
    %v938 = vrot.slane %v921, %v937
    %v943 = vmul.f32 %v918, %v926
    %v944 = vmul.f32 %v917, %v930
    %v945 = vmul.f32 %v916, %v934
    %v946 = vmul.f32 %v919, %v938
    %947 = vrot.lane.b32.xlu0 %v130, 99
    %v948 = vpop.permute.xlu0 %947
    %949 = vrot.lane.b32.xlu0 %v138, 99
    %v950 = vpop.permute.xlu0 %949
    %951 = vrot.lane.b32.xlu0 %v137, 99
    %v952 = vpop.permute.xlu0 %951
    %953 = vrot.lane.b32.xlu0 %v139, 99
    %v954 = vpop.permute.xlu0 %953
    %vm955 = vcmp.lt.s32.totalorder %v153, 99
    %v956 = vsel %vm955, %v952, %v954
    %v957 = vsel %vm955, %v950, %v952
    %v958 = vsel %vm955, %v948, %v950
    %v959 = vsel %vm955, %v954, %v948
    %s960 = scalar_lea.vmem %s1, 68
    %v961 = vld [vmem:[%s960] ss:$8 sm:$0xf]
    %v963 = vlaneseq
    %v964 = vshrl.u32 %v963, 7
    %v965 = vsub.s32 0, %v964
    %v966 = vrot.slane %v961, %v965
    %v967 = vlaneseq
    %v968 = vshrl.u32 %v967, 7
    %v969 = vsub.s32 1, %v968
    %v970 = vrot.slane %v961, %v969
    %v971 = vlaneseq
    %v972 = vshrl.u32 %v971, 7
    %v973 = vsub.s32 2, %v972
    %v974 = vrot.slane %v961, %v973
    %v975 = vlaneseq
    %v976 = vshrl.u32 %v975, 7
    %v977 = vsub.s32 3, %v976
    %v978 = vrot.slane %v961, %v977
    %v983 = vmul.f32 %v958, %v966
    %v984 = vmul.f32 %v957, %v970
    %v985 = vmul.f32 %v956, %v974
    %v986 = vmul.f32 %v959, %v978
    %987 = vrot.lane.b32.xlu0 %v130, 97
    %v988 = vpop.permute.xlu0 %987
    %989 = vrot.lane.b32.xlu0 %v138, 97
    %v990 = vpop.permute.xlu0 %989
    %991 = vrot.lane.b32.xlu0 %v137, 97
    %v992 = vpop.permute.xlu0 %991
    %993 = vrot.lane.b32.xlu0 %v139, 97
    %v994 = vpop.permute.xlu0 %993
    %vm995 = vcmp.lt.s32.totalorder %v153, 97
    %v996 = vsel %vm995, %v992, %v994
    %v997 = vsel %vm995, %v990, %v992
    %v998 = vsel %vm995, %v988, %v990
    %v999 = vsel %vm995, %v994, %v988
    %s1000 = scalar_lea.vmem %s1, 69
    %v1001 = vld [vmem:[%s1000] ss:$8 sm:$0xf]
    %v1003 = vlaneseq
    %v1004 = vshrl.u32 %v1003, 7
    %v1005 = vsub.s32 0, %v1004
    %v1006 = vrot.slane %v1001, %v1005
    %v1007 = vlaneseq
    %v1008 = vshrl.u32 %v1007, 7
    %v1009 = vsub.s32 1, %v1008
    %v1010 = vrot.slane %v1001, %v1009
    %v1011 = vlaneseq
    %v1012 = vshrl.u32 %v1011, 7
    %v1013 = vsub.s32 2, %v1012
    %v1014 = vrot.slane %v1001, %v1013
    %v1015 = vlaneseq
    %v1016 = vshrl.u32 %v1015, 7
    %v1017 = vsub.s32 3, %v1016
    %v1018 = vrot.slane %v1001, %v1017
    %v1023 = vmul.f32 %v998, %v1006
    %v1024 = vmul.f32 %v997, %v1010
    %v1025 = vmul.f32 %v996, %v1014
    %v1026 = vmul.f32 %v999, %v1018
    %1027 = vrot.lane.b32.xlu0 %v130, 96
    %v1028 = vpop.permute.xlu0 %1027
    %1029 = vrot.lane.b32.xlu0 %v138, 96
    %v1030 = vpop.permute.xlu0 %1029
    %1031 = vrot.lane.b32.xlu0 %v137, 96
    %v1032 = vpop.permute.xlu0 %1031
    %1033 = vrot.lane.b32.xlu0 %v139, 96
    %v1034 = vpop.permute.xlu0 %1033
    %vm1035 = vcmp.lt.s32.totalorder %v153, 96
    %v1036 = vsel %vm1035, %v1032, %v1034
    %v1037 = vsel %vm1035, %v1030, %v1032
    %v1038 = vsel %vm1035, %v1028, %v1030
    %v1039 = vsel %vm1035, %v1034, %v1028
    %s1040 = scalar_lea.vmem %s1, 70
    %v1041 = vld [vmem:[%s1040] ss:$8 sm:$0xf]
    %v1043 = vlaneseq
    %v1044 = vshrl.u32 %v1043, 7
    %v1045 = vsub.s32 0, %v1044
    %v1046 = vrot.slane %v1041, %v1045
    %v1047 = vlaneseq
    %v1048 = vshrl.u32 %v1047, 7
    %v1049 = vsub.s32 1, %v1048
    %v1050 = vrot.slane %v1041, %v1049
    %v1051 = vlaneseq
    %v1052 = vshrl.u32 %v1051, 7
    %v1053 = vsub.s32 2, %v1052
    %v1054 = vrot.slane %v1041, %v1053
    %v1055 = vlaneseq
    %v1056 = vshrl.u32 %v1055, 7
    %v1057 = vsub.s32 3, %v1056
    %v1058 = vrot.slane %v1041, %v1057
    %v1063 = vmul.f32 %v1038, %v1046
    %v1064 = vmul.f32 %v1037, %v1050
    %v1065 = vmul.f32 %v1036, %v1054
    %v1066 = vmul.f32 %v1039, %v1058
    %1067 = vrot.lane.b32.xlu0 %v130, 95
    %v1068 = vpop.permute.xlu0 %1067
    %1069 = vrot.lane.b32.xlu0 %v138, 95
    %v1070 = vpop.permute.xlu0 %1069
    %1071 = vrot.lane.b32.xlu0 %v137, 95
    %v1072 = vpop.permute.xlu0 %1071
    %1073 = vrot.lane.b32.xlu0 %v139, 95
    %v1074 = vpop.permute.xlu0 %1073
    %vm1075 = vcmp.lt.s32.totalorder %v153, 95
    %v1076 = vsel %vm1075, %v1072, %v1074
    %v1077 = vsel %vm1075, %v1070, %v1072
    %v1078 = vsel %vm1075, %v1068, %v1070
    %v1079 = vsel %vm1075, %v1074, %v1068
    %s1080 = scalar_lea.vmem %s1, 71
    %v1081 = vld [vmem:[%s1080] ss:$8 sm:$0xf]
    %v1083 = vlaneseq
    %v1084 = vshrl.u32 %v1083, 7
    %v1085 = vsub.s32 0, %v1084
    %v1086 = vrot.slane %v1081, %v1085
    %v1087 = vlaneseq
    %v1088 = vshrl.u32 %v1087, 7
    %v1089 = vsub.s32 1, %v1088
    %v1090 = vrot.slane %v1081, %v1089
    %v1091 = vlaneseq
    %v1092 = vshrl.u32 %v1091, 7
    %v1093 = vsub.s32 2, %v1092
    %v1094 = vrot.slane %v1081, %v1093
    %v1095 = vlaneseq
    %v1096 = vshrl.u32 %v1095, 7
    %v1097 = vsub.s32 3, %v1096
    %v1098 = vrot.slane %v1081, %v1097
    %v1103 = vmul.f32 %v1078, %v1086
    %v1104 = vmul.f32 %v1077, %v1090
    %v1105 = vmul.f32 %v1076, %v1094
    %v1106 = vmul.f32 %v1079, %v1098
    %1107 = vrot.lane.b32.xlu0 %v130, 93
    %v1108 = vpop.permute.xlu0 %1107
    %1109 = vrot.lane.b32.xlu0 %v138, 93
    %v1110 = vpop.permute.xlu0 %1109
    %1111 = vrot.lane.b32.xlu0 %v137, 93
    %v1112 = vpop.permute.xlu0 %1111
    %1113 = vrot.lane.b32.xlu0 %v139, 93
    %v1114 = vpop.permute.xlu0 %1113
    %vm1115 = vcmp.lt.s32.totalorder %v153, 93
    %v1116 = vsel %vm1115, %v1112, %v1114
    %v1117 = vsel %vm1115, %v1110, %v1112
    %v1118 = vsel %vm1115, %v1108, %v1110
    %v1119 = vsel %vm1115, %v1114, %v1108
    %s1120 = scalar_lea.vmem %s1, 96
    %v1121 = vld [vmem:[%s1120] ss:$8 sm:$0xf]
    %v1123 = vlaneseq
    %v1124 = vshrl.u32 %v1123, 7
    %v1125 = vsub.s32 0, %v1124
    %v1126 = vrot.slane %v1121, %v1125
    %v1127 = vlaneseq
    %v1128 = vshrl.u32 %v1127, 7
    %v1129 = vsub.s32 1, %v1128
    %v1130 = vrot.slane %v1121, %v1129
    %v1131 = vlaneseq
    %v1132 = vshrl.u32 %v1131, 7
    %v1133 = vsub.s32 2, %v1132
    %v1134 = vrot.slane %v1121, %v1133
    %v1135 = vlaneseq
    %v1136 = vshrl.u32 %v1135, 7
    %v1137 = vsub.s32 3, %v1136
    %v1138 = vrot.slane %v1121, %v1137
    %v1143 = vmul.f32 %v1118, %v1126
    %v1144 = vmul.f32 %v1117, %v1130
    %v1145 = vmul.f32 %v1116, %v1134
    %v1146 = vmul.f32 %v1119, %v1138
    %1147 = vrot.lane.b32.xlu0 %v130, 92
    %v1148 = vpop.permute.xlu0 %1147
    %1149 = vrot.lane.b32.xlu0 %v138, 92
    %v1150 = vpop.permute.xlu0 %1149
    %1151 = vrot.lane.b32.xlu0 %v137, 92
    %v1152 = vpop.permute.xlu0 %1151
    %1153 = vrot.lane.b32.xlu0 %v139, 92
    %v1154 = vpop.permute.xlu0 %1153
    %vm1155 = vcmp.lt.s32.totalorder %v153, 92
    %v1156 = vsel %vm1155, %v1152, %v1154
    %v1157 = vsel %vm1155, %v1150, %v1152
    %v1158 = vsel %vm1155, %v1148, %v1150
    %v1159 = vsel %vm1155, %v1154, %v1148
    %s1160 = scalar_lea.vmem %s1, 97
    %v1161 = vld [vmem:[%s1160] ss:$8 sm:$0xf]
    %v1163 = vlaneseq
    %v1164 = vshrl.u32 %v1163, 7
    %v1165 = vsub.s32 0, %v1164
    %v1166 = vrot.slane %v1161, %v1165
    %v1167 = vlaneseq
    %v1168 = vshrl.u32 %v1167, 7
    %v1169 = vsub.s32 1, %v1168
    %v1170 = vrot.slane %v1161, %v1169
    %v1171 = vlaneseq
    %v1172 = vshrl.u32 %v1171, 7
    %v1173 = vsub.s32 2, %v1172
    %v1174 = vrot.slane %v1161, %v1173
    %v1175 = vlaneseq
    %v1176 = vshrl.u32 %v1175, 7
    %v1177 = vsub.s32 3, %v1176
    %v1178 = vrot.slane %v1161, %v1177
    %v1183 = vmul.f32 %v1158, %v1166
    %v1184 = vmul.f32 %v1157, %v1170
    %v1185 = vmul.f32 %v1156, %v1174
    %v1186 = vmul.f32 %v1159, %v1178
    %1187 = vrot.lane.b32.xlu0 %v130, 91
    %v1188 = vpop.permute.xlu0 %1187
    %1189 = vrot.lane.b32.xlu0 %v138, 91
    %v1190 = vpop.permute.xlu0 %1189
    %1191 = vrot.lane.b32.xlu0 %v137, 91
    %v1192 = vpop.permute.xlu0 %1191
    %1193 = vrot.lane.b32.xlu0 %v139, 91
    %v1194 = vpop.permute.xlu0 %1193
    %vm1195 = vcmp.lt.s32.totalorder %v153, 91
    %v1196 = vsel %vm1195, %v1192, %v1194
    %v1197 = vsel %vm1195, %v1190, %v1192
    %v1198 = vsel %vm1195, %v1188, %v1190
    %v1199 = vsel %vm1195, %v1194, %v1188
    %s1200 = scalar_lea.vmem %s1, 98
    %v1201 = vld [vmem:[%s1200] ss:$8 sm:$0xf]
    %v1203 = vlaneseq
    %v1204 = vshrl.u32 %v1203, 7
    %v1205 = vsub.s32 0, %v1204
    %v1206 = vrot.slane %v1201, %v1205
    %v1207 = vlaneseq
    %v1208 = vshrl.u32 %v1207, 7
    %v1209 = vsub.s32 1, %v1208
    %v1210 = vrot.slane %v1201, %v1209
    %v1211 = vlaneseq
    %v1212 = vshrl.u32 %v1211, 7
    %v1213 = vsub.s32 2, %v1212
    %v1214 = vrot.slane %v1201, %v1213
    %v1215 = vlaneseq
    %v1216 = vshrl.u32 %v1215, 7
    %v1217 = vsub.s32 3, %v1216
    %v1218 = vrot.slane %v1201, %v1217
    %v1223 = vmul.f32 %v1198, %v1206
    %v1224 = vmul.f32 %v1197, %v1210
    %v1225 = vmul.f32 %v1196, %v1214
    %v1226 = vmul.f32 %v1199, %v1218
    %v1231 = vrot.slane %v221, 6
    %v1232 = vrot.slane %v222, 6
    %v1233 = vrot.slane %v223, 6
    %v1234 = vrot.slane %v224, 6
    %v1243 = vrot.slane %v261, 4
    %v1244 = vrot.slane %v262, 4
    %v1245 = vrot.slane %v263, 4
    %v1246 = vrot.slane %v264, 4
    %v1255 = vrot.slane %v301, 2
    %v1256 = vrot.slane %v302, 2
    %v1257 = vrot.slane %v303, 2
    %v1258 = vrot.slane %v304, 2
    %v1267 = vrot.slane %v381, 6
    %v1268 = vrot.slane %v382, 6
    %v1269 = vrot.slane %v383, 6
    %v1270 = vrot.slane %v384, 6
    %v1279 = vrot.slane %v421, 4
    %v1280 = vrot.slane %v422, 4
    %v1281 = vrot.slane %v423, 4
    %v1282 = vrot.slane %v424, 4
    %v1291 = vrot.slane %v461, 2
    %v1292 = vrot.slane %v462, 2
    %v1293 = vrot.slane %v463, 2
    %v1294 = vrot.slane %v464, 2
    %v1303 = vrot.slane %v541, 6
    %v1304 = vrot.slane %v542, 6
    %v1305 = vrot.slane %v543, 6
    %v1306 = vrot.slane %v544, 6
    %v1315 = vrot.slane %v581, 4
    %v1316 = vrot.slane %v582, 4
    %v1317 = vrot.slane %v583, 4
    %v1318 = vrot.slane %v584, 4
    %v1327 = vrot.slane %v621, 2
    %v1328 = vrot.slane %v622, 2
    %v1329 = vrot.slane %v623, 2
    %v1330 = vrot.slane %v624, 2
    %v1336 = vcombine.low %v706, %v706
    %v1338 = vunpack.c.l.s4 1983009808
    %v1339 = vunpack.c.0.s8 %v1338
    %v1340 = vlaneseq
    %v1341 = vshrl.u32 %v1340, 7
    %v1342 = vsub.s32 %v1339, %v1341
    %v1343 = vrot.slane %v1336, %v1342
    %v1345 = vunpack.c.l.s4 1983009808
    %v1346 = vunpack.c.0.s8 %v1345
    %v1347 = vlaneseq
    %v1348 = vshrl.u32 %v1347, 7
    %v1349 = vsub.s32 %v1346, %v1348
    %v1350 = vrot.slane %v706, %v1349
    %v1351 = vcombine.high %v1343, %v1343
    %v1352 = vcombine.high %v1350, %v1350
    %v1361 = vrot.slane %v743, 4
    %v1362 = vrot.slane %v744, 4
    %v1363 = vrot.slane %v745, 4
    %v1364 = vrot.slane %v746, 4
    %v1373 = vrot.slane %v783, 2
    %v1374 = vrot.slane %v784, 2
    %v1375 = vrot.slane %v785, 2
    %v1376 = vrot.slane %v786, 2
    %vm1381 = vcmask 1041408
    %v1382 = vsel %vm1381, %v181, %v1231
    %v1383 = vsel %vm1381, %v182, %v1232
    %v1384 = vsel %vm1381, %v183, %v1233
    %v1385 = vsel %vm1381, %v184, %v1234
    %vm1386 = vcmask 1043456
    %v1387 = vsel %vm1386, %v1382, %v1243
    %v1388 = vsel %vm1386, %v1383, %v1244
    %v1389 = vsel %vm1386, %v1384, %v1245
    %v1390 = vsel %vm1386, %v1385, %v1246
    %vm1391 = vcmask 1045504
    %v1392 = vsel %vm1391, %v1387, %v1255
    %v1393 = vsel %vm1391, %v1388, %v1256
    %v1394 = vsel %vm1391, %v1389, %v1257
    %v1395 = vsel %vm1391, %v1390, %v1258
    %v1396 = vsel %vm1381, %v341, %v1267
    %v1397 = vsel %vm1381, %v342, %v1268
    %v1398 = vsel %vm1381, %v343, %v1269
    %v1399 = vsel %vm1381, %v344, %v1270
    %v1400 = vsel %vm1386, %v1396, %v1279
    %v1401 = vsel %vm1386, %v1397, %v1280
    %v1402 = vsel %vm1386, %v1398, %v1281
    %v1403 = vsel %vm1386, %v1399, %v1282
    %v1404 = vsel %vm1391, %v1400, %v1291
    %v1405 = vsel %vm1391, %v1401, %v1292
    %v1406 = vsel %vm1391, %v1402, %v1293
    %v1407 = vsel %vm1391, %v1403, %v1294
    %v1408 = vsel %vm1381, %v501, %v1303
    %v1409 = vsel %vm1381, %v502, %v1304
    %v1410 = vsel %vm1381, %v503, %v1305
    %v1411 = vsel %vm1381, %v504, %v1306
    %v1412 = vsel %vm1386, %v1408, %v1315
    %v1413 = vsel %vm1386, %v1409, %v1316
    %v1414 = vsel %vm1386, %v1410, %v1317
    %v1415 = vsel %vm1386, %v1411, %v1318
    %v1416 = vsel %vm1391, %v1412, %v1327
    %v1417 = vsel %vm1391, %v1413, %v1328
    %v1418 = vsel %vm1391, %v1414, %v1329
    %v1419 = vsel %vm1391, %v1415, %v1330
    %v1420 = vsel %vm1381, %v661, %v1343
    %v1421 = vsel %vm1381, %v662, %v1351
    %v1422 = vsel %vm1381, %v663, %v1350
    %v1423 = vsel %vm1381, %v664, %v1352
    %v1424 = vsel %vm1386, %v1420, %v1361
    %v1425 = vsel %vm1386, %v1421, %v1362
    %v1426 = vsel %vm1386, %v1422, %v1363
    %v1427 = vsel %vm1386, %v1423, %v1364
    %v1428 = vsel %vm1391, %v1424, %v1373
    %v1429 = vsel %vm1391, %v1425, %v1374
    %v1430 = vsel %vm1391, %v1426, %v1375
    %v1431 = vsel %vm1391, %v1427, %v1376
    %v1436 = vrot.slane %v863, 6
    %v1437 = vrot.slane %v864, 6
    %v1438 = vrot.slane %v865, 6
    %v1439 = vrot.slane %v866, 6
    %v1448 = vrot.slane %v903, 4
    %v1449 = vrot.slane %v904, 4
    %v1450 = vrot.slane %v905, 4
    %v1451 = vrot.slane %v906, 4
    %v1460 = vrot.slane %v943, 2
    %v1461 = vrot.slane %v944, 2
    %v1462 = vrot.slane %v945, 2
    %v1463 = vrot.slane %v946, 2
    %v1472 = vrot.slane %v1023, 6
    %v1473 = vrot.slane %v1024, 6
    %v1474 = vrot.slane %v1025, 6
    %v1475 = vrot.slane %v1026, 6
    %v1484 = vrot.slane %v1063, 4
    %v1485 = vrot.slane %v1064, 4
    %v1486 = vrot.slane %v1065, 4
    %v1487 = vrot.slane %v1066, 4
    %v1496 = vrot.slane %v1103, 2
    %v1497 = vrot.slane %v1104, 2
    %v1498 = vrot.slane %v1105, 2
    %v1499 = vrot.slane %v1106, 2
    %v1508 = vrot.slane %v1183, 6
    %v1509 = vrot.slane %v1184, 6
    %v1510 = vrot.slane %v1185, 6
    %v1511 = vrot.slane %v1186, 6
    %v1520 = vrot.slane %v1223, 4
    %v1521 = vrot.slane %v1224, 4
    %v1522 = vrot.slane %v1225, 4
    %v1523 = vrot.slane %v1226, 4
    %v1528 = vsel %vm1381, %v823, %v1436
    %v1529 = vsel %vm1381, %v824, %v1437
    %v1530 = vsel %vm1381, %v825, %v1438
    %v1531 = vsel %vm1381, %v826, %v1439
    %v1532 = vsel %vm1386, %v1528, %v1448
    %v1533 = vsel %vm1386, %v1529, %v1449
    %v1534 = vsel %vm1386, %v1530, %v1450
    %v1535 = vsel %vm1386, %v1531, %v1451
    %v1536 = vsel %vm1391, %v1532, %v1460
    %v1537 = vsel %vm1391, %v1533, %v1461
    %v1538 = vsel %vm1391, %v1534, %v1462
    %v1539 = vsel %vm1391, %v1535, %v1463
    %v1540 = vsel %vm1381, %v983, %v1472
    %v1541 = vsel %vm1381, %v984, %v1473
    %v1542 = vsel %vm1381, %v985, %v1474
    %v1543 = vsel %vm1381, %v986, %v1475
    %v1544 = vsel %vm1386, %v1540, %v1484
    %v1545 = vsel %vm1386, %v1541, %v1485
    %v1546 = vsel %vm1386, %v1542, %v1486
    %v1547 = vsel %vm1386, %v1543, %v1487
    %v1548 = vsel %vm1391, %v1544, %v1496
    %v1549 = vsel %vm1391, %v1545, %v1497
    %v1550 = vsel %vm1391, %v1546, %v1498
    %v1551 = vsel %vm1391, %v1547, %v1499
    %v1552 = vsel %vm1381, %v1143, %v1508
    %v1553 = vsel %vm1381, %v1144, %v1509
    %v1554 = vsel %vm1381, %v1145, %v1510
    %v1555 = vsel %vm1381, %v1146, %v1511
    %v1556 = vsel %vm1386, %v1552, %v1520
    %v1557 = vsel %vm1386, %v1553, %v1521
    %v1558 = vsel %vm1386, %v1554, %v1522
    %v1559 = vsel %vm1386, %v1555, %v1523
    %v1560 = vld [vmem:[#allocation2] sm:$0xf]
    %v1561 = vld [vmem:[#allocation2 + $0x4] sm:$0xf]
    %v1562 = vld [vmem:[#allocation2 + $0x8] sm:$0xf]
    %v1563 = vld [vmem:[#allocation2 + $0xc] sm:$0xf]
    %v1564 = vld [vmem:[#allocation2 + $0x10] sm:$0xf]
    %v1565 = vld [vmem:[#allocation2 + $0x14] sm:$0xf]
    %v1566 = vld [vmem:[#allocation2 + $0x18] sm:$0xf]
    %v1567 = vld [vmem:[#allocation2 + $0x1c] sm:$0xf]
    %v1568 = vld [vmem:[#allocation2 + $0x20] sm:$0xf]
    %v1569 = vld [vmem:[#allocation2 + $0x24] sm:$0xf]
    %v1570 = vld [vmem:[#allocation2 + $0x28] sm:$0xf]
    %v1571 = vld [vmem:[#allocation2 + $0x2c] sm:$0xf]
    %v1572 = vld [vmem:[#allocation2 + $0x30] sm:$0xf]
    %v1573 = vld [vmem:[#allocation2 + $0x34] sm:$0xf]
    %v1574 = vld [vmem:[#allocation2 + $0x38] sm:$0xf]
    %v1575 = vld [vmem:[#allocation2 + $0x3c] sm:$0xf]
    %v1576 = vpack.c.bf16 %v1404, %v1392
    %v1577 = vpack.c.bf16 %v1405, %v1393
    %v1578 = vpack.c.bf16 %v1406, %v1394
    %v1579 = vpack.c.bf16 %v1407, %v1395
    %v1580 = vpack.c.bf16 %v1428, %v1416
    %v1581 = vpack.c.bf16 %v1429, %v1417
    %v1582 = vpack.c.bf16 %v1430, %v1418
    %v1583 = vpack.c.bf16 %v1431, %v1419
    %v1584 = vpack.c.bf16 %v1548, %v1536
    %v1585 = vpack.c.bf16 %v1549, %v1537
    %v1586 = vpack.c.bf16 %v1550, %v1538
    %v1587 = vpack.c.bf16 %v1551, %v1539
    %v1588 = vpack.c.bf16 %v1556, %v1556
    %v1589 = vpack.c.bf16 %v1557, %v1557
    %v1590 = vpack.c.bf16 %v1558, %v1558
    %v1591 = vpack.c.bf16 %v1559, %v1559
    %v1592 = vld [vmem:[#allocation4] sm:$0xff]
    %v1593 = vld [vmem:[#allocation4 + $0x8] sm:$0xff]
    %v1594 = vld [vmem:[#allocation4 + $0x10] sm:$0xff]
    %v1595 = vld [vmem:[#allocation4 + $0x18] sm:$0xff]
    %v1596 = vld [vmem:[#allocation4 + $0x20] sm:$0xff]
    %v1597 = vld [vmem:[#allocation4 + $0x28] sm:$0xff]
    %v1598 = vld [vmem:[#allocation4 + $0x30] sm:$0xff]
    %v1599 = vld [vmem:[#allocation4 + $0x38] sm:$0xff]
    %v1600 = vld [vmem:[#allocation4 + $0x40] sm:$0xff]
    %v1601 = vld [vmem:[#allocation4 + $0x48] sm:$0xff]
    %v1602 = vld [vmem:[#allocation4 + $0x50] sm:$0xff]
    %v1603 = vld [vmem:[#allocation4 + $0x58] sm:$0xff]
    %v1604 = vld [vmem:[#allocation4 + $0x60] sm:$0xff]
    %v1605 = vld [vmem:[#allocation4 + $0x68] sm:$0xff]
    %v1606 = vld [vmem:[#allocation4 + $0x70] sm:$0xff]
    %v1607 = vld [vmem:[#allocation4 + $0x78] sm:$0xff]
    %1609 = vset.pattern.permute.xlu0 0
    %1610 = vperm.xlu0 %1609, %v1592
    %v1611 = vpop.permute.xlu0 %1610
    %1614 = vset.pattern.permute.xlu0 0
    %1615 = vperm.xlu0 %1614, %v1593
    %v1616 = vpop.permute.xlu0 %1615
    %1619 = vset.pattern.permute.xlu0 0
    %1620 = vperm.xlu0 %1619, %v1594
    %v1621 = vpop.permute.xlu0 %1620
    %1624 = vset.pattern.permute.xlu0 0
    %1625 = vperm.xlu0 %1624, %v1595
    %v1626 = vpop.permute.xlu0 %1625
    %1629 = vset.pattern.permute.xlu0 0
    %1630 = vperm.xlu0 %1629, %v1596
    %v1631 = vpop.permute.xlu0 %1630
    %1634 = vset.pattern.permute.xlu0 0
    %1635 = vperm.xlu0 %1634, %v1597
    %v1636 = vpop.permute.xlu0 %1635
    %1639 = vset.pattern.permute.xlu0 0
    %1640 = vperm.xlu0 %1639, %v1598
    %v1641 = vpop.permute.xlu0 %1640
    %1644 = vset.pattern.permute.xlu0 0
    %1645 = vperm.xlu0 %1644, %v1599
    %v1646 = vpop.permute.xlu0 %1645
    %1649 = vset.pattern.permute.xlu0 0
    %1650 = vperm.xlu0 %1649, %v1600
    %v1651 = vpop.permute.xlu0 %1650
    %1654 = vset.pattern.permute.xlu0 0
    %1655 = vperm.xlu0 %1654, %v1601
    %v1656 = vpop.permute.xlu0 %1655
    %1659 = vset.pattern.permute.xlu0 0
    %1660 = vperm.xlu0 %1659, %v1602
    %v1661 = vpop.permute.xlu0 %1660
    %1664 = vset.pattern.permute.xlu0 0
    %1665 = vperm.xlu0 %1664, %v1603
    %v1666 = vpop.permute.xlu0 %1665
    %1669 = vset.pattern.permute.xlu0 0
    %1670 = vperm.xlu0 %1669, %v1604
    %v1671 = vpop.permute.xlu0 %1670
    %1674 = vset.pattern.permute.xlu0 0
    %1675 = vperm.xlu0 %1674, %v1605
    %v1676 = vpop.permute.xlu0 %1675
    %1679 = vset.pattern.permute.xlu0 0
    %1680 = vperm.xlu0 %1679, %v1606
    %v1681 = vpop.permute.xlu0 %1680
    %1684 = vset.pattern.permute.xlu0 0
    %1685 = vperm.xlu0 %1684, %v1607
    %v1686 = vpop.permute.xlu0 %1685
    %v1704 = vunpack.c.l.b16 %v1560
    %v1705 = vunpack.c.l.b16 %v1561
    %v1706 = vunpack.c.l.b16 %v1562
    %v1707 = vunpack.c.l.b16 %v1563
    %v1708 = vunpack.c.l.b16 %v1564
    %v1709 = vunpack.c.l.b16 %v1565
    %v1710 = vunpack.c.l.b16 %v1566
    %v1711 = vunpack.c.l.b16 %v1567
    %v1712 = vunpack.c.l.b16 %v1568
    %v1713 = vunpack.c.l.b16 %v1569
    %v1714 = vunpack.c.l.b16 %v1570
    %v1715 = vunpack.c.l.b16 %v1571
    %v1716 = vunpack.c.l.b16 %v1572
    %v1717 = vunpack.c.l.b16 %v1573
    %v1718 = vunpack.c.l.b16 %v1574
    %v1719 = vunpack.c.l.b16 %v1575
    %v1720 = vpack.c.b16 %v1705, %v1704
    %v1721 = vpack.c.b16 %v1707, %v1706
    %v1722 = vpack.c.b16 %v1709, %v1708
    %v1723 = vpack.c.b16 %v1711, %v1710
    %v1724 = vpack.c.b16 %v1713, %v1712
    %v1725 = vpack.c.b16 %v1715, %v1714
    %v1726 = vpack.c.b16 %v1717, %v1716
    %v1727 = vpack.c.b16 %v1719, %v1718
    %vm1728 = vcmask 441344
    %v1730 = vsel %vm1728, %v1720, 0
    %v1733 = vsel %vm1728, %v1721, 0
    %v1736 = vsel %vm1728, %v1722, 0
    %v1739 = vsel %vm1728, %v1723, 0
    %v1742 = vsel %vm1728, %v1724, 0
    %v1745 = vsel %vm1728, %v1725, 0
    %v1748 = vsel %vm1728, %v1726, 0
    %v1751 = vsel %vm1728, %v1727, 0
    %vm1753 = vcmask 1042432
    %v1755 = vsel %vm1753, %v1588, 0
    %v1758 = vsel %vm1753, %v1589, 0
    %v1761 = vsel %vm1753, %v1590, 0
    %v1764 = vsel %vm1753, %v1591, 0
    %1766 = vmatprep.subr.bf16.mxu0 %v1577
    %1767 = vmatpush1.bf16.msra.mxu0 %v1576
    %1768 = vmatprep.subr.bf16.mxu0 %v1581
    %1769 = vmatpush1.bf16.msra.mxu0 %v1580
    %1770 = vmatprep.subr.bf16.mxu0 %v1585
    %1771 = vmatpush1.bf16.msra.mxu0 %v1584
    %1772 = vmatprep.subr.bf16.mxu0 %v1758
    %1773 = vmatpush1.bf16.msra.mxu0 %v1755
    %1774 = vmatprep.subr.bf16.mxu0 0
    %1775 = vmatpush1.bf16.msra.mxu0 0
    %1776 = vmatprep.subr.bf16.mxu0 0
    %1777 = vmatpush1.bf16.msra.mxu0 0
    %1778 = vmatprep.subr.bf16.mxu0 0
    %1779 = vmatpush1.bf16.msra.mxu0 0
    %1780 = vmatprep.subr.bf16.mxu0 0
    %1781 = vmatpush1.bf16.msra.mxu0 0
    %1782 = vmatprep.subr.bf16.mxu0 0
    %1783 = vmatpush1.bf16.msra.mxu0 0
    %1784 = vmatprep.subr.bf16.mxu0 0
    %1785 = vmatpush1.bf16.msra.mxu0 0
    %1786 = vmatprep.subr.bf16.mxu0 0
    %1787 = vmatpush1.bf16.msra.mxu0 0
    %1788 = vmatprep.subr.bf16.mxu0 0
    %1789 = vmatpush1.bf16.msra.mxu0 0
    %1790 = vmatprep.subr.bf16.mxu0 0
    %1791 = vmatpush1.bf16.msra.mxu0 0
    %1792 = vmatprep.subr.bf16.mxu0 0
    %1793 = vmatpush1.bf16.msra.mxu0 0
    %1794 = vmatprep.subr.bf16.mxu0 0
    %1795 = vmatpush1.bf16.msra.mxu0 0
    %1796 = vmatprep.subr.bf16.mxu0 0
    %1797 = vmatpush1.bf16.msra.mxu0 0
    %1798 = vmatprep.mubr.bf16.mxu0 0
    %1799 = vmatmul.mubr.bf16.gmra.mrb[0].mxu0 %v1730
    %v1800 = vpop.f32.mrb[0].mxu0
    %v1801 = vadd.f32 %v1611, %v1800
    %v1802 = vpop.f32.mrb[0].mxu0
    %v1803 = vadd.f32 %v1611, %v1802
    %v1804 = vpop.f32.mrb[0].mxu0
    %v1805 = vadd.f32 %v1616, %v1804
    %v1806 = vpop.f32.mrb[0].mxu0
    %v1807 = vadd.f32 %v1616, %v1806
    %1808 = vmatprep.mubr.bf16.mxu0 0
    %1809 = vmatmul.mubr.bf16.gmra.mrb[0].mxu0 %v1733
    %v1810 = vpop.f32.mrb[0].mxu0
    %v1811 = vadd.f32 %v1621, %v1810
    %v1812 = vpop.f32.mrb[0].mxu0
    %v1813 = vadd.f32 %v1621, %v1812
    %v1814 = vpop.f32.mrb[0].mxu0
    %v1815 = vadd.f32 %v1626, %v1814
    %v1816 = vpop.f32.mrb[0].mxu0
    %v1817 = vadd.f32 %v1626, %v1816
    %1818 = vmatprep.mubr.bf16.mxu0 0
    %1819 = vmatmul.mubr.bf16.gmra.mrb[0].mxu0 %v1736
    %v1820 = vpop.f32.mrb[0].mxu0
    %v1821 = vadd.f32 %v1631, %v1820
    %v1822 = vpop.f32.mrb[0].mxu0
    %v1823 = vadd.f32 %v1631, %v1822
    %v1824 = vpop.f32.mrb[0].mxu0
    %v1825 = vadd.f32 %v1636, %v1824
    %v1826 = vpop.f32.mrb[0].mxu0
    %v1827 = vadd.f32 %v1636, %v1826
    %1828 = vmatprep.mubr.bf16.mxu0 0
    %1829 = vmatmul.mubr.bf16.gmra.mrb[0].mxu0 %v1739
    %v1830 = vpop.f32.mrb[0].mxu0
    %v1831 = vadd.f32 %v1641, %v1830
    %v1832 = vpop.f32.mrb[0].mxu0
    %v1833 = vadd.f32 %v1641, %v1832
    %v1834 = vpop.f32.mrb[0].mxu0
    %v1835 = vadd.f32 %v1646, %v1834
    %v1836 = vpop.f32.mrb[0].mxu0
    %v1837 = vadd.f32 %v1646, %v1836
    %1838 = vmatprep.mubr.bf16.mxu0 0
    %1839 = vmatmul.mubr.bf16.gmra.mrb[0].mxu0 %v1742
    %v1840 = vpop.f32.mrb[0].mxu0
    %v1841 = vadd.f32 %v1651, %v1840
    %v1842 = vpop.f32.mrb[0].mxu0
    %v1843 = vadd.f32 %v1651, %v1842
    %v1844 = vpop.f32.mrb[0].mxu0
    %v1845 = vadd.f32 %v1656, %v1844
    %v1846 = vpop.f32.mrb[0].mxu0
    %v1847 = vadd.f32 %v1656, %v1846
    %1848 = vmatprep.mubr.bf16.mxu0 0
    %1849 = vmatmul.mubr.bf16.gmra.mrb[0].mxu0 %v1745
    %v1850 = vpop.f32.mrb[0].mxu0
    %v1851 = vadd.f32 %v1661, %v1850
    %v1852 = vpop.f32.mrb[0].mxu0
    %v1853 = vadd.f32 %v1661, %v1852
    %v1854 = vpop.f32.mrb[0].mxu0
    %v1855 = vadd.f32 %v1666, %v1854
    %v1856 = vpop.f32.mrb[0].mxu0
    %v1857 = vadd.f32 %v1666, %v1856
    %1858 = vmatprep.mubr.bf16.mxu0 0
    %1859 = vmatmul.mubr.bf16.gmra.mrb[0].mxu0 %v1748
    %v1860 = vpop.f32.mrb[0].mxu0
    %v1861 = vadd.f32 %v1671, %v1860
    %v1862 = vpop.f32.mrb[0].mxu0
    %v1863 = vadd.f32 %v1671, %v1862
    %v1864 = vpop.f32.mrb[0].mxu0
    %v1865 = vadd.f32 %v1676, %v1864
    %v1866 = vpop.f32.mrb[0].mxu0
    %v1867 = vadd.f32 %v1676, %v1866
    %1868 = vmatprep.mubr.bf16.mxu0 0
    %1869 = vmatmul.mubr.bf16.gmra.mrb[0].mxu0 %v1751
    %v1870 = vpop.f32.mrb[0].mxu0
    %v1871 = vadd.f32 %v1681, %v1870
    %v1872 = vpop.f32.mrb[0].mxu0
    %v1873 = vadd.f32 %v1681, %v1872
    %v1874 = vpop.f32.mrb[0].mxu0
    %v1875 = vadd.f32 %v1686, %v1874
    %v1876 = vpop.f32.mrb[0].mxu0
    %v1877 = vadd.f32 %v1686, %v1876
    %1878 = vdwg.mxu0
    %1879 = vmatprep.subr.bf16.mxu0 %v1579
    %1880 = vmatpush1.bf16.msra.mxu0 %v1578
    %1881 = vmatprep.subr.bf16.mxu0 %v1583
    %1882 = vmatpush1.bf16.msra.mxu0 %v1582
    %1883 = vmatprep.subr.bf16.mxu0 %v1587
    %1884 = vmatpush1.bf16.msra.mxu0 %v1586
    %1885 = vmatprep.subr.bf16.mxu0 %v1764
    %1886 = vmatpush1.bf16.msra.mxu0 %v1761
    %1887 = vmatprep.subr.bf16.mxu0 0
    %1888 = vmatpush1.bf16.msra.mxu0 0
    %1889 = vmatprep.subr.bf16.mxu0 0
    %1890 = vmatpush1.bf16.msra.mxu0 0
    %1891 = vmatprep.subr.bf16.mxu0 0
    %1892 = vmatpush1.bf16.msra.mxu0 0
    %1893 = vmatprep.subr.bf16.mxu0 0
    %1894 = vmatpush1.bf16.msra.mxu0 0
    %1895 = vmatprep.subr.bf16.mxu0 0
    %1896 = vmatpush1.bf16.msra.mxu0 0
    %1897 = vmatprep.subr.bf16.mxu0 0
    %1898 = vmatpush1.bf16.msra.mxu0 0
    %1899 = vmatprep.subr.bf16.mxu0 0
    %1900 = vmatpush1.bf16.msra.mxu0 0
    %1901 = vmatprep.subr.bf16.mxu0 0
    %1902 = vmatpush1.bf16.msra.mxu0 0
    %1903 = vmatprep.subr.bf16.mxu0 0
    %1904 = vmatpush1.bf16.msra.mxu0 0
    %1905 = vmatprep.subr.bf16.mxu0 0
    %1906 = vmatpush1.bf16.msra.mxu0 0
    %1907 = vmatprep.subr.bf16.mxu0 0
    %1908 = vmatpush1.bf16.msra.mxu0 0
    %1909 = vmatprep.subr.bf16.mxu0 0
    %1910 = vmatpush1.bf16.msra.mxu0 0
    %1911 = vmatprep.mubr.bf16.mxu0 0
    %1912 = vmatmul.mubr.bf16.gmra.mrb[0].mxu0 %v1730
    %v1913 = vpop.f32.mrb[0].mxu0
    %v1914 = vadd.f32 %v1611, %v1913
    %v1915 = vpop.f32.mrb[0].mxu0
    %v1916 = vadd.f32 %v1611, %v1915
    %v1917 = vpop.f32.mrb[0].mxu0
    %v1918 = vadd.f32 %v1616, %v1917
    %v1919 = vpop.f32.mrb[0].mxu0
    %v1920 = vadd.f32 %v1616, %v1919
    %1921 = vmatprep.mubr.bf16.mxu0 0
    %1922 = vmatmul.mubr.bf16.gmra.mrb[0].mxu0 %v1733
    %v1923 = vpop.f32.mrb[0].mxu0
    %v1924 = vadd.f32 %v1621, %v1923
    %v1925 = vpop.f32.mrb[0].mxu0
    %v1926 = vadd.f32 %v1621, %v1925
    %v1927 = vpop.f32.mrb[0].mxu0
    %v1928 = vadd.f32 %v1626, %v1927
    %v1929 = vpop.f32.mrb[0].mxu0
    %v1930 = vadd.f32 %v1626, %v1929
    %1931 = vmatprep.mubr.bf16.mxu0 0
    %1932 = vmatmul.mubr.bf16.gmra.mrb[0].mxu0 %v1736
    %v1933 = vpop.f32.mrb[0].mxu0
    %v1934 = vadd.f32 %v1631, %v1933
    %v1935 = vpop.f32.mrb[0].mxu0
    %v1936 = vadd.f32 %v1631, %v1935
    %v1937 = vpop.f32.mrb[0].mxu0
    %v1938 = vadd.f32 %v1636, %v1937
    %v1939 = vpop.f32.mrb[0].mxu0
    %v1940 = vadd.f32 %v1636, %v1939
    %1941 = vmatprep.mubr.bf16.mxu0 0
    %1942 = vmatmul.mubr.bf16.gmra.mrb[0].mxu0 %v1739
    %v1943 = vpop.f32.mrb[0].mxu0
    %v1944 = vadd.f32 %v1641, %v1943
    %v1945 = vpop.f32.mrb[0].mxu0
    %v1946 = vadd.f32 %v1641, %v1945
    %v1947 = vpop.f32.mrb[0].mxu0
    %v1948 = vadd.f32 %v1646, %v1947
    %v1949 = vpop.f32.mrb[0].mxu0
    %v1950 = vadd.f32 %v1646, %v1949
    %1951 = vmatprep.mubr.bf16.mxu0 0
    %1952 = vmatmul.mubr.bf16.gmra.mrb[0].mxu0 %v1742
    %v1953 = vpop.f32.mrb[0].mxu0
    %v1954 = vadd.f32 %v1651, %v1953
    %v1955 = vpop.f32.mrb[0].mxu0
    %v1956 = vadd.f32 %v1651, %v1955
    %v1957 = vpop.f32.mrb[0].mxu0
    %v1958 = vadd.f32 %v1656, %v1957
    %v1959 = vpop.f32.mrb[0].mxu0
    %v1960 = vadd.f32 %v1656, %v1959
    %1961 = vmatprep.mubr.bf16.mxu0 0
    %1962 = vmatmul.mubr.bf16.gmra.mrb[0].mxu0 %v1745
    %v1963 = vpop.f32.mrb[0].mxu0
    %v1964 = vadd.f32 %v1661, %v1963
    %v1965 = vpop.f32.mrb[0].mxu0
    %v1966 = vadd.f32 %v1661, %v1965
    %v1967 = vpop.f32.mrb[0].mxu0
    %v1968 = vadd.f32 %v1666, %v1967
    %v1969 = vpop.f32.mrb[0].mxu0
    %v1970 = vadd.f32 %v1666, %v1969
    %1971 = vmatprep.mubr.bf16.mxu0 0
    %1972 = vmatmul.mubr.bf16.gmra.mrb[0].mxu0 %v1748
    %v1973 = vpop.f32.mrb[0].mxu0
    %v1974 = vadd.f32 %v1671, %v1973
    %v1975 = vpop.f32.mrb[0].mxu0
    %v1976 = vadd.f32 %v1671, %v1975
    %v1977 = vpop.f32.mrb[0].mxu0
    %v1978 = vadd.f32 %v1676, %v1977
    %v1979 = vpop.f32.mrb[0].mxu0
    %v1980 = vadd.f32 %v1676, %v1979
    %1981 = vmatprep.mubr.bf16.mxu0 0
    %1982 = vmatmul.mubr.bf16.gmra.mrb[0].mxu0 %v1751
    %v1983 = vpop.f32.mrb[0].mxu0
    %v1984 = vadd.f32 %v1681, %v1983
    %v1985 = vpop.f32.mrb[0].mxu0
    %v1986 = vadd.f32 %v1681, %v1985
    %v1987 = vpop.f32.mrb[0].mxu0
    %v1988 = vadd.f32 %v1686, %v1987
    %v1989 = vpop.f32.mrb[0].mxu0
    %v1990 = vadd.f32 %v1686, %v1989
    %1991 = vdwg.mxu0
    %v1992 = vmax.f32 %v1801, 0.0
    %v1993 = vmax.f32 %v1803, 0.0
    %v1994 = vmax.f32 %v1914, 0.0
    %v1995 = vmax.f32 %v1916, 0.0
    %v1996 = vmax.f32 %v1805, 0.0
    %v1997 = vmax.f32 %v1807, 0.0
    %v1998 = vmax.f32 %v1918, 0.0
    %v1999 = vmax.f32 %v1920, 0.0
    %v2000 = vmax.f32 %v1811, 0.0
    %v2001 = vmax.f32 %v1813, 0.0
    %v2002 = vmax.f32 %v1924, 0.0
    %v2003 = vmax.f32 %v1926, 0.0
    %v2004 = vmax.f32 %v1815, 0.0
    %v2005 = vmax.f32 %v1817, 0.0
    %v2006 = vmax.f32 %v1928, 0.0
    %v2007 = vmax.f32 %v1930, 0.0
    %v2008 = vmax.f32 %v1821, 0.0
    %v2009 = vmax.f32 %v1823, 0.0
    %v2010 = vmax.f32 %v1934, 0.0
    %v2011 = vmax.f32 %v1936, 0.0
    %v2012 = vmax.f32 %v1825, 0.0
    %v2013 = vmax.f32 %v1827, 0.0
    %v2014 = vmax.f32 %v1938, 0.0
    %v2015 = vmax.f32 %v1940, 0.0
    %v2016 = vmax.f32 %v1831, 0.0
    %v2017 = vmax.f32 %v1833, 0.0
    %v2018 = vmax.f32 %v1944, 0.0
    %v2019 = vmax.f32 %v1946, 0.0
    %v2020 = vmax.f32 %v1835, 0.0
    %v2021 = vmax.f32 %v1837, 0.0
    %v2022 = vmax.f32 %v1948, 0.0
    %v2023 = vmax.f32 %v1950, 0.0
    %v2024 = vmax.f32 %v1841, 0.0
    %v2025 = vmax.f32 %v1843, 0.0
    %v2026 = vmax.f32 %v1954, 0.0
    %v2027 = vmax.f32 %v1956, 0.0
    %v2028 = vmax.f32 %v1845, 0.0
    %v2029 = vmax.f32 %v1847, 0.0
    %v2030 = vmax.f32 %v1958, 0.0
    %v2031 = vmax.f32 %v1960, 0.0
    %v2032 = vmax.f32 %v1851, 0.0
    %v2033 = vmax.f32 %v1853, 0.0
    %v2034 = vmax.f32 %v1964, 0.0
    %v2035 = vmax.f32 %v1966, 0.0
    %v2036 = vmax.f32 %v1855, 0.0
    %v2037 = vmax.f32 %v1857, 0.0
    %v2038 = vmax.f32 %v1968, 0.0
    %v2039 = vmax.f32 %v1970, 0.0
    %v2040 = vmax.f32 %v1861, 0.0
    %v2041 = vmax.f32 %v1863, 0.0
    %v2042 = vmax.f32 %v1974, 0.0
    %v2043 = vmax.f32 %v1976, 0.0
    %v2044 = vmax.f32 %v1865, 0.0
    %v2045 = vmax.f32 %v1867, 0.0
    %v2046 = vmax.f32 %v1978, 0.0
    %v2047 = vmax.f32 %v1980, 0.0
    %v2048 = vmax.f32 %v1871, 0.0
    %v2049 = vmax.f32 %v1873, 0.0
    %v2050 = vmax.f32 %v1984, 0.0
    %v2051 = vmax.f32 %v1986, 0.0
    %v2052 = vmax.f32 %v1875, 0.0
    %v2053 = vmax.f32 %v1877, 0.0
    %v2054 = vmax.f32 %v1988, 0.0
    %v2055 = vmax.f32 %v1990, 0.0
    %v2056 = vpack.c.bf16 %v1996, %v1992
    %v2057 = vpack.c.bf16 %v1997, %v1993
    %v2058 = vpack.c.bf16 %v1998, %v1994
    %v2059 = vpack.c.bf16 %v1999, %v1995
    %v2060 = vpack.c.bf16 %v2004, %v2000
    %v2061 = vpack.c.bf16 %v2005, %v2001
    %v2062 = vpack.c.bf16 %v2006, %v2002
    %v2063 = vpack.c.bf16 %v2007, %v2003
    %v2064 = vpack.c.bf16 %v2012, %v2008
    %v2065 = vpack.c.bf16 %v2013, %v2009
    %v2066 = vpack.c.bf16 %v2014, %v2010
    %v2067 = vpack.c.bf16 %v2015, %v2011
    %v2068 = vpack.c.bf16 %v2020, %v2016
    %v2069 = vpack.c.bf16 %v2021, %v2017
    %v2070 = vpack.c.bf16 %v2022, %v2018
    %v2071 = vpack.c.bf16 %v2023, %v2019
    %v2072 = vpack.c.bf16 %v2028, %v2024
    %v2073 = vpack.c.bf16 %v2029, %v2025
    %v2074 = vpack.c.bf16 %v2030, %v2026
    %v2075 = vpack.c.bf16 %v2031, %v2027
    %v2076 = vpack.c.bf16 %v2036, %v2032
    %v2077 = vpack.c.bf16 %v2037, %v2033
    %v2078 = vpack.c.bf16 %v2038, %v2034
    %v2079 = vpack.c.bf16 %v2039, %v2035
    %v2080 = vpack.c.bf16 %v2044, %v2040
    %v2081 = vpack.c.bf16 %v2045, %v2041
    %v2082 = vpack.c.bf16 %v2046, %v2042
    %v2083 = vpack.c.bf16 %v2047, %v2043
    %v2084 = vpack.c.bf16 %v2052, %v2048
    %v2085 = vpack.c.bf16 %v2053, %v2049
    %v2086 = vpack.c.bf16 %v2054, %v2050
    %v2087 = vpack.c.bf16 %v2055, %v2051
    %v2088 = vld [vmem:[%s2] sm:$0xff]
    %v2089 = vld [vmem:[%s2 + $0x8] sm:$0xff]
    %v2090 = vld [vmem:[%s2 + $0x10] sm:$0xff]
    %v2091 = vld [vmem:[%s2 + $0x18] sm:$0xff]
    %v2092 = vld [vmem:[%s2 + $0x20] sm:$0xff]
    %v2093 = vld [vmem:[%s2 + $0x28] sm:$0xff]
    %v2094 = vld [vmem:[%s2 + $0x30] sm:$0xff]
    %v2095 = vld [vmem:[%s2 + $0x38] sm:$0xff]
    %v2096 = vld [vmem:[%s2 + $0x40] sm:$0xff]
    %v2097 = vld [vmem:[%s2 + $0x48] sm:$0xff]
    %v2098 = vld [vmem:[%s2 + $0x50] sm:$0xff]
    %v2099 = vld [vmem:[%s2 + $0x58] sm:$0xff]
    %v2100 = vld [vmem:[%s2 + $0x60] sm:$0xff]
    %v2101 = vld [vmem:[%s2 + $0x68] sm:$0xff]
    %v2102 = vld [vmem:[%s2 + $0x70] sm:$0xff]
    %v2103 = vld [vmem:[%s2 + $0x78] sm:$0xff]
    %v2104 = vld [vmem:[%s2 + $0x80] sm:$0xff]
    %v2105 = vld [vmem:[%s2 + $0x88] sm:$0xff]
    %v2106 = vld [vmem:[%s2 + $0x90] sm:$0xff]
    %v2107 = vld [vmem:[%s2 + $0x98] sm:$0xff]
    %v2108 = vld [vmem:[%s2 + $0xa0] sm:$0xff]
    %v2109 = vld [vmem:[%s2 + $0xa8] sm:$0xff]
    %v2110 = vld [vmem:[%s2 + $0xb0] sm:$0xff]
    %v2111 = vld [vmem:[%s2 + $0xb8] sm:$0xff]
    %v2112 = vld [vmem:[%s2 + $0xc0] sm:$0xff]
    %v2113 = vld [vmem:[%s2 + $0xc8] sm:$0xff]
    %v2114 = vld [vmem:[%s2 + $0xd0] sm:$0xff]
    %v2115 = vld [vmem:[%s2 + $0xd8] sm:$0xff]
    %v2116 = vld [vmem:[%s2 + $0xe0] sm:$0xff]
    %v2117 = vld [vmem:[%s2 + $0xe8] sm:$0xff]
    %v2118 = vld [vmem:[%s2 + $0xf0] sm:$0xff]
    %v2119 = vld [vmem:[%s2 + $0xf8] sm:$0xff]
    %v2152 = vunpack.c.l.b16 %v2088
    %v2153 = vunpack.c.h.b16 %v2088
    %v2154 = vunpack.c.l.b16 %v2089
    %v2155 = vunpack.c.h.b16 %v2089
    %v2156 = vunpack.c.l.b16 %v2090
    %v2157 = vunpack.c.h.b16 %v2090
    %v2158 = vunpack.c.l.b16 %v2091
    %v2159 = vunpack.c.h.b16 %v2091
    %v2160 = vunpack.c.l.b16 %v2092
    %v2161 = vunpack.c.h.b16 %v2092
    %v2162 = vunpack.c.l.b16 %v2093
    %v2163 = vunpack.c.h.b16 %v2093
    %v2164 = vunpack.c.l.b16 %v2094
    %v2165 = vunpack.c.h.b16 %v2094
    %v2166 = vunpack.c.l.b16 %v2095
    %v2167 = vunpack.c.h.b16 %v2095
    %v2168 = vunpack.c.l.b16 %v2096
    %v2169 = vunpack.c.h.b16 %v2096
    %v2170 = vunpack.c.l.b16 %v2097
    %v2171 = vunpack.c.h.b16 %v2097
    %v2172 = vunpack.c.l.b16 %v2098
    %v2173 = vunpack.c.h.b16 %v2098
    %v2174 = vunpack.c.l.b16 %v2099
    %v2175 = vunpack.c.h.b16 %v2099
    %v2176 = vunpack.c.l.b16 %v2100
    %v2177 = vunpack.c.h.b16 %v2100
    %v2178 = vunpack.c.l.b16 %v2101
    %v2179 = vunpack.c.h.b16 %v2101
    %v2180 = vunpack.c.l.b16 %v2102
    %v2181 = vunpack.c.h.b16 %v2102
    %v2182 = vunpack.c.l.b16 %v2103
    %v2183 = vunpack.c.h.b16 %v2103
    %v2184 = vunpack.c.l.b16 %v2104
    %v2185 = vunpack.c.h.b16 %v2104
    %v2186 = vunpack.c.l.b16 %v2105
    %v2187 = vunpack.c.h.b16 %v2105
    %v2188 = vunpack.c.l.b16 %v2106
    %v2189 = vunpack.c.h.b16 %v2106
    %v2190 = vunpack.c.l.b16 %v2107
    %v2191 = vunpack.c.h.b16 %v2107
    %v2192 = vunpack.c.l.b16 %v2108
    %v2193 = vunpack.c.h.b16 %v2108
    %v2194 = vunpack.c.l.b16 %v2109
    %v2195 = vunpack.c.h.b16 %v2109
    %v2196 = vunpack.c.l.b16 %v2110
    %v2197 = vunpack.c.h.b16 %v2110
    %v2198 = vunpack.c.l.b16 %v2111
    %v2199 = vunpack.c.h.b16 %v2111
    %v2200 = vunpack.c.l.b16 %v2112
    %v2201 = vunpack.c.h.b16 %v2112
    %v2202 = vunpack.c.l.b16 %v2113
    %v2203 = vunpack.c.h.b16 %v2113
    %v2204 = vunpack.c.l.b16 %v2114
    %v2205 = vunpack.c.h.b16 %v2114
    %v2206 = vunpack.c.l.b16 %v2115
    %v2207 = vunpack.c.h.b16 %v2115
    %v2208 = vunpack.c.l.b16 %v2116
    %v2209 = vunpack.c.h.b16 %v2116
    %v2210 = vunpack.c.l.b16 %v2117
    %v2211 = vunpack.c.h.b16 %v2117
    %v2212 = vunpack.c.l.b16 %v2118
    %v2213 = vunpack.c.h.b16 %v2118
    %v2214 = vunpack.c.l.b16 %v2119
    %v2215 = vunpack.c.h.b16 %v2119
    %v2216 = vpack.c.b16 %v2154, %v2152
    %v2217 = vpack.c.b16 %v2155, %v2153
    %v2218 = vpack.c.b16 %v2158, %v2156
    %v2219 = vpack.c.b16 %v2159, %v2157
    %v2220 = vpack.c.b16 %v2162, %v2160
    %v2221 = vpack.c.b16 %v2163, %v2161
    %v2222 = vpack.c.b16 %v2166, %v2164
    %v2223 = vpack.c.b16 %v2167, %v2165
    %v2224 = vpack.c.b16 %v2170, %v2168
    %v2225 = vpack.c.b16 %v2171, %v2169
    %v2226 = vpack.c.b16 %v2174, %v2172
    %v2227 = vpack.c.b16 %v2175, %v2173
    %v2228 = vpack.c.b16 %v2178, %v2176
    %v2229 = vpack.c.b16 %v2179, %v2177
    %v2230 = vpack.c.b16 %v2182, %v2180
    %v2231 = vpack.c.b16 %v2183, %v2181
    %v2232 = vpack.c.b16 %v2186, %v2184
    %v2233 = vpack.c.b16 %v2187, %v2185
    %v2234 = vpack.c.b16 %v2190, %v2188
    %v2235 = vpack.c.b16 %v2191, %v2189
    %v2236 = vpack.c.b16 %v2194, %v2192
    %v2237 = vpack.c.b16 %v2195, %v2193
    %v2238 = vpack.c.b16 %v2198, %v2196
    %v2239 = vpack.c.b16 %v2199, %v2197
    %v2240 = vpack.c.b16 %v2202, %v2200
    %v2241 = vpack.c.b16 %v2203, %v2201
    %v2242 = vpack.c.b16 %v2206, %v2204
    %v2243 = vpack.c.b16 %v2207, %v2205
    %v2244 = vpack.c.b16 %v2210, %v2208
    %v2245 = vpack.c.b16 %v2211, %v2209
    %v2246 = vpack.c.b16 %v2214, %v2212
    %v2247 = vpack.c.b16 %v2215, %v2213
    %2280 = vmatprep.subr.bf16.mxu0 %v2217
    %2281 = vmatpush1.bf16.msra.mxu0 %v2216
    %2282 = vmatprep.subr.bf16.mxu0 %v2219
    %2283 = vmatpush1.bf16.msra.mxu0 %v2218
    %2284 = vmatprep.subr.bf16.mxu0 %v2221
    %2285 = vmatpush1.bf16.msra.mxu0 %v2220
    %2286 = vmatprep.subr.bf16.mxu0 %v2223
    %2287 = vmatpush1.bf16.msra.mxu0 %v2222
    %2288 = vmatprep.subr.bf16.mxu0 %v2225
    %2289 = vmatpush1.bf16.msra.mxu0 %v2224
    %2290 = vmatprep.subr.bf16.mxu0 %v2227
    %2291 = vmatpush1.bf16.msra.mxu0 %v2226
    %2292 = vmatprep.subr.bf16.mxu0 %v2229
    %2293 = vmatpush1.bf16.msra.mxu0 %v2228
    %2294 = vmatprep.subr.bf16.mxu0 %v2231
    %2295 = vmatpush1.bf16.msra.mxu0 %v2230
    %2296 = vmatprep.subr.bf16.mxu0 %v2233
    %2297 = vmatpush1.bf16.msra.mxu0 %v2232
    %2298 = vmatprep.subr.bf16.mxu0 %v2235
    %2299 = vmatpush1.bf16.msra.mxu0 %v2234
    %2300 = vmatprep.subr.bf16.mxu0 %v2237
    %2301 = vmatpush1.bf16.msra.mxu0 %v2236
    %2302 = vmatprep.subr.bf16.mxu0 %v2239
    %2303 = vmatpush1.bf16.msra.mxu0 %v2238
    %2304 = vmatprep.subr.bf16.mxu0 %v2241
    %2305 = vmatpush1.bf16.msra.mxu0 %v2240
    %2306 = vmatprep.subr.bf16.mxu0 %v2243
    %2307 = vmatpush1.bf16.msra.mxu0 %v2242
    %2308 = vmatprep.subr.bf16.mxu0 %v2245
    %2309 = vmatpush1.bf16.msra.mxu0 %v2244
    %2310 = vmatprep.subr.bf16.mxu0 %v2247
    %2311 = vmatpush1.bf16.msra.mxu0 %v2246
    %2312 = vmatprep.mubr.bf16.mxu0 %v2057
    %2313 = vmatmul.mubr.bf16.gmra.mrb[0].mxu0 %v2056
    %v2314 = vpop.f32.mrb[0].mxu0
    %v2315 = vadd.f32 0.0, %v2314
    %v2316 = vpop.f32.mrb[0].mxu0
    %v2317 = vadd.f32 0.0, %v2316
    %v2318 = vpop.f32.mrb[0].mxu0
    %v2319 = vadd.f32 0.0, %v2318
    %v2320 = vpop.f32.mrb[0].mxu0
    %v2321 = vadd.f32 0.0, %v2320
    %2322 = vmatprep.mubr.bf16.mxu0 %v2061
    %2323 = vmatmul.mubr.bf16.gmra.mrb[0].mxu0 %v2060
    %v2324 = vpop.f32.mrb[0].mxu0
    %v2325 = vadd.f32 0.0, %v2324
    %v2326 = vpop.f32.mrb[0].mxu0
    %v2327 = vadd.f32 0.0, %v2326
    %v2328 = vpop.f32.mrb[0].mxu0
    %v2329 = vadd.f32 0.0, %v2328
    %v2330 = vpop.f32.mrb[0].mxu0
    %v2331 = vadd.f32 0.0, %v2330
    %2332 = vmatprep.mubr.bf16.mxu0 %v2065
    %2333 = vmatmul.mubr.bf16.gmra.mrb[0].mxu0 %v2064
    %v2334 = vpop.f32.mrb[0].mxu0
    %v2335 = vadd.f32 0.0, %v2334
    %v2336 = vpop.f32.mrb[0].mxu0
    %v2337 = vadd.f32 0.0, %v2336
    %v2338 = vpop.f32.mrb[0].mxu0
    %v2339 = vadd.f32 0.0, %v2338
    %v2340 = vpop.f32.mrb[0].mxu0
    %v2341 = vadd.f32 0.0, %v2340
    %2342 = vmatprep.mubr.bf16.mxu0 %v2069
    %2343 = vmatmul.mubr.bf16.gmra.mrb[0].mxu0 %v2068
    %v2344 = vpop.f32.mrb[0].mxu0
    %v2345 = vadd.f32 0.0, %v2344
    %v2346 = vpop.f32.mrb[0].mxu0
    %v2347 = vadd.f32 0.0, %v2346
    %v2348 = vpop.f32.mrb[0].mxu0
    %v2349 = vadd.f32 0.0, %v2348
    %v2350 = vpop.f32.mrb[0].mxu0
    %v2351 = vadd.f32 0.0, %v2350
    %2352 = vmatprep.mubr.bf16.mxu0 %v2073
    %2353 = vmatmul.mubr.bf16.gmra.mrb[0].mxu0 %v2072
    %v2354 = vpop.f32.mrb[0].mxu0
    %v2355 = vadd.f32 0.0, %v2354
    %v2356 = vpop.f32.mrb[0].mxu0
    %v2357 = vadd.f32 0.0, %v2356
    %v2358 = vpop.f32.mrb[0].mxu0
    %v2359 = vadd.f32 0.0, %v2358
    %v2360 = vpop.f32.mrb[0].mxu0
    %v2361 = vadd.f32 0.0, %v2360
    %2362 = vmatprep.mubr.bf16.mxu0 %v2077
    %2363 = vmatmul.mubr.bf16.gmra.mrb[0].mxu0 %v2076
    %v2364 = vpop.f32.mrb[0].mxu0
    %v2365 = vadd.f32 0.0, %v2364
    %v2366 = vpop.f32.mrb[0].mxu0
    %v2367 = vadd.f32 0.0, %v2366
    %v2368 = vpop.f32.mrb[0].mxu0
    %v2369 = vadd.f32 0.0, %v2368
    %v2370 = vpop.f32.mrb[0].mxu0
    %v2371 = vadd.f32 0.0, %v2370
    %2372 = vmatprep.mubr.bf16.mxu0 %v2081
    %2373 = vmatmul.mubr.bf16.gmra.mrb[0].mxu0 %v2080
    %v2374 = vpop.f32.mrb[0].mxu0
    %v2375 = vadd.f32 0.0, %v2374
    %v2376 = vpop.f32.mrb[0].mxu0
    %v2377 = vadd.f32 0.0, %v2376
    %v2378 = vpop.f32.mrb[0].mxu0
    %v2379 = vadd.f32 0.0, %v2378
    %v2380 = vpop.f32.mrb[0].mxu0
    %v2381 = vadd.f32 0.0, %v2380
    %2382 = vmatprep.mubr.bf16.mxu0 %v2085
    %2383 = vmatmul.mubr.bf16.gmra.mrb[0].mxu0 %v2084
    %v2384 = vpop.f32.mrb[0].mxu0
    %v2385 = vadd.f32 0.0, %v2384
    %v2386 = vpop.f32.mrb[0].mxu0
    %v2387 = vadd.f32 0.0, %v2386
    %v2388 = vpop.f32.mrb[0].mxu0
    %v2389 = vadd.f32 0.0, %v2388
    %v2390 = vpop.f32.mrb[0].mxu0
    %v2391 = vadd.f32 0.0, %v2390
    %2392 = vdwg.mxu0
    %v2393 = vpack.c.bf16 %v2319, %v2315
    %v2394 = vpack.c.bf16 %v2321, %v2317
    %v2395 = vpack.c.bf16 %v2329, %v2325
    %v2396 = vpack.c.bf16 %v2331, %v2327
    %v2397 = vpack.c.bf16 %v2339, %v2335
    %v2398 = vpack.c.bf16 %v2341, %v2337
    %v2399 = vpack.c.bf16 %v2349, %v2345
    %v2400 = vpack.c.bf16 %v2351, %v2347
    %v2401 = vpack.c.bf16 %v2359, %v2355
    %v2402 = vpack.c.bf16 %v2361, %v2357
    %v2403 = vpack.c.bf16 %v2369, %v2365
    %v2404 = vpack.c.bf16 %v2371, %v2367
    %v2405 = vpack.c.bf16 %v2379, %v2375
    %v2406 = vpack.c.bf16 %v2381, %v2377
    %v2407 = vpack.c.bf16 %v2389, %v2385
    %v2408 = vpack.c.bf16 %v2391, %v2387
    %2409 = vmatprep.subr.bf16.mxu0 %v2217
    %2410 = vmatpush1.bf16.msra.mxu0 %v2216
    %2411 = vmatprep.subr.bf16.mxu0 %v2219
    %2412 = vmatpush1.bf16.msra.mxu0 %v2218
    %2413 = vmatprep.subr.bf16.mxu0 %v2221
    %2414 = vmatpush1.bf16.msra.mxu0 %v2220
    %2415 = vmatprep.subr.bf16.mxu0 %v2223
    %2416 = vmatpush1.bf16.msra.mxu0 %v2222
    %2417 = vmatprep.subr.bf16.mxu0 %v2225
    %2418 = vmatpush1.bf16.msra.mxu0 %v2224
    %2419 = vmatprep.subr.bf16.mxu0 %v2227
    %2420 = vmatpush1.bf16.msra.mxu0 %v2226
    %2421 = vmatprep.subr.bf16.mxu0 %v2229
    %2422 = vmatpush1.bf16.msra.mxu0 %v2228
    %2423 = vmatprep.subr.bf16.mxu0 %v2231
    %2424 = vmatpush1.bf16.msra.mxu0 %v2230
    %2425 = vmatprep.subr.bf16.mxu0 %v2233
    %2426 = vmatpush1.bf16.msra.mxu0 %v2232
    %2427 = vmatprep.subr.bf16.mxu0 %v2235
    %2428 = vmatpush1.bf16.msra.mxu0 %v2234
    %2429 = vmatprep.subr.bf16.mxu0 %v2237
    %2430 = vmatpush1.bf16.msra.mxu0 %v2236
    %2431 = vmatprep.subr.bf16.mxu0 %v2239
    %2432 = vmatpush1.bf16.msra.mxu0 %v2238
    %2433 = vmatprep.subr.bf16.mxu0 %v2241
    %2434 = vmatpush1.bf16.msra.mxu0 %v2240
    %2435 = vmatprep.subr.bf16.mxu0 %v2243
    %2436 = vmatpush1.bf16.msra.mxu0 %v2242
    %2437 = vmatprep.subr.bf16.mxu0 %v2245
    %2438 = vmatpush1.bf16.msra.mxu0 %v2244
    %2439 = vmatprep.subr.bf16.mxu0 %v2247
    %2440 = vmatpush1.bf16.msra.mxu0 %v2246
    %2441 = vmatprep.mubr.bf16.mxu0 %v2059
    %2442 = vmatmul.mubr.bf16.gmra.mrb[0].mxu0 %v2058
    %v2443 = vpop.f32.mrb[0].mxu0
    %v2444 = vadd.f32 0.0, %v2443
    %v2445 = vpop.f32.mrb[0].mxu0
    %v2446 = vadd.f32 0.0, %v2445
    %v2447 = vpop.f32.mrb[0].mxu0
    %v2448 = vadd.f32 0.0, %v2447
    %v2449 = vpop.f32.mrb[0].mxu0
    %v2450 = vadd.f32 0.0, %v2449
    %2451 = vmatprep.mubr.bf16.mxu0 %v2063
    %2452 = vmatmul.mubr.bf16.gmra.mrb[0].mxu0 %v2062
    %v2453 = vpop.f32.mrb[0].mxu0
    %v2454 = vadd.f32 0.0, %v2453
    %v2455 = vpop.f32.mrb[0].mxu0
    %v2456 = vadd.f32 0.0, %v2455
    %v2457 = vpop.f32.mrb[0].mxu0
    %v2458 = vadd.f32 0.0, %v2457
    %v2459 = vpop.f32.mrb[0].mxu0
    %v2460 = vadd.f32 0.0, %v2459
    %2461 = vmatprep.mubr.bf16.mxu0 %v2067
    %2462 = vmatmul.mubr.bf16.gmra.mrb[0].mxu0 %v2066
    %v2463 = vpop.f32.mrb[0].mxu0
    %v2464 = vadd.f32 0.0, %v2463
    %v2465 = vpop.f32.mrb[0].mxu0
    %v2466 = vadd.f32 0.0, %v2465
    %v2467 = vpop.f32.mrb[0].mxu0
    %v2468 = vadd.f32 0.0, %v2467
    %v2469 = vpop.f32.mrb[0].mxu0
    %v2470 = vadd.f32 0.0, %v2469
    %2471 = vmatprep.mubr.bf16.mxu0 %v2071
    %2472 = vmatmul.mubr.bf16.gmra.mrb[0].mxu0 %v2070
    %v2473 = vpop.f32.mrb[0].mxu0
    %v2474 = vadd.f32 0.0, %v2473
    %v2475 = vpop.f32.mrb[0].mxu0
    %v2476 = vadd.f32 0.0, %v2475
    %v2477 = vpop.f32.mrb[0].mxu0
    %v2478 = vadd.f32 0.0, %v2477
    %v2479 = vpop.f32.mrb[0].mxu0
    %v2480 = vadd.f32 0.0, %v2479
    %2481 = vmatprep.mubr.bf16.mxu0 %v2075
    %2482 = vmatmul.mubr.bf16.gmra.mrb[0].mxu0 %v2074
    %v2483 = vpop.f32.mrb[0].mxu0
    %v2484 = vadd.f32 0.0, %v2483
    %v2485 = vpop.f32.mrb[0].mxu0
    %v2486 = vadd.f32 0.0, %v2485
    %v2487 = vpop.f32.mrb[0].mxu0
    %v2488 = vadd.f32 0.0, %v2487
    %v2489 = vpop.f32.mrb[0].mxu0
    %v2490 = vadd.f32 0.0, %v2489
    %2491 = vmatprep.mubr.bf16.mxu0 %v2079
    %2492 = vmatmul.mubr.bf16.gmra.mrb[0].mxu0 %v2078
    %v2493 = vpop.f32.mrb[0].mxu0
    %v2494 = vadd.f32 0.0, %v2493
    %v2495 = vpop.f32.mrb[0].mxu0
    %v2496 = vadd.f32 0.0, %v2495
    %v2497 = vpop.f32.mrb[0].mxu0
    %v2498 = vadd.f32 0.0, %v2497
    %v2499 = vpop.f32.mrb[0].mxu0
    %v2500 = vadd.f32 0.0, %v2499
    %2501 = vmatprep.mubr.bf16.mxu0 %v2083
    %2502 = vmatmul.mubr.bf16.gmra.mrb[0].mxu0 %v2082
    %v2503 = vpop.f32.mrb[0].mxu0
    %v2504 = vadd.f32 0.0, %v2503
    %v2505 = vpop.f32.mrb[0].mxu0
    %v2506 = vadd.f32 0.0, %v2505
    %v2507 = vpop.f32.mrb[0].mxu0
    %v2508 = vadd.f32 0.0, %v2507
    %v2509 = vpop.f32.mrb[0].mxu0
    %v2510 = vadd.f32 0.0, %v2509
    %2511 = vmatprep.mubr.bf16.mxu0 %v2087
    %2512 = vmatmul.mubr.bf16.gmra.mrb[0].mxu0 %v2086
    %v2513 = vpop.f32.mrb[0].mxu0
    %v2514 = vadd.f32 0.0, %v2513
    %v2515 = vpop.f32.mrb[0].mxu0
    %v2516 = vadd.f32 0.0, %v2515
    %v2517 = vpop.f32.mrb[0].mxu0
    %v2518 = vadd.f32 0.0, %v2517
    %v2519 = vpop.f32.mrb[0].mxu0
    %v2520 = vadd.f32 0.0, %v2519
    %2521 = vdwg.mxu0
    %v2522 = vpack.c.bf16 %v2448, %v2444
    %v2523 = vpack.c.bf16 %v2450, %v2446
    %v2524 = vpack.c.bf16 %v2458, %v2454
    %v2525 = vpack.c.bf16 %v2460, %v2456
    %v2526 = vpack.c.bf16 %v2468, %v2464
    %v2527 = vpack.c.bf16 %v2470, %v2466
    %v2528 = vpack.c.bf16 %v2478, %v2474
    %v2529 = vpack.c.bf16 %v2480, %v2476
    %v2530 = vpack.c.bf16 %v2488, %v2484
    %v2531 = vpack.c.bf16 %v2490, %v2486
    %v2532 = vpack.c.bf16 %v2498, %v2494
    %v2533 = vpack.c.bf16 %v2500, %v2496
    %v2534 = vpack.c.bf16 %v2508, %v2504
    %v2535 = vpack.c.bf16 %v2510, %v2506
    %v2536 = vpack.c.bf16 %v2518, %v2514
    %v2537 = vpack.c.bf16 %v2520, %v2516
    %v2538 = vld [vmem:[%s5] sm:$0xf]
    %v2539 = vld [vmem:[%s5 + $0x4] sm:$0xf]
    %v2540 = vld [vmem:[%s5 + $0x8] sm:$0xf]
    %v2541 = vld [vmem:[%s5 + $0xc] sm:$0xf]
    %v2542 = vld [vmem:[%s5 + $0x10] sm:$0xf]
    %v2543 = vld [vmem:[%s5 + $0x14] sm:$0xf]
    %v2544 = vld [vmem:[%s5 + $0x18] sm:$0x7]
    %v2552 = vunpack.c.l.b16 %v2538
    %v2553 = vunpack.c.l.b16 %v2539
    %v2554 = vunpack.c.l.b16 %v2540
    %v2555 = vunpack.c.l.b16 %v2541
    %v2556 = vunpack.c.l.b16 %v2542
    %v2557 = vunpack.c.l.b16 %v2543
    %v2558 = vunpack.c.l.b16 %v2544
    %v2559 = vpack.c.b16 %v2553, %v2552
    %v2560 = vpack.c.b16 %v2555, %v2554
    %v2561 = vpack.c.b16 %v2557, %v2556
    %v2562 = vpack.c.b16 %v2558, %v2558
    %2567 = vmatprep.subr.bf16.mxu0 %v2394
    %2568 = vmatpush1.bf16.msra.mxu0 %v2393
    %2569 = vmatprep.subr.bf16.mxu0 %v2396
    %2570 = vmatpush1.bf16.msra.mxu0 %v2395
    %2571 = vmatprep.subr.bf16.mxu0 %v2398
    %2572 = vmatpush1.bf16.msra.mxu0 %v2397
    %2573 = vmatprep.subr.bf16.mxu0 %v2400
    %2574 = vmatpush1.bf16.msra.mxu0 %v2399
    %2575 = vmatprep.subr.bf16.mxu0 %v2402
    %2576 = vmatpush1.bf16.msra.mxu0 %v2401
    %2577 = vmatprep.subr.bf16.mxu0 %v2404
    %2578 = vmatpush1.bf16.msra.mxu0 %v2403
    %2579 = vmatprep.subr.bf16.mxu0 %v2406
    %2580 = vmatpush1.bf16.msra.mxu0 %v2405
    %2581 = vmatprep.subr.bf16.mxu0 %v2408
    %2582 = vmatpush1.bf16.msra.mxu0 %v2407
    %2583 = vmatprep.subr.bf16.mxu0 0
    %2584 = vmatpush1.bf16.msra.mxu0 0
    %2585 = vmatprep.subr.bf16.mxu0 0
    %2586 = vmatpush1.bf16.msra.mxu0 0
    %2587 = vmatprep.subr.bf16.mxu0 0
    %2588 = vmatpush1.bf16.msra.mxu0 0
    %2589 = vmatprep.subr.bf16.mxu0 0
    %2590 = vmatpush1.bf16.msra.mxu0 0
    %2591 = vmatprep.subr.bf16.mxu0 0
    %2592 = vmatpush1.bf16.msra.mxu0 0
    %2593 = vmatprep.subr.bf16.mxu0 0
    %2594 = vmatpush1.bf16.msra.mxu0 0
    %2595 = vmatprep.subr.bf16.mxu0 0
    %2596 = vmatpush1.bf16.msra.mxu0 0
    %2597 = vmatprep.subr.bf16.mxu0 0
    %2598 = vmatpush1.bf16.msra.mxu0 0
    %2599 = vmatprep.mubr.bf16.mxu0 0
    %2600 = vmatmul.mubr.bf16.gmra.mrb[0].mxu0 %v2559
    %v2601 = vpop.f32.mrb[0].mxu0
    %v2602 = vadd.f32 0.0, %v2601
    %v2603 = vpop.f32.mrb[0].mxu0
    %v2604 = vadd.f32 0.0, %v2603
    %v2605 = vpop.f32.mrb[0].mxu0
    %v2606 = vadd.f32 0.0, %v2605
    %v2607 = vpop.f32.mrb[0].mxu0
    %v2608 = vadd.f32 0.0, %v2607
    %2609 = vmatprep.mubr.bf16.mxu0 0
    %2610 = vmatmul.mubr.bf16.gmra.mrb[0].mxu0 %v2560
    %v2611 = vpop.f32.mrb[0].mxu0
    %v2612 = vadd.f32 0.0, %v2611
    %v2613 = vpop.f32.mrb[0].mxu0
    %v2614 = vadd.f32 0.0, %v2613
    %v2615 = vpop.f32.mrb[0].mxu0
    %v2616 = vadd.f32 0.0, %v2615
    %v2617 = vpop.f32.mrb[0].mxu0
    %v2618 = vadd.f32 0.0, %v2617
    %2619 = vmatprep.mubr.bf16.mxu0 0
    %2620 = vmatmul.mubr.bf16.gmra.mrb[0].mxu0 %v2561
    %v2621 = vpop.f32.mrb[0].mxu0
    %v2622 = vadd.f32 0.0, %v2621
    %v2623 = vpop.f32.mrb[0].mxu0
    %v2624 = vadd.f32 0.0, %v2623
    %v2625 = vpop.f32.mrb[0].mxu0
    %v2626 = vadd.f32 0.0, %v2625
    %v2627 = vpop.f32.mrb[0].mxu0
    %v2628 = vadd.f32 0.0, %v2627
    %2629 = vmatprep.mubr.bf16.mxu0 0
    %2630 = vmatmul.mubr.bf16.gmra.mrb[0].mxu0 %v2562
    %v2631 = vpop.f32.mrb[0].mxu0
    %v2632 = vadd.f32 0.0, %v2631
    %v2633 = vpop.f32.mrb[0].mxu0
    %v2634 = vadd.f32 0.0, %v2633
    %v2635 = vpop.f32.mrb[0].mxu0
    %v2636 = vpop.f32.mrb[0].mxu0
    %2637 = vdwg.mxu0
    %2638 = vmatprep.subr.bf16.mxu0 %v2523
    %2639 = vmatpush1.bf16.msra.mxu0 %v2522
    %2640 = vmatprep.subr.bf16.mxu0 %v2525
    %2641 = vmatpush1.bf16.msra.mxu0 %v2524
    %2642 = vmatprep.subr.bf16.mxu0 %v2527
    %2643 = vmatpush1.bf16.msra.mxu0 %v2526
    %2644 = vmatprep.subr.bf16.mxu0 %v2529
    %2645 = vmatpush1.bf16.msra.mxu0 %v2528
    %2646 = vmatprep.subr.bf16.mxu0 %v2531
    %2647 = vmatpush1.bf16.msra.mxu0 %v2530
    %2648 = vmatprep.subr.bf16.mxu0 %v2533
    %2649 = vmatpush1.bf16.msra.mxu0 %v2532
    %2650 = vmatprep.subr.bf16.mxu0 %v2535
    %2651 = vmatpush1.bf16.msra.mxu0 %v2534
    %2652 = vmatprep.subr.bf16.mxu0 %v2537
    %2653 = vmatpush1.bf16.msra.mxu0 %v2536
    %2654 = vmatprep.subr.bf16.mxu0 0
    %2655 = vmatpush1.bf16.msra.mxu0 0
    %2656 = vmatprep.subr.bf16.mxu0 0
    %2657 = vmatpush1.bf16.msra.mxu0 0
    %2658 = vmatprep.subr.bf16.mxu0 0
    %2659 = vmatpush1.bf16.msra.mxu0 0
    %2660 = vmatprep.subr.bf16.mxu0 0
    %2661 = vmatpush1.bf16.msra.mxu0 0
    %2662 = vmatprep.subr.bf16.mxu0 0
    %2663 = vmatpush1.bf16.msra.mxu0 0
    %2664 = vmatprep.subr.bf16.mxu0 0
    %2665 = vmatpush1.bf16.msra.mxu0 0
    %2666 = vmatprep.subr.bf16.mxu0 0
    %2667 = vmatpush1.bf16.msra.mxu0 0
    %2668 = vmatprep.subr.bf16.mxu0 0
    %2669 = vmatpush1.bf16.msra.mxu0 0
    %2670 = vmatprep.mubr.bf16.mxu0 0
    %2671 = vmatmul.mubr.bf16.gmra.mrb[0].mxu0 %v2559
    %v2672 = vpop.f32.mrb[0].mxu0
    %v2673 = vadd.f32 0.0, %v2672
    %v2674 = vpop.f32.mrb[0].mxu0
    %v2675 = vadd.f32 0.0, %v2674
    %v2676 = vpop.f32.mrb[0].mxu0
    %v2677 = vadd.f32 0.0, %v2676
    %v2678 = vpop.f32.mrb[0].mxu0
    %v2679 = vadd.f32 0.0, %v2678
    %2680 = vmatprep.mubr.bf16.mxu0 0
    %2681 = vmatmul.mubr.bf16.gmra.mrb[0].mxu0 %v2560
    %v2682 = vpop.f32.mrb[0].mxu0
    %v2683 = vadd.f32 0.0, %v2682
    %v2684 = vpop.f32.mrb[0].mxu0
    %v2685 = vadd.f32 0.0, %v2684
    %v2686 = vpop.f32.mrb[0].mxu0
    %v2687 = vadd.f32 0.0, %v2686
    %v2688 = vpop.f32.mrb[0].mxu0
    %v2689 = vadd.f32 0.0, %v2688
    %2690 = vmatprep.mubr.bf16.mxu0 0
    %2691 = vmatmul.mubr.bf16.gmra.mrb[0].mxu0 %v2561
    %v2692 = vpop.f32.mrb[0].mxu0
    %v2693 = vadd.f32 0.0, %v2692
    %v2694 = vpop.f32.mrb[0].mxu0
    %v2695 = vadd.f32 0.0, %v2694
    %v2696 = vpop.f32.mrb[0].mxu0
    %v2697 = vadd.f32 0.0, %v2696
    %v2698 = vpop.f32.mrb[0].mxu0
    %v2699 = vadd.f32 0.0, %v2698
    %2700 = vmatprep.mubr.bf16.mxu0 0
    %2701 = vmatmul.mubr.bf16.gmra.mrb[0].mxu0 %v2562
    %v2702 = vpop.f32.mrb[0].mxu0
    %v2703 = vadd.f32 0.0, %v2702
    %v2704 = vpop.f32.mrb[0].mxu0
    %v2705 = vadd.f32 0.0, %v2704
    %v2706 = vpop.f32.mrb[0].mxu0
    %v2707 = vpop.f32.mrb[0].mxu0
    %2708 = vdwg.mxu0
    %2709 = vrot.lane.b32.xlu0 %v2602, 37
    %v2710 = vpop.permute.xlu0 %2709
    %2711 = vrot.lane.b32.xlu0 %v2604, 37
    %v2712 = vpop.permute.xlu0 %2711
    %2713 = vrot.lane.b32.xlu0 %v2673, 37
    %v2714 = vpop.permute.xlu0 %2713
    %2715 = vrot.lane.b32.xlu0 %v2675, 37
    %v2716 = vpop.permute.xlu0 %2715
    %v2717 = vsel %vm154, %v2714, %v2716
    %v2718 = vsel %vm154, %v2712, %v2714
    %v2719 = vsel %vm154, %v2710, %v2712
    %v2720 = vsel %vm154, %v2716, %v2710
    %v2721 = vmul.f32 %v2720, %v164
    %v2722 = vmul.f32 %v2719, %v168
    %v2723 = vmul.f32 %v2718, %v172
    %v2724 = vmul.f32 %v2717, %v176
    %v2725 = vadd.f32 %v2721, 0.0
    %v2726 = vadd.f32 %v2722, 0.0
    %v2727 = vadd.f32 %v2723, 0.0
    %v2728 = vadd.f32 %v2724, 0.0
    %v2733 = vrot.slane %v2602, 2
    %v2734 = vrot.slane %v2604, 2
    %v2735 = vrot.slane %v2673, 2
    %v2736 = vrot.slane %v2675, 2
    %2741 = vrot.lane.b32.xlu0 %v2733, 36
    %v2742 = vpop.permute.xlu0 %2741
    %2743 = vrot.lane.b32.xlu0 %v2734, 36
    %v2744 = vpop.permute.xlu0 %2743
    %2745 = vrot.lane.b32.xlu0 %v2735, 36
    %v2746 = vpop.permute.xlu0 %2745
    %2747 = vrot.lane.b32.xlu0 %v2736, 36
    %v2748 = vpop.permute.xlu0 %2747
    %v2749 = vsel %vm193, %v2746, %v2748
    %v2750 = vsel %vm193, %v2744, %v2746
    %v2751 = vsel %vm193, %v2742, %v2744
    %v2752 = vsel %vm193, %v2748, %v2742
    %v2753 = vmul.f32 %v2752, %v204
    %v2754 = vmul.f32 %v2751, %v208
    %v2755 = vmul.f32 %v2750, %v212
    %v2756 = vmul.f32 %v2749, %v216
    %v2757 = vadd.f32 %v2725, %v2753
    %v2758 = vadd.f32 %v2726, %v2754
    %v2759 = vadd.f32 %v2727, %v2755
    %v2760 = vadd.f32 %v2728, %v2756
    %v2761 = vrot.slane %v2602, 4
    %v2762 = vrot.slane %v2604, 4
    %v2763 = vrot.slane %v2673, 4
    %v2764 = vrot.slane %v2675, 4
    %2769 = vrot.lane.b32.xlu0 %v2761, 35
    %v2770 = vpop.permute.xlu0 %2769
    %2771 = vrot.lane.b32.xlu0 %v2762, 35
    %v2772 = vpop.permute.xlu0 %2771
    %2773 = vrot.lane.b32.xlu0 %v2763, 35
    %v2774 = vpop.permute.xlu0 %2773
    %2775 = vrot.lane.b32.xlu0 %v2764, 35
    %v2776 = vpop.permute.xlu0 %2775
    %v2777 = vsel %vm233, %v2774, %v2776
    %v2778 = vsel %vm233, %v2772, %v2774
    %v2779 = vsel %vm233, %v2770, %v2772
    %v2780 = vsel %vm233, %v2776, %v2770
    %v2781 = vmul.f32 %v2780, %v244
    %v2782 = vmul.f32 %v2779, %v248
    %v2783 = vmul.f32 %v2778, %v252
    %v2784 = vmul.f32 %v2777, %v256
    %v2785 = vadd.f32 %v2757, %v2781
    %v2786 = vadd.f32 %v2758, %v2782
    %v2787 = vadd.f32 %v2759, %v2783
    %v2788 = vadd.f32 %v2760, %v2784
    %v2789 = vrot.slane %v2602, 6
    %v2790 = vrot.slane %v2604, 6
    %v2791 = vrot.slane %v2673, 6
    %v2792 = vrot.slane %v2675, 6
    %2797 = vrot.lane.b32.xlu0 %v2789, 33
    %v2798 = vpop.permute.xlu0 %2797
    %2799 = vrot.lane.b32.xlu0 %v2790, 33
    %v2800 = vpop.permute.xlu0 %2799
    %2801 = vrot.lane.b32.xlu0 %v2791, 33
    %v2802 = vpop.permute.xlu0 %2801
    %2803 = vrot.lane.b32.xlu0 %v2792, 33
    %v2804 = vpop.permute.xlu0 %2803
    %v2805 = vsel %vm273, %v2802, %v2804
    %v2806 = vsel %vm273, %v2800, %v2802
    %v2807 = vsel %vm273, %v2798, %v2800
    %v2808 = vsel %vm273, %v2804, %v2798
    %v2809 = vmul.f32 %v2808, %v284
    %v2810 = vmul.f32 %v2807, %v288
    %v2811 = vmul.f32 %v2806, %v292
    %v2812 = vmul.f32 %v2805, %v296
    %v2813 = vadd.f32 %v2785, %v2809
    %v2814 = vadd.f32 %v2786, %v2810
    %v2815 = vadd.f32 %v2787, %v2811
    %v2816 = vadd.f32 %v2788, %v2812
    %2817 = vrot.lane.b32.xlu0 %v2606, 32
    %v2818 = vpop.permute.xlu0 %2817
    %2819 = vrot.lane.b32.xlu0 %v2608, 32
    %v2820 = vpop.permute.xlu0 %2819
    %2821 = vrot.lane.b32.xlu0 %v2677, 32
    %v2822 = vpop.permute.xlu0 %2821
    %2823 = vrot.lane.b32.xlu0 %v2679, 32
    %v2824 = vpop.permute.xlu0 %2823
    %v2825 = vsel %vm313, %v2822, %v2824
    %v2826 = vsel %vm313, %v2820, %v2822
    %v2827 = vsel %vm313, %v2818, %v2820
    %v2828 = vsel %vm313, %v2824, %v2818
    %v2829 = vmul.f32 %v2828, %v324
    %v2830 = vmul.f32 %v2827, %v328
    %v2831 = vmul.f32 %v2826, %v332
    %v2832 = vmul.f32 %v2825, %v336
    %v2833 = vadd.f32 %v2813, %v2829
    %v2834 = vadd.f32 %v2814, %v2830
    %v2835 = vadd.f32 %v2815, %v2831
    %v2836 = vadd.f32 %v2816, %v2832
    %v2841 = vrot.slane %v2606, 2
    %v2842 = vrot.slane %v2608, 2
    %v2843 = vrot.slane %v2677, 2
    %v2844 = vrot.slane %v2679, 2
    %2849 = vrot.lane.b32.xlu0 %v2841, 31
    %v2850 = vpop.permute.xlu0 %2849
    %2851 = vrot.lane.b32.xlu0 %v2842, 31
    %v2852 = vpop.permute.xlu0 %2851
    %2853 = vrot.lane.b32.xlu0 %v2843, 31
    %v2854 = vpop.permute.xlu0 %2853
    %2855 = vrot.lane.b32.xlu0 %v2844, 31
    %v2856 = vpop.permute.xlu0 %2855
    %v2857 = vsel %vm353, %v2854, %v2856
    %v2858 = vsel %vm353, %v2852, %v2854
    %v2859 = vsel %vm353, %v2850, %v2852
    %v2860 = vsel %vm353, %v2856, %v2850
    %v2861 = vmul.f32 %v2860, %v364
    %v2862 = vmul.f32 %v2859, %v368
    %v2863 = vmul.f32 %v2858, %v372
    %v2864 = vmul.f32 %v2857, %v376
    %v2865 = vadd.f32 %v2833, %v2861
    %v2866 = vadd.f32 %v2834, %v2862
    %v2867 = vadd.f32 %v2835, %v2863
    %v2868 = vadd.f32 %v2836, %v2864
    %v2869 = vrot.slane %v2606, 4
    %v2870 = vrot.slane %v2608, 4
    %v2871 = vrot.slane %v2677, 4
    %v2872 = vrot.slane %v2679, 4
    %2877 = vrot.lane.b32.xlu0 %v2869, 29
    %v2878 = vpop.permute.xlu0 %2877
    %2879 = vrot.lane.b32.xlu0 %v2870, 29
    %v2880 = vpop.permute.xlu0 %2879
    %2881 = vrot.lane.b32.xlu0 %v2871, 29
    %v2882 = vpop.permute.xlu0 %2881
    %2883 = vrot.lane.b32.xlu0 %v2872, 29
    %v2884 = vpop.permute.xlu0 %2883
    %v2885 = vsel %vm393, %v2882, %v2884
    %v2886 = vsel %vm393, %v2880, %v2882
    %v2887 = vsel %vm393, %v2878, %v2880
    %v2888 = vsel %vm393, %v2884, %v2878
    %v2889 = vmul.f32 %v2888, %v404
    %v2890 = vmul.f32 %v2887, %v408
    %v2891 = vmul.f32 %v2886, %v412
    %v2892 = vmul.f32 %v2885, %v416
    %v2893 = vadd.f32 %v2865, %v2889
    %v2894 = vadd.f32 %v2866, %v2890
    %v2895 = vadd.f32 %v2867, %v2891
    %v2896 = vadd.f32 %v2868, %v2892
    %v2897 = vrot.slane %v2606, 6
    %v2898 = vrot.slane %v2608, 6
    %v2899 = vrot.slane %v2677, 6
    %v2900 = vrot.slane %v2679, 6
    %2905 = vrot.lane.b32.xlu0 %v2897, 28
    %v2906 = vpop.permute.xlu0 %2905
    %2907 = vrot.lane.b32.xlu0 %v2898, 28
    %v2908 = vpop.permute.xlu0 %2907
    %2909 = vrot.lane.b32.xlu0 %v2899, 28
    %v2910 = vpop.permute.xlu0 %2909
    %2911 = vrot.lane.b32.xlu0 %v2900, 28
    %v2912 = vpop.permute.xlu0 %2911
    %v2913 = vsel %vm433, %v2910, %v2912
    %v2914 = vsel %vm433, %v2908, %v2910
    %v2915 = vsel %vm433, %v2906, %v2908
    %v2916 = vsel %vm433, %v2912, %v2906
    %v2917 = vmul.f32 %v2916, %v444
    %v2918 = vmul.f32 %v2915, %v448
    %v2919 = vmul.f32 %v2914, %v452
    %v2920 = vmul.f32 %v2913, %v456
    %v2921 = vadd.f32 %v2893, %v2917
    %v2922 = vadd.f32 %v2894, %v2918
    %v2923 = vadd.f32 %v2895, %v2919
    %v2924 = vadd.f32 %v2896, %v2920
    %2925 = vrot.lane.b32.xlu0 %v2612, 27
    %v2926 = vpop.permute.xlu0 %2925
    %2927 = vrot.lane.b32.xlu0 %v2614, 27
    %v2928 = vpop.permute.xlu0 %2927
    %2929 = vrot.lane.b32.xlu0 %v2683, 27
    %v2930 = vpop.permute.xlu0 %2929
    %2931 = vrot.lane.b32.xlu0 %v2685, 27
    %v2932 = vpop.permute.xlu0 %2931
    %v2933 = vsel %vm473, %v2930, %v2932
    %v2934 = vsel %vm473, %v2928, %v2930
    %v2935 = vsel %vm473, %v2926, %v2928
    %v2936 = vsel %vm473, %v2932, %v2926
    %v2937 = vmul.f32 %v2936, %v484
    %v2938 = vmul.f32 %v2935, %v488
    %v2939 = vmul.f32 %v2934, %v492
    %v2940 = vmul.f32 %v2933, %v496
    %v2941 = vadd.f32 %v2921, %v2937
    %v2942 = vadd.f32 %v2922, %v2938
    %v2943 = vadd.f32 %v2923, %v2939
    %v2944 = vadd.f32 %v2924, %v2940
    %v2949 = vrot.slane %v2612, 2
    %v2950 = vrot.slane %v2614, 2
    %v2951 = vrot.slane %v2683, 2
    %v2952 = vrot.slane %v2685, 2
    %2957 = vrot.lane.b32.xlu0 %v2949, 5
    %v2958 = vpop.permute.xlu0 %2957
    %2959 = vrot.lane.b32.xlu0 %v2950, 5
    %v2960 = vpop.permute.xlu0 %2959
    %2961 = vrot.lane.b32.xlu0 %v2951, 5
    %v2962 = vpop.permute.xlu0 %2961
    %2963 = vrot.lane.b32.xlu0 %v2952, 5
    %v2964 = vpop.permute.xlu0 %2963
    %v2965 = vsel %vm513, %v2962, %v2964
    %v2966 = vsel %vm513, %v2960, %v2962
    %v2967 = vsel %vm513, %v2958, %v2960
    %v2968 = vsel %vm513, %v2964, %v2958
    %v2969 = vmul.f32 %v2968, %v524
    %v2970 = vmul.f32 %v2967, %v528
    %v2971 = vmul.f32 %v2966, %v532
    %v2972 = vmul.f32 %v2965, %v536
    %v2973 = vadd.f32 %v2941, %v2969
    %v2974 = vadd.f32 %v2942, %v2970
    %v2975 = vadd.f32 %v2943, %v2971
    %v2976 = vadd.f32 %v2944, %v2972
    %v2977 = vrot.slane %v2612, 4
    %v2978 = vrot.slane %v2614, 4
    %v2979 = vrot.slane %v2683, 4
    %v2980 = vrot.slane %v2685, 4
    %2985 = vrot.lane.b32.xlu0 %v2977, 4
    %v2986 = vpop.permute.xlu0 %2985
    %2987 = vrot.lane.b32.xlu0 %v2978, 4
    %v2988 = vpop.permute.xlu0 %2987
    %2989 = vrot.lane.b32.xlu0 %v2979, 4
    %v2990 = vpop.permute.xlu0 %2989
    %2991 = vrot.lane.b32.xlu0 %v2980, 4
    %v2992 = vpop.permute.xlu0 %2991
    %v2993 = vsel %vm553, %v2990, %v2992
    %v2994 = vsel %vm553, %v2988, %v2990
    %v2995 = vsel %vm553, %v2986, %v2988
    %v2996 = vsel %vm553, %v2992, %v2986
    %v2997 = vmul.f32 %v2996, %v564
    %v2998 = vmul.f32 %v2995, %v568
    %v2999 = vmul.f32 %v2994, %v572
    %v3000 = vmul.f32 %v2993, %v576
    %v3001 = vadd.f32 %v2973, %v2997
    %v3002 = vadd.f32 %v2974, %v2998
    %v3003 = vadd.f32 %v2975, %v2999
    %v3004 = vadd.f32 %v2976, %v3000
    %v3005 = vrot.slane %v2612, 6
    %v3006 = vrot.slane %v2614, 6
    %v3007 = vrot.slane %v2683, 6
    %v3008 = vrot.slane %v2685, 6
    %3013 = vrot.lane.b32.xlu0 %v3005, 3
    %v3014 = vpop.permute.xlu0 %3013
    %3015 = vrot.lane.b32.xlu0 %v3006, 3
    %v3016 = vpop.permute.xlu0 %3015
    %3017 = vrot.lane.b32.xlu0 %v3007, 3
    %v3018 = vpop.permute.xlu0 %3017
    %3019 = vrot.lane.b32.xlu0 %v3008, 3
    %v3020 = vpop.permute.xlu0 %3019
    %v3021 = vsel %vm593, %v3018, %v3020
    %v3022 = vsel %vm593, %v3016, %v3018
    %v3023 = vsel %vm593, %v3014, %v3016
    %v3024 = vsel %vm593, %v3020, %v3014
    %v3025 = vmul.f32 %v3024, %v604
    %v3026 = vmul.f32 %v3023, %v608
    %v3027 = vmul.f32 %v3022, %v612
    %v3028 = vmul.f32 %v3021, %v616
    %v3029 = vadd.f32 %v3001, %v3025
    %v3030 = vadd.f32 %v3002, %v3026
    %v3031 = vadd.f32 %v3003, %v3027
    %v3032 = vadd.f32 %v3004, %v3028
    %3033 = vrot.lane.b32.xlu0 %v2616, 1
    %v3034 = vpop.permute.xlu0 %3033
    %3035 = vrot.lane.b32.xlu0 %v2618, 1
    %v3036 = vpop.permute.xlu0 %3035
    %3037 = vrot.lane.b32.xlu0 %v2687, 1
    %v3038 = vpop.permute.xlu0 %3037
    %3039 = vrot.lane.b32.xlu0 %v2689, 1
    %v3040 = vpop.permute.xlu0 %3039
    %v3041 = vsel %vm633, %v3038, %v3040
    %v3042 = vsel %vm633, %v3036, %v3038
    %v3043 = vsel %vm633, %v3034, %v3036
    %v3044 = vsel %vm633, %v3040, %v3034
    %v3045 = vmul.f32 %v3044, %v644
    %v3046 = vmul.f32 %v3043, %v648
    %v3047 = vmul.f32 %v3042, %v652
    %v3048 = vmul.f32 %v3041, %v656
    %v3049 = vadd.f32 %v3029, %v3045
    %v3050 = vadd.f32 %v3030, %v3046
    %v3051 = vadd.f32 %v3031, %v3047
    %v3052 = vadd.f32 %v3032, %v3048
    %v3053 = vmul.f32 %v2616, %v671
    %v3054 = vmul.f32 %v2618, %v675
    %v3055 = vmul.f32 %v2687, %v679
    %v3056 = vmul.f32 %v2689, %v683
    %v3061 = vrot.slane %v3053, 2
    %v3062 = vrot.slane %v3054, 2
    %v3063 = vrot.slane %v3055, 2
    %v3064 = vrot.slane %v3056, 2
    %v3069 = vadd.f32 %v3049, %v3061
    %v3070 = vadd.f32 %v3050, %v3062
    %v3071 = vadd.f32 %v3051, %v3063
    %v3072 = vadd.f32 %v3052, %v3064
    %v3077 = vrot.slane %v2616, 4
    %v3078 = vrot.slane %v2618, 4
    %v3079 = vrot.slane %v2687, 4
    %v3080 = vrot.slane %v2689, 4
    %3085 = vrot.lane.b32.xlu0 %v3077, 127
    %v3086 = vpop.permute.xlu0 %3085
    %3087 = vrot.lane.b32.xlu0 %v3078, 127
    %v3088 = vpop.permute.xlu0 %3087
    %3089 = vrot.lane.b32.xlu0 %v3079, 127
    %v3090 = vpop.permute.xlu0 %3089
    %3091 = vrot.lane.b32.xlu0 %v3080, 127
    %v3092 = vpop.permute.xlu0 %3091
    %v3093 = vsel %vm715, %v3090, %v3092
    %v3094 = vsel %vm715, %v3088, %v3090
    %v3095 = vsel %vm715, %v3086, %v3088
    %v3096 = vsel %vm715, %v3092, %v3086
    %v3097 = vmul.f32 %v3095, %v726
    %v3098 = vmul.f32 %v3094, %v730
    %v3099 = vmul.f32 %v3093, %v734
    %v3100 = vmul.f32 %v3096, %v738
    %v3101 = vadd.f32 %v3069, %v3097
    %v3102 = vadd.f32 %v3070, %v3098
    %v3103 = vadd.f32 %v3071, %v3099
    %v3104 = vadd.f32 %v3072, %v3100
    %v3105 = vrot.slane %v2616, 6
    %v3106 = vrot.slane %v2618, 6
    %v3107 = vrot.slane %v2687, 6
    %v3108 = vrot.slane %v2689, 6
    %3113 = vrot.lane.b32.xlu0 %v3105, 125
    %v3114 = vpop.permute.xlu0 %3113
    %3115 = vrot.lane.b32.xlu0 %v3106, 125
    %v3116 = vpop.permute.xlu0 %3115
    %3117 = vrot.lane.b32.xlu0 %v3107, 125
    %v3118 = vpop.permute.xlu0 %3117
    %3119 = vrot.lane.b32.xlu0 %v3108, 125
    %v3120 = vpop.permute.xlu0 %3119
    %v3121 = vsel %vm755, %v3118, %v3120
    %v3122 = vsel %vm755, %v3116, %v3118
    %v3123 = vsel %vm755, %v3114, %v3116
    %v3124 = vsel %vm755, %v3120, %v3114
    %v3125 = vmul.f32 %v3123, %v766
    %v3126 = vmul.f32 %v3122, %v770
    %v3127 = vmul.f32 %v3121, %v774
    %v3128 = vmul.f32 %v3124, %v778
    %v3129 = vadd.f32 %v3101, %v3125
    %v3130 = vadd.f32 %v3102, %v3126
    %v3131 = vadd.f32 %v3103, %v3127
    %v3132 = vadd.f32 %v3104, %v3128
    %3133 = vrot.lane.b32.xlu0 %v2622, 124
    %v3134 = vpop.permute.xlu0 %3133
    %3135 = vrot.lane.b32.xlu0 %v2624, 124
    %v3136 = vpop.permute.xlu0 %3135
    %3137 = vrot.lane.b32.xlu0 %v2693, 124
    %v3138 = vpop.permute.xlu0 %3137
    %3139 = vrot.lane.b32.xlu0 %v2695, 124
    %v3140 = vpop.permute.xlu0 %3139
    %v3141 = vsel %vm795, %v3138, %v3140
    %v3142 = vsel %vm795, %v3136, %v3138
    %v3143 = vsel %vm795, %v3134, %v3136
    %v3144 = vsel %vm795, %v3140, %v3134
    %v3145 = vmul.f32 %v3143, %v806
    %v3146 = vmul.f32 %v3142, %v810
    %v3147 = vmul.f32 %v3141, %v814
    %v3148 = vmul.f32 %v3144, %v818
    %v3149 = vadd.f32 %v3129, %v3145
    %v3150 = vadd.f32 %v3130, %v3146
    %v3151 = vadd.f32 %v3131, %v3147
    %v3152 = vadd.f32 %v3132, %v3148
    %v3157 = vrot.slane %v2622, 2
    %v3158 = vrot.slane %v2624, 2
    %v3159 = vrot.slane %v2693, 2
    %v3160 = vrot.slane %v2695, 2
    %3165 = vrot.lane.b32.xlu0 %v3157, 123
    %v3166 = vpop.permute.xlu0 %3165
    %3167 = vrot.lane.b32.xlu0 %v3158, 123
    %v3168 = vpop.permute.xlu0 %3167
    %3169 = vrot.lane.b32.xlu0 %v3159, 123
    %v3170 = vpop.permute.xlu0 %3169
    %3171 = vrot.lane.b32.xlu0 %v3160, 123
    %v3172 = vpop.permute.xlu0 %3171
    %v3173 = vsel %vm835, %v3170, %v3172
    %v3174 = vsel %vm835, %v3168, %v3170
    %v3175 = vsel %vm835, %v3166, %v3168
    %v3176 = vsel %vm835, %v3172, %v3166
    %v3177 = vmul.f32 %v3175, %v846
    %v3178 = vmul.f32 %v3174, %v850
    %v3179 = vmul.f32 %v3173, %v854
    %v3180 = vmul.f32 %v3176, %v858
    %v3181 = vadd.f32 %v3149, %v3177
    %v3182 = vadd.f32 %v3150, %v3178
    %v3183 = vadd.f32 %v3151, %v3179
    %v3184 = vadd.f32 %v3152, %v3180
    %v3185 = vrot.slane %v2622, 4
    %v3186 = vrot.slane %v2624, 4
    %v3187 = vrot.slane %v2693, 4
    %v3188 = vrot.slane %v2695, 4
    %3193 = vrot.lane.b32.xlu0 %v3185, 101
    %v3194 = vpop.permute.xlu0 %3193
    %3195 = vrot.lane.b32.xlu0 %v3186, 101
    %v3196 = vpop.permute.xlu0 %3195
    %3197 = vrot.lane.b32.xlu0 %v3187, 101
    %v3198 = vpop.permute.xlu0 %3197
    %3199 = vrot.lane.b32.xlu0 %v3188, 101
    %v3200 = vpop.permute.xlu0 %3199
    %v3201 = vsel %vm875, %v3198, %v3200
    %v3202 = vsel %vm875, %v3196, %v3198
    %v3203 = vsel %vm875, %v3194, %v3196
    %v3204 = vsel %vm875, %v3200, %v3194
    %v3205 = vmul.f32 %v3203, %v886
    %v3206 = vmul.f32 %v3202, %v890
    %v3207 = vmul.f32 %v3201, %v894
    %v3208 = vmul.f32 %v3204, %v898
    %v3209 = vadd.f32 %v3181, %v3205
    %v3210 = vadd.f32 %v3182, %v3206
    %v3211 = vadd.f32 %v3183, %v3207
    %v3212 = vadd.f32 %v3184, %v3208
    %v3213 = vrot.slane %v2622, 6
    %v3214 = vrot.slane %v2624, 6
    %v3215 = vrot.slane %v2693, 6
    %v3216 = vrot.slane %v2695, 6
    %3221 = vrot.lane.b32.xlu0 %v3213, 100
    %v3222 = vpop.permute.xlu0 %3221
    %3223 = vrot.lane.b32.xlu0 %v3214, 100
    %v3224 = vpop.permute.xlu0 %3223
    %3225 = vrot.lane.b32.xlu0 %v3215, 100
    %v3226 = vpop.permute.xlu0 %3225
    %3227 = vrot.lane.b32.xlu0 %v3216, 100
    %v3228 = vpop.permute.xlu0 %3227
    %v3229 = vsel %vm915, %v3226, %v3228
    %v3230 = vsel %vm915, %v3224, %v3226
    %v3231 = vsel %vm915, %v3222, %v3224
    %v3232 = vsel %vm915, %v3228, %v3222
    %v3233 = vmul.f32 %v3231, %v926
    %v3234 = vmul.f32 %v3230, %v930
    %v3235 = vmul.f32 %v3229, %v934
    %v3236 = vmul.f32 %v3232, %v938
    %v3237 = vadd.f32 %v3209, %v3233
    %v3238 = vadd.f32 %v3210, %v3234
    %v3239 = vadd.f32 %v3211, %v3235
    %v3240 = vadd.f32 %v3212, %v3236
    %3241 = vrot.lane.b32.xlu0 %v2626, 99
    %v3242 = vpop.permute.xlu0 %3241
    %3243 = vrot.lane.b32.xlu0 %v2628, 99
    %v3244 = vpop.permute.xlu0 %3243
    %3245 = vrot.lane.b32.xlu0 %v2697, 99
    %v3246 = vpop.permute.xlu0 %3245
    %3247 = vrot.lane.b32.xlu0 %v2699, 99
    %v3248 = vpop.permute.xlu0 %3247
    %v3249 = vsel %vm955, %v3246, %v3248
    %v3250 = vsel %vm955, %v3244, %v3246
    %v3251 = vsel %vm955, %v3242, %v3244
    %v3252 = vsel %vm955, %v3248, %v3242
    %v3253 = vmul.f32 %v3251, %v966
    %v3254 = vmul.f32 %v3250, %v970
    %v3255 = vmul.f32 %v3249, %v974
    %v3256 = vmul.f32 %v3252, %v978
    %v3257 = vadd.f32 %v3237, %v3253
    %v3258 = vadd.f32 %v3238, %v3254
    %v3259 = vadd.f32 %v3239, %v3255
    %v3260 = vadd.f32 %v3240, %v3256
    %v3265 = vrot.slane %v2626, 2
    %v3266 = vrot.slane %v2628, 2
    %v3267 = vrot.slane %v2697, 2
    %v3268 = vrot.slane %v2699, 2
    %3273 = vrot.lane.b32.xlu0 %v3265, 97
    %v3274 = vpop.permute.xlu0 %3273
    %3275 = vrot.lane.b32.xlu0 %v3266, 97
    %v3276 = vpop.permute.xlu0 %3275
    %3277 = vrot.lane.b32.xlu0 %v3267, 97
    %v3278 = vpop.permute.xlu0 %3277
    %3279 = vrot.lane.b32.xlu0 %v3268, 97
    %v3280 = vpop.permute.xlu0 %3279
    %v3281 = vsel %vm995, %v3278, %v3280
    %v3282 = vsel %vm995, %v3276, %v3278
    %v3283 = vsel %vm995, %v3274, %v3276
    %v3284 = vsel %vm995, %v3280, %v3274
    %v3285 = vmul.f32 %v3283, %v1006
    %v3286 = vmul.f32 %v3282, %v1010
    %v3287 = vmul.f32 %v3281, %v1014
    %v3288 = vmul.f32 %v3284, %v1018
    %v3289 = vadd.f32 %v3257, %v3285
    %v3290 = vadd.f32 %v3258, %v3286
    %v3291 = vadd.f32 %v3259, %v3287
    %v3292 = vadd.f32 %v3260, %v3288
    %v3293 = vrot.slane %v2626, 4
    %v3294 = vrot.slane %v2628, 4
    %v3295 = vrot.slane %v2697, 4
    %v3296 = vrot.slane %v2699, 4
    %3301 = vrot.lane.b32.xlu0 %v3293, 96
    %v3302 = vpop.permute.xlu0 %3301
    %3303 = vrot.lane.b32.xlu0 %v3294, 96
    %v3304 = vpop.permute.xlu0 %3303
    %3305 = vrot.lane.b32.xlu0 %v3295, 96
    %v3306 = vpop.permute.xlu0 %3305
    %3307 = vrot.lane.b32.xlu0 %v3296, 96
    %v3308 = vpop.permute.xlu0 %3307
    %v3309 = vsel %vm1035, %v3306, %v3308
    %v3310 = vsel %vm1035, %v3304, %v3306
    %v3311 = vsel %vm1035, %v3302, %v3304
    %v3312 = vsel %vm1035, %v3308, %v3302
    %v3313 = vmul.f32 %v3311, %v1046
    %v3314 = vmul.f32 %v3310, %v1050
    %v3315 = vmul.f32 %v3309, %v1054
    %v3316 = vmul.f32 %v3312, %v1058
    %v3317 = vadd.f32 %v3289, %v3313
    %v3318 = vadd.f32 %v3290, %v3314
    %v3319 = vadd.f32 %v3291, %v3315
    %v3320 = vadd.f32 %v3292, %v3316
    %v3321 = vrot.slane %v2626, 6
    %v3322 = vrot.slane %v2628, 6
    %v3323 = vrot.slane %v2697, 6
    %v3324 = vrot.slane %v2699, 6
    %3329 = vrot.lane.b32.xlu0 %v3321, 95
    %v3330 = vpop.permute.xlu0 %3329
    %3331 = vrot.lane.b32.xlu0 %v3322, 95
    %v3332 = vpop.permute.xlu0 %3331
    %3333 = vrot.lane.b32.xlu0 %v3323, 95
    %v3334 = vpop.permute.xlu0 %3333
    %3335 = vrot.lane.b32.xlu0 %v3324, 95
    %v3336 = vpop.permute.xlu0 %3335
    %v3337 = vsel %vm1075, %v3334, %v3336
    %v3338 = vsel %vm1075, %v3332, %v3334
    %v3339 = vsel %vm1075, %v3330, %v3332
    %v3340 = vsel %vm1075, %v3336, %v3330
    %v3341 = vmul.f32 %v3339, %v1086
    %v3342 = vmul.f32 %v3338, %v1090
    %v3343 = vmul.f32 %v3337, %v1094
    %v3344 = vmul.f32 %v3340, %v1098
    %v3345 = vadd.f32 %v3317, %v3341
    %v3346 = vadd.f32 %v3318, %v3342
    %v3347 = vadd.f32 %v3319, %v3343
    %v3348 = vadd.f32 %v3320, %v3344
    %3349 = vrot.lane.b32.xlu0 %v2632, 93
    %v3350 = vpop.permute.xlu0 %3349
    %3351 = vrot.lane.b32.xlu0 %v2634, 93
    %v3352 = vpop.permute.xlu0 %3351
    %3353 = vrot.lane.b32.xlu0 %v2703, 93
    %v3354 = vpop.permute.xlu0 %3353
    %3355 = vrot.lane.b32.xlu0 %v2705, 93
    %v3356 = vpop.permute.xlu0 %3355
    %v3357 = vsel %vm1115, %v3354, %v3356
    %v3358 = vsel %vm1115, %v3352, %v3354
    %v3359 = vsel %vm1115, %v3350, %v3352
    %v3360 = vsel %vm1115, %v3356, %v3350
    %v3361 = vmul.f32 %v3359, %v1126
    %v3362 = vmul.f32 %v3358, %v1130
    %v3363 = vmul.f32 %v3357, %v1134
    %v3364 = vmul.f32 %v3360, %v1138
    %v3365 = vadd.f32 %v3345, %v3361
    %v3366 = vadd.f32 %v3346, %v3362
    %v3367 = vadd.f32 %v3347, %v3363
    %v3368 = vadd.f32 %v3348, %v3364
    %v3373 = vrot.slane %v2632, 2
    %v3374 = vrot.slane %v2634, 2
    %v3375 = vrot.slane %v2703, 2
    %v3376 = vrot.slane %v2705, 2
    %3381 = vrot.lane.b32.xlu0 %v3373, 92
    %v3382 = vpop.permute.xlu0 %3381
    %3383 = vrot.lane.b32.xlu0 %v3374, 92
    %v3384 = vpop.permute.xlu0 %3383
    %3385 = vrot.lane.b32.xlu0 %v3375, 92
    %v3386 = vpop.permute.xlu0 %3385
    %3387 = vrot.lane.b32.xlu0 %v3376, 92
    %v3388 = vpop.permute.xlu0 %3387
    %v3389 = vsel %vm1155, %v3386, %v3388
    %v3390 = vsel %vm1155, %v3384, %v3386
    %v3391 = vsel %vm1155, %v3382, %v3384
    %v3392 = vsel %vm1155, %v3388, %v3382
    %v3393 = vmul.f32 %v3391, %v1166
    %v3394 = vmul.f32 %v3390, %v1170
    %v3395 = vmul.f32 %v3389, %v1174
    %v3396 = vmul.f32 %v3392, %v1178
    %v3397 = vadd.f32 %v3365, %v3393
    %v3398 = vadd.f32 %v3366, %v3394
    %v3399 = vadd.f32 %v3367, %v3395
    %v3400 = vadd.f32 %v3368, %v3396
    %v3401 = vrot.slane %v2632, 4
    %v3402 = vrot.slane %v2634, 4
    %v3403 = vrot.slane %v2703, 4
    %v3404 = vrot.slane %v2705, 4
    %3409 = vrot.lane.b32.xlu0 %v3401, 91
    %v3410 = vpop.permute.xlu0 %3409
    %3411 = vrot.lane.b32.xlu0 %v3402, 91
    %v3412 = vpop.permute.xlu0 %3411
    %3413 = vrot.lane.b32.xlu0 %v3403, 91
    %v3414 = vpop.permute.xlu0 %3413
    %3415 = vrot.lane.b32.xlu0 %v3404, 91
    %v3416 = vpop.permute.xlu0 %3415
    %v3417 = vsel %vm1195, %v3414, %v3416
    %v3418 = vsel %vm1195, %v3412, %v3414
    %v3419 = vsel %vm1195, %v3410, %v3412
    %v3420 = vsel %vm1195, %v3416, %v3410
    %v3421 = vmul.f32 %v3419, %v1206
    %v3422 = vmul.f32 %v3418, %v1210
    %v3423 = vmul.f32 %v3417, %v1214
    %v3424 = vmul.f32 %v3420, %v1218
    %v3425 = vadd.f32 %v3397, %v3421
    %v3426 = vadd.f32 %v3398, %v3422
    %v3427 = vadd.f32 %v3399, %v3423
    %v3428 = vadd.f32 %v3400, %v3424
    %v3429 = vld [vmem:[%s6] sm:$0x3]
    %3431 = vset.pattern.permute.xlu0 0
    %3432 = vperm.xlu0 %3431, %v3429
    %v3433 = vpop.permute.xlu0 %3432
    %v3435 = vadd.f32 %v3425, %v3433
    %v3436 = vadd.f32 %v3426, %v3433
    %v3437 = vadd.f32 %v3427, %v3433
    %v3438 = vadd.f32 %v3428, %v3433
    %v3439 = vmax.f32 %v3435, 0.0
    %v3440 = vmax.f32 %v3436, 0.0
    %v3441 = vmax.f32 %v3437, 0.0
    %v3442 = vmax.f32 %v3438, 0.0
    %3443 = vrot.lane.b32.xlu0 %v3439, 37
    %v3444 = vpop.permute.xlu0 %3443
    %3445 = vrot.lane.b32.xlu0 %v3440, 37
    %v3446 = vpop.permute.xlu0 %3445
    %3447 = vrot.lane.b32.xlu0 %v3441, 37
    %v3448 = vpop.permute.xlu0 %3447
    %3449 = vrot.lane.b32.xlu0 %v3442, 37
    %v3450 = vpop.permute.xlu0 %3449
    %v3451 = vsel %vm154, %v3448, %v3450
    %v3452 = vsel %vm154, %v3446, %v3448
    %v3453 = vsel %vm154, %v3444, %v3446
    %v3454 = vsel %vm154, %v3450, %v3444
    %v3455 = vmul.f32 %v3454, %v164
    %v3456 = vmul.f32 %v3453, %v168
    %v3457 = vmul.f32 %v3452, %v172
    %v3458 = vmul.f32 %v3451, %v176
    %v3459 = vmul.f32 %v3455, 0.020586282
    %v3460 = vmul.f32 %v3456, 0.020586282
    %v3461 = vmul.f32 %v3457, 0.020586282
    %v3462 = vmul.f32 %v3458, 0.020586282
    %v3463 = vadd.f32 %v3459, 0.0
    %v3464 = vadd.f32 %v3460, 0.0
    %v3465 = vadd.f32 %v3461, 0.0
    %v3466 = vadd.f32 %v3462, 0.0
    %3467 = vrot.lane.b32.xlu0 %v3439, 36
    %v3468 = vpop.permute.xlu0 %3467
    %3469 = vrot.lane.b32.xlu0 %v3440, 36
    %v3470 = vpop.permute.xlu0 %3469
    %3471 = vrot.lane.b32.xlu0 %v3441, 36
    %v3472 = vpop.permute.xlu0 %3471
    %3473 = vrot.lane.b32.xlu0 %v3442, 36
    %v3474 = vpop.permute.xlu0 %3473
    %v3475 = vsel %vm193, %v3472, %v3474
    %v3476 = vsel %vm193, %v3470, %v3472
    %v3477 = vsel %vm193, %v3468, %v3470
    %v3478 = vsel %vm193, %v3474, %v3468
    %v3479 = vmul.f32 %v3478, %v204
    %v3480 = vmul.f32 %v3477, %v208
    %v3481 = vmul.f32 %v3476, %v212
    %v3482 = vmul.f32 %v3475, %v216
    %v3483 = vmul.f32 %v3479, 0.03394104
    %v3484 = vmul.f32 %v3480, 0.03394104
    %v3485 = vmul.f32 %v3481, 0.03394104
    %v3486 = vmul.f32 %v3482, 0.03394104
    %v3487 = vadd.f32 %v3463, %v3483
    %v3488 = vadd.f32 %v3464, %v3484
    %v3489 = vadd.f32 %v3465, %v3485
    %v3490 = vadd.f32 %v3466, %v3486
    %3491 = vrot.lane.b32.xlu0 %v3439, 35
    %v3492 = vpop.permute.xlu0 %3491
    %3493 = vrot.lane.b32.xlu0 %v3440, 35
    %v3494 = vpop.permute.xlu0 %3493
    %3495 = vrot.lane.b32.xlu0 %v3441, 35
    %v3496 = vpop.permute.xlu0 %3495
    %3497 = vrot.lane.b32.xlu0 %v3442, 35
    %v3498 = vpop.permute.xlu0 %3497
    %v3499 = vsel %vm233, %v3496, %v3498
    %v3500 = vsel %vm233, %v3494, %v3496
    %v3501 = vsel %vm233, %v3492, %v3494
    %v3502 = vsel %vm233, %v3498, %v3492
    %v3503 = vmul.f32 %v3502, %v244
    %v3504 = vmul.f32 %v3501, %v248
    %v3505 = vmul.f32 %v3500, %v252
    %v3506 = vmul.f32 %v3499, %v256
    %v3507 = vmul.f32 %v3503, 0.020586282
    %v3508 = vmul.f32 %v3504, 0.020586282
    %v3509 = vmul.f32 %v3505, 0.020586282
    %v3510 = vmul.f32 %v3506, 0.020586282
    %v3511 = vadd.f32 %v3487, %v3507
    %v3512 = vadd.f32 %v3488, %v3508
    %v3513 = vadd.f32 %v3489, %v3509
    %v3514 = vadd.f32 %v3490, %v3510
    %3515 = vrot.lane.b32.xlu0 %v3439, 33
    %v3516 = vpop.permute.xlu0 %3515
    %3517 = vrot.lane.b32.xlu0 %v3440, 33
    %v3518 = vpop.permute.xlu0 %3517
    %3519 = vrot.lane.b32.xlu0 %v3441, 33
    %v3520 = vpop.permute.xlu0 %3519
    %3521 = vrot.lane.b32.xlu0 %v3442, 33
    %v3522 = vpop.permute.xlu0 %3521
    %v3523 = vsel %vm273, %v3520, %v3522
    %v3524 = vsel %vm273, %v3518, %v3520
    %v3525 = vsel %vm273, %v3516, %v3518
    %v3526 = vsel %vm273, %v3522, %v3516
    %v3527 = vmul.f32 %v3526, %v284
    %v3528 = vmul.f32 %v3525, %v288
    %v3529 = vmul.f32 %v3524, %v292
    %v3530 = vmul.f32 %v3523, %v296
    %v3531 = vmul.f32 %v3527, 0.03394104
    %v3532 = vmul.f32 %v3528, 0.03394104
    %v3533 = vmul.f32 %v3529, 0.03394104
    %v3534 = vmul.f32 %v3530, 0.03394104
    %v3535 = vadd.f32 %v3511, %v3531
    %v3536 = vadd.f32 %v3512, %v3532
    %v3537 = vadd.f32 %v3513, %v3533
    %v3538 = vadd.f32 %v3514, %v3534
    %3539 = vrot.lane.b32.xlu0 %v3439, 32
    %v3540 = vpop.permute.xlu0 %3539
    %3541 = vrot.lane.b32.xlu0 %v3440, 32
    %v3542 = vpop.permute.xlu0 %3541
    %3543 = vrot.lane.b32.xlu0 %v3441, 32
    %v3544 = vpop.permute.xlu0 %3543
    %3545 = vrot.lane.b32.xlu0 %v3442, 32
    %v3546 = vpop.permute.xlu0 %3545
    %v3547 = vsel %vm313, %v3544, %v3546
    %v3548 = vsel %vm313, %v3542, %v3544
    %v3549 = vsel %vm313, %v3540, %v3542
    %v3550 = vsel %vm313, %v3546, %v3540
    %v3551 = vmul.f32 %v3550, %v324
    %v3552 = vmul.f32 %v3549, %v328
    %v3553 = vmul.f32 %v3548, %v332
    %v3554 = vmul.f32 %v3547, %v336
    %v3555 = vmul.f32 %v3551, 0.055959318
    %v3556 = vmul.f32 %v3552, 0.055959318
    %v3557 = vmul.f32 %v3553, 0.055959318
    %v3558 = vmul.f32 %v3554, 0.055959318
    %v3559 = vadd.f32 %v3535, %v3555
    %v3560 = vadd.f32 %v3536, %v3556
    %v3561 = vadd.f32 %v3537, %v3557
    %v3562 = vadd.f32 %v3538, %v3558
    %3563 = vrot.lane.b32.xlu0 %v3439, 31
    %v3564 = vpop.permute.xlu0 %3563
    %3565 = vrot.lane.b32.xlu0 %v3440, 31
    %v3566 = vpop.permute.xlu0 %3565
    %3567 = vrot.lane.b32.xlu0 %v3441, 31
    %v3568 = vpop.permute.xlu0 %3567
    %3569 = vrot.lane.b32.xlu0 %v3442, 31
    %v3570 = vpop.permute.xlu0 %3569
    %v3571 = vsel %vm353, %v3568, %v3570
    %v3572 = vsel %vm353, %v3566, %v3568
    %v3573 = vsel %vm353, %v3564, %v3566
    %v3574 = vsel %vm353, %v3570, %v3564
    %v3575 = vmul.f32 %v3574, %v364
    %v3576 = vmul.f32 %v3573, %v368
    %v3577 = vmul.f32 %v3572, %v372
    %v3578 = vmul.f32 %v3571, %v376
    %v3579 = vmul.f32 %v3575, 0.03394104
    %v3580 = vmul.f32 %v3576, 0.03394104
    %v3581 = vmul.f32 %v3577, 0.03394104
    %v3582 = vmul.f32 %v3578, 0.03394104
    %v3583 = vadd.f32 %v3559, %v3579
    %v3584 = vadd.f32 %v3560, %v3580
    %v3585 = vadd.f32 %v3561, %v3581
    %v3586 = vadd.f32 %v3562, %v3582
    %3587 = vrot.lane.b32.xlu0 %v3439, 29
    %v3588 = vpop.permute.xlu0 %3587
    %3589 = vrot.lane.b32.xlu0 %v3440, 29
    %v3590 = vpop.permute.xlu0 %3589
    %3591 = vrot.lane.b32.xlu0 %v3441, 29
    %v3592 = vpop.permute.xlu0 %3591
    %3593 = vrot.lane.b32.xlu0 %v3442, 29
    %v3594 = vpop.permute.xlu0 %3593
    %v3595 = vsel %vm393, %v3592, %v3594
    %v3596 = vsel %vm393, %v3590, %v3592
    %v3597 = vsel %vm393, %v3588, %v3590
    %v3598 = vsel %vm393, %v3594, %v3588
    %v3599 = vmul.f32 %v3598, %v404
    %v3600 = vmul.f32 %v3597, %v408
    %v3601 = vmul.f32 %v3596, %v412
    %v3602 = vmul.f32 %v3595, %v416
    %v3603 = vmul.f32 %v3599, 0.020586282
    %v3604 = vmul.f32 %v3600, 0.020586282
    %v3605 = vmul.f32 %v3601, 0.020586282
    %v3606 = vmul.f32 %v3602, 0.020586282
    %v3607 = vadd.f32 %v3583, %v3603
    %v3608 = vadd.f32 %v3584, %v3604
    %v3609 = vadd.f32 %v3585, %v3605
    %v3610 = vadd.f32 %v3586, %v3606
    %3611 = vrot.lane.b32.xlu0 %v3439, 28
    %v3612 = vpop.permute.xlu0 %3611
    %3613 = vrot.lane.b32.xlu0 %v3440, 28
    %v3614 = vpop.permute.xlu0 %3613
    %3615 = vrot.lane.b32.xlu0 %v3441, 28
    %v3616 = vpop.permute.xlu0 %3615
    %3617 = vrot.lane.b32.xlu0 %v3442, 28
    %v3618 = vpop.permute.xlu0 %3617
    %v3619 = vsel %vm433, %v3616, %v3618
    %v3620 = vsel %vm433, %v3614, %v3616
    %v3621 = vsel %vm433, %v3612, %v3614
    %v3622 = vsel %vm433, %v3618, %v3612
    %v3623 = vmul.f32 %v3622, %v444
    %v3624 = vmul.f32 %v3621, %v448
    %v3625 = vmul.f32 %v3620, %v452
    %v3626 = vmul.f32 %v3619, %v456
    %v3627 = vmul.f32 %v3623, 0.03394104
    %v3628 = vmul.f32 %v3624, 0.03394104
    %v3629 = vmul.f32 %v3625, 0.03394104
    %v3630 = vmul.f32 %v3626, 0.03394104
    %v3631 = vadd.f32 %v3607, %v3627
    %v3632 = vadd.f32 %v3608, %v3628
    %v3633 = vadd.f32 %v3609, %v3629
    %v3634 = vadd.f32 %v3610, %v3630
    %3635 = vrot.lane.b32.xlu0 %v3439, 27
    %v3636 = vpop.permute.xlu0 %3635
    %3637 = vrot.lane.b32.xlu0 %v3440, 27
    %v3638 = vpop.permute.xlu0 %3637
    %3639 = vrot.lane.b32.xlu0 %v3441, 27
    %v3640 = vpop.permute.xlu0 %3639
    %3641 = vrot.lane.b32.xlu0 %v3442, 27
    %v3642 = vpop.permute.xlu0 %3641
    %v3643 = vsel %vm473, %v3640, %v3642
    %v3644 = vsel %vm473, %v3638, %v3640
    %v3645 = vsel %vm473, %v3636, %v3638
    %v3646 = vsel %vm473, %v3642, %v3636
    %v3647 = vmul.f32 %v3646, %v484
    %v3648 = vmul.f32 %v3645, %v488
    %v3649 = vmul.f32 %v3644, %v492
    %v3650 = vmul.f32 %v3643, %v496
    %v3651 = vmul.f32 %v3647, 0.020586282
    %v3652 = vmul.f32 %v3648, 0.020586282
    %v3653 = vmul.f32 %v3649, 0.020586282
    %v3654 = vmul.f32 %v3650, 0.020586282
    %v3655 = vadd.f32 %v3631, %v3651
    %v3656 = vadd.f32 %v3632, %v3652
    %v3657 = vadd.f32 %v3633, %v3653
    %v3658 = vadd.f32 %v3634, %v3654
    %3659 = vrot.lane.b32.xlu0 %v3439, 5
    %v3660 = vpop.permute.xlu0 %3659
    %3661 = vrot.lane.b32.xlu0 %v3440, 5
    %v3662 = vpop.permute.xlu0 %3661
    %3663 = vrot.lane.b32.xlu0 %v3441, 5
    %v3664 = vpop.permute.xlu0 %3663
    %3665 = vrot.lane.b32.xlu0 %v3442, 5
    %v3666 = vpop.permute.xlu0 %3665
    %v3667 = vsel %vm513, %v3664, %v3666
    %v3668 = vsel %vm513, %v3662, %v3664
    %v3669 = vsel %vm513, %v3660, %v3662
    %v3670 = vsel %vm513, %v3666, %v3660
    %v3671 = vmul.f32 %v3670, %v524
    %v3672 = vmul.f32 %v3669, %v528
    %v3673 = vmul.f32 %v3668, %v532
    %v3674 = vmul.f32 %v3667, %v536
    %v3675 = vmul.f32 %v3671, 0.03394104
    %v3676 = vmul.f32 %v3672, 0.03394104
    %v3677 = vmul.f32 %v3673, 0.03394104
    %v3678 = vmul.f32 %v3674, 0.03394104
    %v3679 = vadd.f32 %v3655, %v3675
    %v3680 = vadd.f32 %v3656, %v3676
    %v3681 = vadd.f32 %v3657, %v3677
    %v3682 = vadd.f32 %v3658, %v3678
    %3683 = vrot.lane.b32.xlu0 %v3439, 4
    %v3684 = vpop.permute.xlu0 %3683
    %3685 = vrot.lane.b32.xlu0 %v3440, 4
    %v3686 = vpop.permute.xlu0 %3685
    %3687 = vrot.lane.b32.xlu0 %v3441, 4
    %v3688 = vpop.permute.xlu0 %3687
    %3689 = vrot.lane.b32.xlu0 %v3442, 4
    %v3690 = vpop.permute.xlu0 %3689
    %v3691 = vsel %vm553, %v3688, %v3690
    %v3692 = vsel %vm553, %v3686, %v3688
    %v3693 = vsel %vm553, %v3684, %v3686
    %v3694 = vsel %vm553, %v3690, %v3684
    %v3695 = vmul.f32 %v3694, %v564
    %v3696 = vmul.f32 %v3693, %v568
    %v3697 = vmul.f32 %v3692, %v572
    %v3698 = vmul.f32 %v3691, %v576
    %v3699 = vmul.f32 %v3695, 0.055959318
    %v3700 = vmul.f32 %v3696, 0.055959318
    %v3701 = vmul.f32 %v3697, 0.055959318
    %v3702 = vmul.f32 %v3698, 0.055959318
    %v3703 = vadd.f32 %v3679, %v3699
    %v3704 = vadd.f32 %v3680, %v3700
    %v3705 = vadd.f32 %v3681, %v3701
    %v3706 = vadd.f32 %v3682, %v3702
    %3707 = vrot.lane.b32.xlu0 %v3439, 3
    %v3708 = vpop.permute.xlu0 %3707
    %3709 = vrot.lane.b32.xlu0 %v3440, 3
    %v3710 = vpop.permute.xlu0 %3709
    %3711 = vrot.lane.b32.xlu0 %v3441, 3
    %v3712 = vpop.permute.xlu0 %3711
    %3713 = vrot.lane.b32.xlu0 %v3442, 3
    %v3714 = vpop.permute.xlu0 %3713
    %v3715 = vsel %vm593, %v3712, %v3714
    %v3716 = vsel %vm593, %v3710, %v3712
    %v3717 = vsel %vm593, %v3708, %v3710
    %v3718 = vsel %vm593, %v3714, %v3708
    %v3719 = vmul.f32 %v3718, %v604
    %v3720 = vmul.f32 %v3717, %v608
    %v3721 = vmul.f32 %v3716, %v612
    %v3722 = vmul.f32 %v3715, %v616
    %v3723 = vmul.f32 %v3719, 0.03394104
    %v3724 = vmul.f32 %v3720, 0.03394104
    %v3725 = vmul.f32 %v3721, 0.03394104
    %v3726 = vmul.f32 %v3722, 0.03394104
    %v3727 = vadd.f32 %v3703, %v3723
    %v3728 = vadd.f32 %v3704, %v3724
    %v3729 = vadd.f32 %v3705, %v3725
    %v3730 = vadd.f32 %v3706, %v3726
    %3731 = vrot.lane.b32.xlu0 %v3439, 1
    %v3732 = vpop.permute.xlu0 %3731
    %3733 = vrot.lane.b32.xlu0 %v3440, 1
    %v3734 = vpop.permute.xlu0 %3733
    %3735 = vrot.lane.b32.xlu0 %v3441, 1
    %v3736 = vpop.permute.xlu0 %3735
    %3737 = vrot.lane.b32.xlu0 %v3442, 1
    %v3738 = vpop.permute.xlu0 %3737
    %v3739 = vsel %vm633, %v3736, %v3738
    %v3740 = vsel %vm633, %v3734, %v3736
    %v3741 = vsel %vm633, %v3732, %v3734
    %v3742 = vsel %vm633, %v3738, %v3732
    %v3743 = vmul.f32 %v3742, %v644
    %v3744 = vmul.f32 %v3741, %v648
    %v3745 = vmul.f32 %v3740, %v652
    %v3746 = vmul.f32 %v3739, %v656
    %v3747 = vmul.f32 %v3743, 0.055959318
    %v3748 = vmul.f32 %v3744, 0.055959318
    %v3749 = vmul.f32 %v3745, 0.055959318
    %v3750 = vmul.f32 %v3746, 0.055959318
    %v3751 = vadd.f32 %v3727, %v3747
    %v3752 = vadd.f32 %v3728, %v3748
    %v3753 = vadd.f32 %v3729, %v3749
    %v3754 = vadd.f32 %v3730, %v3750
    %v3755 = vmul.f32 %v3439, %v671
    %v3756 = vmul.f32 %v3440, %v675
    %v3757 = vmul.f32 %v3441, %v679
    %v3758 = vmul.f32 %v3442, %v683
    %v3759 = vmul.f32 %v3755, 0.09226132
    %v3760 = vmul.f32 %v3756, 0.09226132
    %v3761 = vmul.f32 %v3757, 0.09226132
    %v3762 = vmul.f32 %v3758, 0.09226132
    %v3763 = vadd.f32 %v3751, %v3759
    %v3764 = vadd.f32 %v3752, %v3760
    %v3765 = vadd.f32 %v3753, %v3761
    %v3766 = vadd.f32 %v3754, %v3762
    %3767 = vrot.lane.b32.xlu0 %v3439, 127
    %v3768 = vpop.permute.xlu0 %3767
    %3769 = vrot.lane.b32.xlu0 %v3440, 127
    %v3770 = vpop.permute.xlu0 %3769
    %3771 = vrot.lane.b32.xlu0 %v3441, 127
    %v3772 = vpop.permute.xlu0 %3771
    %3773 = vrot.lane.b32.xlu0 %v3442, 127
    %v3774 = vpop.permute.xlu0 %3773
    %v3775 = vsel %vm715, %v3772, %v3774
    %v3776 = vsel %vm715, %v3770, %v3772
    %v3777 = vsel %vm715, %v3768, %v3770
    %v3778 = vsel %vm715, %v3774, %v3768
    %v3779 = vmul.f32 %v3777, %v726
    %v3780 = vmul.f32 %v3776, %v730
    %v3781 = vmul.f32 %v3775, %v734
    %v3782 = vmul.f32 %v3778, %v738
    %v3783 = vmul.f32 %v3779, 0.055959318
    %v3784 = vmul.f32 %v3780, 0.055959318
    %v3785 = vmul.f32 %v3781, 0.055959318
    %v3786 = vmul.f32 %v3782, 0.055959318
    %v3787 = vadd.f32 %v3763, %v3783
    %v3788 = vadd.f32 %v3764, %v3784
    %v3789 = vadd.f32 %v3765, %v3785
    %v3790 = vadd.f32 %v3766, %v3786
    %3791 = vrot.lane.b32.xlu0 %v3439, 125
    %v3792 = vpop.permute.xlu0 %3791
    %3793 = vrot.lane.b32.xlu0 %v3440, 125
    %v3794 = vpop.permute.xlu0 %3793
    %3795 = vrot.lane.b32.xlu0 %v3441, 125
    %v3796 = vpop.permute.xlu0 %3795
    %3797 = vrot.lane.b32.xlu0 %v3442, 125
    %v3798 = vpop.permute.xlu0 %3797
    %v3799 = vsel %vm755, %v3796, %v3798
    %v3800 = vsel %vm755, %v3794, %v3796
    %v3801 = vsel %vm755, %v3792, %v3794
    %v3802 = vsel %vm755, %v3798, %v3792
    %v3803 = vmul.f32 %v3801, %v766
    %v3804 = vmul.f32 %v3800, %v770
    %v3805 = vmul.f32 %v3799, %v774
    %v3806 = vmul.f32 %v3802, %v778
    %v3807 = vmul.f32 %v3803, 0.03394104
    %v3808 = vmul.f32 %v3804, 0.03394104
    %v3809 = vmul.f32 %v3805, 0.03394104
    %v3810 = vmul.f32 %v3806, 0.03394104
    %v3811 = vadd.f32 %v3787, %v3807
    %v3812 = vadd.f32 %v3788, %v3808
    %v3813 = vadd.f32 %v3789, %v3809
    %v3814 = vadd.f32 %v3790, %v3810
    %3815 = vrot.lane.b32.xlu0 %v3439, 124
    %v3816 = vpop.permute.xlu0 %3815
    %3817 = vrot.lane.b32.xlu0 %v3440, 124
    %v3818 = vpop.permute.xlu0 %3817
    %3819 = vrot.lane.b32.xlu0 %v3441, 124
    %v3820 = vpop.permute.xlu0 %3819
    %3821 = vrot.lane.b32.xlu0 %v3442, 124
    %v3822 = vpop.permute.xlu0 %3821
    %v3823 = vsel %vm795, %v3820, %v3822
    %v3824 = vsel %vm795, %v3818, %v3820
    %v3825 = vsel %vm795, %v3816, %v3818
    %v3826 = vsel %vm795, %v3822, %v3816
    %v3827 = vmul.f32 %v3825, %v806
    %v3828 = vmul.f32 %v3824, %v810
    %v3829 = vmul.f32 %v3823, %v814
    %v3830 = vmul.f32 %v3826, %v818
    %v3831 = vmul.f32 %v3827, 0.055959318
    %v3832 = vmul.f32 %v3828, 0.055959318
    %v3833 = vmul.f32 %v3829, 0.055959318
    %v3834 = vmul.f32 %v3830, 0.055959318
    %v3835 = vadd.f32 %v3811, %v3831
    %v3836 = vadd.f32 %v3812, %v3832
    %v3837 = vadd.f32 %v3813, %v3833
    %v3838 = vadd.f32 %v3814, %v3834
    %3839 = vrot.lane.b32.xlu0 %v3439, 123
    %v3840 = vpop.permute.xlu0 %3839
    %3841 = vrot.lane.b32.xlu0 %v3440, 123
    %v3842 = vpop.permute.xlu0 %3841
    %3843 = vrot.lane.b32.xlu0 %v3441, 123
    %v3844 = vpop.permute.xlu0 %3843
    %3845 = vrot.lane.b32.xlu0 %v3442, 123
    %v3846 = vpop.permute.xlu0 %3845
    %v3847 = vsel %vm835, %v3844, %v3846
    %v3848 = vsel %vm835, %v3842, %v3844
    %v3849 = vsel %vm835, %v3840, %v3842
    %v3850 = vsel %vm835, %v3846, %v3840
    %v3851 = vmul.f32 %v3849, %v846
    %v3852 = vmul.f32 %v3848, %v850
    %v3853 = vmul.f32 %v3847, %v854
    %v3854 = vmul.f32 %v3850, %v858
    %v3855 = vmul.f32 %v3851, 0.03394104
    %v3856 = vmul.f32 %v3852, 0.03394104
    %v3857 = vmul.f32 %v3853, 0.03394104
    %v3858 = vmul.f32 %v3854, 0.03394104
    %v3859 = vadd.f32 %v3835, %v3855
    %v3860 = vadd.f32 %v3836, %v3856
    %v3861 = vadd.f32 %v3837, %v3857
    %v3862 = vadd.f32 %v3838, %v3858
    %3863 = vrot.lane.b32.xlu0 %v3439, 101
    %v3864 = vpop.permute.xlu0 %3863
    %3865 = vrot.lane.b32.xlu0 %v3440, 101
    %v3866 = vpop.permute.xlu0 %3865
    %3867 = vrot.lane.b32.xlu0 %v3441, 101
    %v3868 = vpop.permute.xlu0 %3867
    %3869 = vrot.lane.b32.xlu0 %v3442, 101
    %v3870 = vpop.permute.xlu0 %3869
    %v3871 = vsel %vm875, %v3868, %v3870
    %v3872 = vsel %vm875, %v3866, %v3868
    %v3873 = vsel %vm875, %v3864, %v3866
    %v3874 = vsel %vm875, %v3870, %v3864
    %v3875 = vmul.f32 %v3873, %v886
    %v3876 = vmul.f32 %v3872, %v890
    %v3877 = vmul.f32 %v3871, %v894
    %v3878 = vmul.f32 %v3874, %v898
    %v3879 = vmul.f32 %v3875, 0.020586282
    %v3880 = vmul.f32 %v3876, 0.020586282
    %v3881 = vmul.f32 %v3877, 0.020586282
    %v3882 = vmul.f32 %v3878, 0.020586282
    %v3883 = vadd.f32 %v3859, %v3879
    %v3884 = vadd.f32 %v3860, %v3880
    %v3885 = vadd.f32 %v3861, %v3881
    %v3886 = vadd.f32 %v3862, %v3882
    %3887 = vrot.lane.b32.xlu0 %v3439, 100
    %v3888 = vpop.permute.xlu0 %3887
    %3889 = vrot.lane.b32.xlu0 %v3440, 100
    %v3890 = vpop.permute.xlu0 %3889
    %3891 = vrot.lane.b32.xlu0 %v3441, 100
    %v3892 = vpop.permute.xlu0 %3891
    %3893 = vrot.lane.b32.xlu0 %v3442, 100
    %v3894 = vpop.permute.xlu0 %3893
    %v3895 = vsel %vm915, %v3892, %v3894
    %v3896 = vsel %vm915, %v3890, %v3892
    %v3897 = vsel %vm915, %v3888, %v3890
    %v3898 = vsel %vm915, %v3894, %v3888
    %v3899 = vmul.f32 %v3897, %v926
    %v3900 = vmul.f32 %v3896, %v930
    %v3901 = vmul.f32 %v3895, %v934
    %v3902 = vmul.f32 %v3898, %v938
    %v3903 = vmul.f32 %v3899, 0.03394104
    %v3904 = vmul.f32 %v3900, 0.03394104
    %v3905 = vmul.f32 %v3901, 0.03394104
    %v3906 = vmul.f32 %v3902, 0.03394104
    %v3907 = vadd.f32 %v3883, %v3903
    %v3908 = vadd.f32 %v3884, %v3904
    %v3909 = vadd.f32 %v3885, %v3905
    %v3910 = vadd.f32 %v3886, %v3906
    %3911 = vrot.lane.b32.xlu0 %v3439, 99
    %v3912 = vpop.permute.xlu0 %3911
    %3913 = vrot.lane.b32.xlu0 %v3440, 99
    %v3914 = vpop.permute.xlu0 %3913
    %3915 = vrot.lane.b32.xlu0 %v3441, 99
    %v3916 = vpop.permute.xlu0 %3915
    %3917 = vrot.lane.b32.xlu0 %v3442, 99
    %v3918 = vpop.permute.xlu0 %3917
    %v3919 = vsel %vm955, %v3916, %v3918
    %v3920 = vsel %vm955, %v3914, %v3916
    %v3921 = vsel %vm955, %v3912, %v3914
    %v3922 = vsel %vm955, %v3918, %v3912
    %v3923 = vmul.f32 %v3921, %v966
    %v3924 = vmul.f32 %v3920, %v970
    %v3925 = vmul.f32 %v3919, %v974
    %v3926 = vmul.f32 %v3922, %v978
    %v3927 = vmul.f32 %v3923, 0.020586282
    %v3928 = vmul.f32 %v3924, 0.020586282
    %v3929 = vmul.f32 %v3925, 0.020586282
    %v3930 = vmul.f32 %v3926, 0.020586282
    %v3931 = vadd.f32 %v3907, %v3927
    %v3932 = vadd.f32 %v3908, %v3928
    %v3933 = vadd.f32 %v3909, %v3929
    %v3934 = vadd.f32 %v3910, %v3930
    %3935 = vrot.lane.b32.xlu0 %v3439, 97
    %v3936 = vpop.permute.xlu0 %3935
    %3937 = vrot.lane.b32.xlu0 %v3440, 97
    %v3938 = vpop.permute.xlu0 %3937
    %3939 = vrot.lane.b32.xlu0 %v3441, 97
    %v3940 = vpop.permute.xlu0 %3939
    %3941 = vrot.lane.b32.xlu0 %v3442, 97
    %v3942 = vpop.permute.xlu0 %3941
    %v3943 = vsel %vm995, %v3940, %v3942
    %v3944 = vsel %vm995, %v3938, %v3940
    %v3945 = vsel %vm995, %v3936, %v3938
    %v3946 = vsel %vm995, %v3942, %v3936
    %v3947 = vmul.f32 %v3945, %v1006
    %v3948 = vmul.f32 %v3944, %v1010
    %v3949 = vmul.f32 %v3943, %v1014
    %v3950 = vmul.f32 %v3946, %v1018
    %v3951 = vmul.f32 %v3947, 0.03394104
    %v3952 = vmul.f32 %v3948, 0.03394104
    %v3953 = vmul.f32 %v3949, 0.03394104
    %v3954 = vmul.f32 %v3950, 0.03394104
    %v3955 = vadd.f32 %v3931, %v3951
    %v3956 = vadd.f32 %v3932, %v3952
    %v3957 = vadd.f32 %v3933, %v3953
    %v3958 = vadd.f32 %v3934, %v3954
    %3959 = vrot.lane.b32.xlu0 %v3439, 96
    %v3960 = vpop.permute.xlu0 %3959
    %3961 = vrot.lane.b32.xlu0 %v3440, 96
    %v3962 = vpop.permute.xlu0 %3961
    %3963 = vrot.lane.b32.xlu0 %v3441, 96
    %v3964 = vpop.permute.xlu0 %3963
    %3965 = vrot.lane.b32.xlu0 %v3442, 96
    %v3966 = vpop.permute.xlu0 %3965
    %v3967 = vsel %vm1035, %v3964, %v3966
    %v3968 = vsel %vm1035, %v3962, %v3964
    %v3969 = vsel %vm1035, %v3960, %v3962
    %v3970 = vsel %vm1035, %v3966, %v3960
    %v3971 = vmul.f32 %v3969, %v1046
    %v3972 = vmul.f32 %v3968, %v1050
    %v3973 = vmul.f32 %v3967, %v1054
    %v3974 = vmul.f32 %v3970, %v1058
    %v3975 = vmul.f32 %v3971, 0.055959318
    %v3976 = vmul.f32 %v3972, 0.055959318
    %v3977 = vmul.f32 %v3973, 0.055959318
    %v3978 = vmul.f32 %v3974, 0.055959318
    %v3979 = vadd.f32 %v3955, %v3975
    %v3980 = vadd.f32 %v3956, %v3976
    %v3981 = vadd.f32 %v3957, %v3977
    %v3982 = vadd.f32 %v3958, %v3978
    %3983 = vrot.lane.b32.xlu0 %v3439, 95
    %v3984 = vpop.permute.xlu0 %3983
    %3985 = vrot.lane.b32.xlu0 %v3440, 95
    %v3986 = vpop.permute.xlu0 %3985
    %3987 = vrot.lane.b32.xlu0 %v3441, 95
    %v3988 = vpop.permute.xlu0 %3987
    %3989 = vrot.lane.b32.xlu0 %v3442, 95
    %v3990 = vpop.permute.xlu0 %3989
    %v3991 = vsel %vm1075, %v3988, %v3990
    %v3992 = vsel %vm1075, %v3986, %v3988
    %v3993 = vsel %vm1075, %v3984, %v3986
    %v3994 = vsel %vm1075, %v3990, %v3984
    %v3995 = vmul.f32 %v3993, %v1086
    %v3996 = vmul.f32 %v3992, %v1090
    %v3997 = vmul.f32 %v3991, %v1094
    %v3998 = vmul.f32 %v3994, %v1098
    %v3999 = vmul.f32 %v3995, 0.03394104
    %v4000 = vmul.f32 %v3996, 0.03394104
    %v4001 = vmul.f32 %v3997, 0.03394104
    %v4002 = vmul.f32 %v3998, 0.03394104
    %v4003 = vadd.f32 %v3979, %v3999
    %v4004 = vadd.f32 %v3980, %v4000
    %v4005 = vadd.f32 %v3981, %v4001
    %v4006 = vadd.f32 %v3982, %v4002
    %4007 = vrot.lane.b32.xlu0 %v3439, 93
    %v4008 = vpop.permute.xlu0 %4007
    %4009 = vrot.lane.b32.xlu0 %v3440, 93
    %v4010 = vpop.permute.xlu0 %4009
    %4011 = vrot.lane.b32.xlu0 %v3441, 93
    %v4012 = vpop.permute.xlu0 %4011
    %4013 = vrot.lane.b32.xlu0 %v3442, 93
    %v4014 = vpop.permute.xlu0 %4013
    %v4015 = vsel %vm1115, %v4012, %v4014
    %v4016 = vsel %vm1115, %v4010, %v4012
    %v4017 = vsel %vm1115, %v4008, %v4010
    %v4018 = vsel %vm1115, %v4014, %v4008
    %v4019 = vmul.f32 %v4017, %v1126
    %v4020 = vmul.f32 %v4016, %v1130
    %v4021 = vmul.f32 %v4015, %v1134
    %v4022 = vmul.f32 %v4018, %v1138
    %v4023 = vmul.f32 %v4019, 0.020586282
    %v4024 = vmul.f32 %v4020, 0.020586282
    %v4025 = vmul.f32 %v4021, 0.020586282
    %v4026 = vmul.f32 %v4022, 0.020586282
    %v4027 = vadd.f32 %v4003, %v4023
    %v4028 = vadd.f32 %v4004, %v4024
    %v4029 = vadd.f32 %v4005, %v4025
    %v4030 = vadd.f32 %v4006, %v4026
    %4031 = vrot.lane.b32.xlu0 %v3439, 92
    %v4032 = vpop.permute.xlu0 %4031
    %4033 = vrot.lane.b32.xlu0 %v3440, 92
    %v4034 = vpop.permute.xlu0 %4033
    %4035 = vrot.lane.b32.xlu0 %v3441, 92
    %v4036 = vpop.permute.xlu0 %4035
    %4037 = vrot.lane.b32.xlu0 %v3442, 92
    %v4038 = vpop.permute.xlu0 %4037
    %v4039 = vsel %vm1155, %v4036, %v4038
    %v4040 = vsel %vm1155, %v4034, %v4036
    %v4041 = vsel %vm1155, %v4032, %v4034
    %v4042 = vsel %vm1155, %v4038, %v4032
    %v4043 = vmul.f32 %v4041, %v1166
    %v4044 = vmul.f32 %v4040, %v1170
    %v4045 = vmul.f32 %v4039, %v1174
    %v4046 = vmul.f32 %v4042, %v1178
    %v4047 = vmul.f32 %v4043, 0.03394104
    %v4048 = vmul.f32 %v4044, 0.03394104
    %v4049 = vmul.f32 %v4045, 0.03394104
    %v4050 = vmul.f32 %v4046, 0.03394104
    %v4051 = vadd.f32 %v4027, %v4047
    %v4052 = vadd.f32 %v4028, %v4048
    %v4053 = vadd.f32 %v4029, %v4049
    %v4054 = vadd.f32 %v4030, %v4050
    %4055 = vrot.lane.b32.xlu0 %v3439, 91
    %v4056 = vpop.permute.xlu0 %4055
    %4057 = vrot.lane.b32.xlu0 %v3440, 91
    %v4058 = vpop.permute.xlu0 %4057
    %4059 = vrot.lane.b32.xlu0 %v3441, 91
    %v4060 = vpop.permute.xlu0 %4059
    %4061 = vrot.lane.b32.xlu0 %v3442, 91
    %v4062 = vpop.permute.xlu0 %4061
    %v4063 = vsel %vm1195, %v4060, %v4062
    %v4064 = vsel %vm1195, %v4058, %v4060
    %v4065 = vsel %vm1195, %v4056, %v4058
    %v4066 = vsel %vm1195, %v4062, %v4056
    %v4067 = vmul.f32 %v4065, %v1206
    %v4068 = vmul.f32 %v4064, %v1210
    %v4069 = vmul.f32 %v4063, %v1214
    %v4070 = vmul.f32 %v4066, %v1218
    %v4071 = vmul.f32 %v4067, 0.020586282
    %v4072 = vmul.f32 %v4068, 0.020586282
    %v4073 = vmul.f32 %v4069, 0.020586282
    %v4074 = vmul.f32 %v4070, 0.020586282
    %v4075 = vadd.f32 %v4051, %v4071
    %v4076 = vadd.f32 %v4052, %v4072
    %v4077 = vadd.f32 %v4053, %v4073
    %v4078 = vadd.f32 %v4054, %v4074
    %v4079 = vpack.c.bf16 %v4075, %v4075
    %v4080 = vpack.c.bf16 %v4076, %v4076
    %v4081 = vpack.c.bf16 %v4077, %v4077
    %v4082 = vpack.c.bf16 %v4078, %v4078
    %v4083 = vld [vmem:[#allocation6] sm:$0xf]
    %v4084 = vld [vmem:[#allocation6 + $0x4] sm:$0xf]
    %v4085 = vld [vmem:[#allocation6 + $0x8] sm:$0xf]
    %v4086 = vld [vmem:[#allocation6 + $0xc] sm:$0xf]
    %v4087 = vld [vmem:[#allocation6 + $0x10] sm:$0xf]
    %v4088 = vld [vmem:[#allocation6 + $0x14] sm:$0xf]
    %v4089 = vld [vmem:[#allocation6 + $0x18] sm:$0x7]
    %v4097 = vunpack.c.l.b16 %v4083
    %v4098 = vunpack.c.l.b16 %v4084
    %v4099 = vunpack.c.l.b16 %v4085
    %v4100 = vunpack.c.l.b16 %v4086
    %v4101 = vunpack.c.l.b16 %v4087
    %v4102 = vunpack.c.l.b16 %v4088
    %v4103 = vunpack.c.l.b16 %v4089
    %v4104 = vpack.c.b16 %v4098, %v4097
    %v4105 = vpack.c.b16 %v4100, %v4099
    %v4106 = vpack.c.b16 %v4102, %v4101
    %v4107 = vpack.c.b16 %v4103, %v4103
    %vm4108 = vcmask 15360
    %v4110 = vsel %vm4108, %v4104, 0
    %v4113 = vsel %vm4108, %v4105, 0
    %v4116 = vsel %vm4108, %v4106, 0
    %v4119 = vsel %vm4108, %v4107, 0
    %vm4121 = vcmask 1040384
    %v4123 = vsel %vm4121, %v4079, 0
    %v4126 = vsel %vm4121, %v4080, 0
    %v4129 = vsel %vm4121, %v4081, 0
    %v4132 = vsel %vm4121, %v4082, 0
    %4134 = vmatprep.subr.bf16.mxu0 %v4126
    %4135 = vmatpush1.bf16.msra.mxu0 %v4123
    %4136 = vmatprep.subr.bf16.mxu0 0
    %4137 = vmatpush1.bf16.msra.mxu0 0
    %4138 = vmatprep.subr.bf16.mxu0 0
    %4139 = vmatpush1.bf16.msra.mxu0 0
    %4140 = vmatprep.subr.bf16.mxu0 0
    %4141 = vmatpush1.bf16.msra.mxu0 0
    %4142 = vmatprep.subr.bf16.mxu0 0
    %4143 = vmatpush1.bf16.msra.mxu0 0
    %4144 = vmatprep.subr.bf16.mxu0 0
    %4145 = vmatpush1.bf16.msra.mxu0 0
    %4146 = vmatprep.subr.bf16.mxu0 0
    %4147 = vmatpush1.bf16.msra.mxu0 0
    %4148 = vmatprep.subr.bf16.mxu0 0
    %4149 = vmatpush1.bf16.msra.mxu0 0
    %4150 = vmatprep.subr.bf16.mxu0 0
    %4151 = vmatpush1.bf16.msra.mxu0 0
    %4152 = vmatprep.subr.bf16.mxu0 0
    %4153 = vmatpush1.bf16.msra.mxu0 0
    %4154 = vmatprep.subr.bf16.mxu0 0
    %4155 = vmatpush1.bf16.msra.mxu0 0
    %4156 = vmatprep.subr.bf16.mxu0 0
    %4157 = vmatpush1.bf16.msra.mxu0 0
    %4158 = vmatprep.subr.bf16.mxu0 0
    %4159 = vmatpush1.bf16.msra.mxu0 0
    %4160 = vmatprep.subr.bf16.mxu0 0
    %4161 = vmatpush1.bf16.msra.mxu0 0
    %4162 = vmatprep.subr.bf16.mxu0 0
    %4163 = vmatpush1.bf16.msra.mxu0 0
    %4164 = vmatprep.subr.bf16.mxu0 0
    %4165 = vmatpush1.bf16.msra.mxu0 0
    %4166 = vmatprep.mubr.bf16.mxu0 0
    %4167 = vmatmul.mubr.bf16.gmra.mrb[0].mxu0 %v4110
    %v4168 = vpop.f32.mrb[0].mxu0
    %v4169 = vadd.f32 0.0, %v4168
    %v4170 = vpop.f32.mrb[0].mxu0
    %v4171 = vadd.f32 0.0, %v4170
    %v4172 = vpop.f32.mrb[0].mxu0
    %v4173 = vadd.f32 0.0, %v4172
    %v4174 = vpop.f32.mrb[0].mxu0
    %v4175 = vadd.f32 0.0, %v4174
    %4176 = vmatprep.mubr.bf16.mxu0 0
    %4177 = vmatmul.mubr.bf16.gmra.mrb[0].mxu0 %v4113
    %v4178 = vpop.f32.mrb[0].mxu0
    %v4179 = vadd.f32 0.0, %v4178
    %v4180 = vpop.f32.mrb[0].mxu0
    %v4181 = vadd.f32 0.0, %v4180
    %v4182 = vpop.f32.mrb[0].mxu0
    %v4183 = vadd.f32 0.0, %v4182
    %v4184 = vpop.f32.mrb[0].mxu0
    %v4185 = vadd.f32 0.0, %v4184
    %4186 = vmatprep.mubr.bf16.mxu0 0
    %4187 = vmatmul.mubr.bf16.gmra.mrb[0].mxu0 %v4116
    %v4188 = vpop.f32.mrb[0].mxu0
    %v4189 = vadd.f32 0.0, %v4188
    %v4190 = vpop.f32.mrb[0].mxu0
    %v4191 = vadd.f32 0.0, %v4190
    %v4192 = vpop.f32.mrb[0].mxu0
    %v4193 = vadd.f32 0.0, %v4192
    %v4194 = vpop.f32.mrb[0].mxu0
    %v4195 = vadd.f32 0.0, %v4194
    %4196 = vmatprep.mubr.bf16.mxu0 0
    %4197 = vmatmul.mubr.bf16.gmra.mrb[0].mxu0 %v4119
    %v4198 = vpop.f32.mrb[0].mxu0
    %v4199 = vadd.f32 0.0, %v4198
    %v4200 = vpop.f32.mrb[0].mxu0
    %v4201 = vadd.f32 0.0, %v4200
    %v4202 = vpop.f32.mrb[0].mxu0
    %v4203 = vpop.f32.mrb[0].mxu0
    %4204 = vdwg.mxu0
    %4205 = vmatprep.subr.bf16.mxu0 %v4132
    %4206 = vmatpush1.bf16.msra.mxu0 %v4129
    %4207 = vmatprep.subr.bf16.mxu0 0
    %4208 = vmatpush1.bf16.msra.mxu0 0
    %4209 = vmatprep.subr.bf16.mxu0 0
    %4210 = vmatpush1.bf16.msra.mxu0 0
    %4211 = vmatprep.subr.bf16.mxu0 0
    %4212 = vmatpush1.bf16.msra.mxu0 0
    %4213 = vmatprep.subr.bf16.mxu0 0
    %4214 = vmatpush1.bf16.msra.mxu0 0
    %4215 = vmatprep.subr.bf16.mxu0 0
    %4216 = vmatpush1.bf16.msra.mxu0 0
    %4217 = vmatprep.subr.bf16.mxu0 0
    %4218 = vmatpush1.bf16.msra.mxu0 0
    %4219 = vmatprep.subr.bf16.mxu0 0
    %4220 = vmatpush1.bf16.msra.mxu0 0
    %4221 = vmatprep.subr.bf16.mxu0 0
    %4222 = vmatpush1.bf16.msra.mxu0 0
    %4223 = vmatprep.subr.bf16.mxu0 0
    %4224 = vmatpush1.bf16.msra.mxu0 0
    %4225 = vmatprep.subr.bf16.mxu0 0
    %4226 = vmatpush1.bf16.msra.mxu0 0
    %4227 = vmatprep.subr.bf16.mxu0 0
    %4228 = vmatpush1.bf16.msra.mxu0 0
    %4229 = vmatprep.subr.bf16.mxu0 0
    %4230 = vmatpush1.bf16.msra.mxu0 0
    %4231 = vmatprep.subr.bf16.mxu0 0
    %4232 = vmatpush1.bf16.msra.mxu0 0
    %4233 = vmatprep.subr.bf16.mxu0 0
    %4234 = vmatpush1.bf16.msra.mxu0 0
    %4235 = vmatprep.subr.bf16.mxu0 0
    %4236 = vmatpush1.bf16.msra.mxu0 0
    %4237 = vmatprep.mubr.bf16.mxu0 0
    %4238 = vmatmul.mubr.bf16.gmra.mrb[0].mxu0 %v4110
    %v4239 = vpop.f32.mrb[0].mxu0
    %v4240 = vadd.f32 0.0, %v4239
    %v4241 = vpop.f32.mrb[0].mxu0
    %v4242 = vadd.f32 0.0, %v4241
    %v4243 = vpop.f32.mrb[0].mxu0
    %v4244 = vadd.f32 0.0, %v4243
    %v4245 = vpop.f32.mrb[0].mxu0
    %v4246 = vadd.f32 0.0, %v4245
    %4247 = vmatprep.mubr.bf16.mxu0 0
    %4248 = vmatmul.mubr.bf16.gmra.mrb[0].mxu0 %v4113
    %v4249 = vpop.f32.mrb[0].mxu0
    %v4250 = vadd.f32 0.0, %v4249
    %v4251 = vpop.f32.mrb[0].mxu0
    %v4252 = vadd.f32 0.0, %v4251
    %v4253 = vpop.f32.mrb[0].mxu0
    %v4254 = vadd.f32 0.0, %v4253
    %v4255 = vpop.f32.mrb[0].mxu0
    %v4256 = vadd.f32 0.0, %v4255
    %4257 = vmatprep.mubr.bf16.mxu0 0
    %4258 = vmatmul.mubr.bf16.gmra.mrb[0].mxu0 %v4116
    %v4259 = vpop.f32.mrb[0].mxu0
    %v4260 = vadd.f32 0.0, %v4259
    %v4261 = vpop.f32.mrb[0].mxu0
    %v4262 = vadd.f32 0.0, %v4261
    %v4263 = vpop.f32.mrb[0].mxu0
    %v4264 = vadd.f32 0.0, %v4263
    %v4265 = vpop.f32.mrb[0].mxu0
    %v4266 = vadd.f32 0.0, %v4265
    %4267 = vmatprep.mubr.bf16.mxu0 0
    %4268 = vmatmul.mubr.bf16.gmra.mrb[0].mxu0 %v4119
    %v4269 = vpop.f32.mrb[0].mxu0
    %v4270 = vadd.f32 0.0, %v4269
    %v4271 = vpop.f32.mrb[0].mxu0
    %v4272 = vadd.f32 0.0, %v4271
    %v4273 = vpop.f32.mrb[0].mxu0
    %v4274 = vpop.f32.mrb[0].mxu0
    %4275 = vdwg.mxu0
    %4276 = vrot.lane.b32.xlu0 %v4169, 37
    %v4277 = vpop.permute.xlu0 %4276
    %4278 = vrot.lane.b32.xlu0 %v4171, 37
    %v4279 = vpop.permute.xlu0 %4278
    %4280 = vrot.lane.b32.xlu0 %v4240, 37
    %v4281 = vpop.permute.xlu0 %4280
    %4282 = vrot.lane.b32.xlu0 %v4242, 37
    %v4283 = vpop.permute.xlu0 %4282
    %v4284 = vsel %vm154, %v4281, %v4283
    %v4285 = vsel %vm154, %v4279, %v4281
    %v4286 = vsel %vm154, %v4277, %v4279
    %v4287 = vsel %vm154, %v4283, %v4277
    %v4288 = vmul.f32 %v4287, %v164
    %v4289 = vmul.f32 %v4286, %v168
    %v4290 = vmul.f32 %v4285, %v172
    %v4291 = vmul.f32 %v4284, %v176
    %v4292 = vadd.f32 %v4288, 0.0
    %v4293 = vadd.f32 %v4289, 0.0
    %v4294 = vadd.f32 %v4290, 0.0
    %v4295 = vadd.f32 %v4291, 0.0
    %v4300 = vrot.slane %v4169, 2
    %v4301 = vrot.slane %v4171, 2
    %v4302 = vrot.slane %v4240, 2
    %v4303 = vrot.slane %v4242, 2
    %4308 = vrot.lane.b32.xlu0 %v4300, 36
    %v4309 = vpop.permute.xlu0 %4308
    %4310 = vrot.lane.b32.xlu0 %v4301, 36
    %v4311 = vpop.permute.xlu0 %4310
    %4312 = vrot.lane.b32.xlu0 %v4302, 36
    %v4313 = vpop.permute.xlu0 %4312
    %4314 = vrot.lane.b32.xlu0 %v4303, 36
    %v4315 = vpop.permute.xlu0 %4314
    %v4316 = vsel %vm193, %v4313, %v4315
    %v4317 = vsel %vm193, %v4311, %v4313
    %v4318 = vsel %vm193, %v4309, %v4311
    %v4319 = vsel %vm193, %v4315, %v4309
    %v4320 = vmul.f32 %v4319, %v204
    %v4321 = vmul.f32 %v4318, %v208
    %v4322 = vmul.f32 %v4317, %v212
    %v4323 = vmul.f32 %v4316, %v216
    %v4324 = vadd.f32 %v4292, %v4320
    %v4325 = vadd.f32 %v4293, %v4321
    %v4326 = vadd.f32 %v4294, %v4322
    %v4327 = vadd.f32 %v4295, %v4323
    %v4328 = vrot.slane %v4169, 4
    %v4329 = vrot.slane %v4171, 4
    %v4330 = vrot.slane %v4240, 4
    %v4331 = vrot.slane %v4242, 4
    %4336 = vrot.lane.b32.xlu0 %v4328, 35
    %v4337 = vpop.permute.xlu0 %4336
    %4338 = vrot.lane.b32.xlu0 %v4329, 35
    %v4339 = vpop.permute.xlu0 %4338
    %4340 = vrot.lane.b32.xlu0 %v4330, 35
    %v4341 = vpop.permute.xlu0 %4340
    %4342 = vrot.lane.b32.xlu0 %v4331, 35
    %v4343 = vpop.permute.xlu0 %4342
    %v4344 = vsel %vm233, %v4341, %v4343
    %v4345 = vsel %vm233, %v4339, %v4341
    %v4346 = vsel %vm233, %v4337, %v4339
    %v4347 = vsel %vm233, %v4343, %v4337
    %v4348 = vmul.f32 %v4347, %v244
    %v4349 = vmul.f32 %v4346, %v248
    %v4350 = vmul.f32 %v4345, %v252
    %v4351 = vmul.f32 %v4344, %v256
    %v4352 = vadd.f32 %v4324, %v4348
    %v4353 = vadd.f32 %v4325, %v4349
    %v4354 = vadd.f32 %v4326, %v4350
    %v4355 = vadd.f32 %v4327, %v4351
    %v4356 = vrot.slane %v4169, 6
    %v4357 = vrot.slane %v4171, 6
    %v4358 = vrot.slane %v4240, 6
    %v4359 = vrot.slane %v4242, 6
    %4364 = vrot.lane.b32.xlu0 %v4356, 33
    %v4365 = vpop.permute.xlu0 %4364
    %4366 = vrot.lane.b32.xlu0 %v4357, 33
    %v4367 = vpop.permute.xlu0 %4366
    %4368 = vrot.lane.b32.xlu0 %v4358, 33
    %v4369 = vpop.permute.xlu0 %4368
    %4370 = vrot.lane.b32.xlu0 %v4359, 33
    %v4371 = vpop.permute.xlu0 %4370
    %v4372 = vsel %vm273, %v4369, %v4371
    %v4373 = vsel %vm273, %v4367, %v4369
    %v4374 = vsel %vm273, %v4365, %v4367
    %v4375 = vsel %vm273, %v4371, %v4365
    %v4376 = vmul.f32 %v4375, %v284
    %v4377 = vmul.f32 %v4374, %v288
    %v4378 = vmul.f32 %v4373, %v292
    %v4379 = vmul.f32 %v4372, %v296
    %v4380 = vadd.f32 %v4352, %v4376
    %v4381 = vadd.f32 %v4353, %v4377
    %v4382 = vadd.f32 %v4354, %v4378
    %v4383 = vadd.f32 %v4355, %v4379
    %4384 = vrot.lane.b32.xlu0 %v4173, 32
    %v4385 = vpop.permute.xlu0 %4384
    %4386 = vrot.lane.b32.xlu0 %v4175, 32
    %v4387 = vpop.permute.xlu0 %4386
    %4388 = vrot.lane.b32.xlu0 %v4244, 32
    %v4389 = vpop.permute.xlu0 %4388
    %4390 = vrot.lane.b32.xlu0 %v4246, 32
    %v4391 = vpop.permute.xlu0 %4390
    %v4392 = vsel %vm313, %v4389, %v4391
    %v4393 = vsel %vm313, %v4387, %v4389
    %v4394 = vsel %vm313, %v4385, %v4387
    %v4395 = vsel %vm313, %v4391, %v4385
    %v4396 = vmul.f32 %v4395, %v324
    %v4397 = vmul.f32 %v4394, %v328
    %v4398 = vmul.f32 %v4393, %v332
    %v4399 = vmul.f32 %v4392, %v336
    %v4400 = vadd.f32 %v4380, %v4396
    %v4401 = vadd.f32 %v4381, %v4397
    %v4402 = vadd.f32 %v4382, %v4398
    %v4403 = vadd.f32 %v4383, %v4399
    %v4408 = vrot.slane %v4173, 2
    %v4409 = vrot.slane %v4175, 2
    %v4410 = vrot.slane %v4244, 2
    %v4411 = vrot.slane %v4246, 2
    %4416 = vrot.lane.b32.xlu0 %v4408, 31
    %v4417 = vpop.permute.xlu0 %4416
    %4418 = vrot.lane.b32.xlu0 %v4409, 31
    %v4419 = vpop.permute.xlu0 %4418
    %4420 = vrot.lane.b32.xlu0 %v4410, 31
    %v4421 = vpop.permute.xlu0 %4420
    %4422 = vrot.lane.b32.xlu0 %v4411, 31
    %v4423 = vpop.permute.xlu0 %4422
    %v4424 = vsel %vm353, %v4421, %v4423
    %v4425 = vsel %vm353, %v4419, %v4421
    %v4426 = vsel %vm353, %v4417, %v4419
    %v4427 = vsel %vm353, %v4423, %v4417
    %v4428 = vmul.f32 %v4427, %v364
    %v4429 = vmul.f32 %v4426, %v368
    %v4430 = vmul.f32 %v4425, %v372
    %v4431 = vmul.f32 %v4424, %v376
    %v4432 = vadd.f32 %v4400, %v4428
    %v4433 = vadd.f32 %v4401, %v4429
    %v4434 = vadd.f32 %v4402, %v4430
    %v4435 = vadd.f32 %v4403, %v4431
    %v4436 = vrot.slane %v4173, 4
    %v4437 = vrot.slane %v4175, 4
    %v4438 = vrot.slane %v4244, 4
    %v4439 = vrot.slane %v4246, 4
    %4444 = vrot.lane.b32.xlu0 %v4436, 29
    %v4445 = vpop.permute.xlu0 %4444
    %4446 = vrot.lane.b32.xlu0 %v4437, 29
    %v4447 = vpop.permute.xlu0 %4446
    %4448 = vrot.lane.b32.xlu0 %v4438, 29
    %v4449 = vpop.permute.xlu0 %4448
    %4450 = vrot.lane.b32.xlu0 %v4439, 29
    %v4451 = vpop.permute.xlu0 %4450
    %v4452 = vsel %vm393, %v4449, %v4451
    %v4453 = vsel %vm393, %v4447, %v4449
    %v4454 = vsel %vm393, %v4445, %v4447
    %v4455 = vsel %vm393, %v4451, %v4445
    %v4456 = vmul.f32 %v4455, %v404
    %v4457 = vmul.f32 %v4454, %v408
    %v4458 = vmul.f32 %v4453, %v412
    %v4459 = vmul.f32 %v4452, %v416
    %v4460 = vadd.f32 %v4432, %v4456
    %v4461 = vadd.f32 %v4433, %v4457
    %v4462 = vadd.f32 %v4434, %v4458
    %v4463 = vadd.f32 %v4435, %v4459
    %v4464 = vrot.slane %v4173, 6
    %v4465 = vrot.slane %v4175, 6
    %v4466 = vrot.slane %v4244, 6
    %v4467 = vrot.slane %v4246, 6
    %4472 = vrot.lane.b32.xlu0 %v4464, 28
    %v4473 = vpop.permute.xlu0 %4472
    %4474 = vrot.lane.b32.xlu0 %v4465, 28
    %v4475 = vpop.permute.xlu0 %4474
    %4476 = vrot.lane.b32.xlu0 %v4466, 28
    %v4477 = vpop.permute.xlu0 %4476
    %4478 = vrot.lane.b32.xlu0 %v4467, 28
    %v4479 = vpop.permute.xlu0 %4478
    %v4480 = vsel %vm433, %v4477, %v4479
    %v4481 = vsel %vm433, %v4475, %v4477
    %v4482 = vsel %vm433, %v4473, %v4475
    %v4483 = vsel %vm433, %v4479, %v4473
    %v4484 = vmul.f32 %v4483, %v444
    %v4485 = vmul.f32 %v4482, %v448
    %v4486 = vmul.f32 %v4481, %v452
    %v4487 = vmul.f32 %v4480, %v456
    %v4488 = vadd.f32 %v4460, %v4484
    %v4489 = vadd.f32 %v4461, %v4485
    %v4490 = vadd.f32 %v4462, %v4486
    %v4491 = vadd.f32 %v4463, %v4487
    %4492 = vrot.lane.b32.xlu0 %v4179, 27
    %v4493 = vpop.permute.xlu0 %4492
    %4494 = vrot.lane.b32.xlu0 %v4181, 27
    %v4495 = vpop.permute.xlu0 %4494
    %4496 = vrot.lane.b32.xlu0 %v4250, 27
    %v4497 = vpop.permute.xlu0 %4496
    %4498 = vrot.lane.b32.xlu0 %v4252, 27
    %v4499 = vpop.permute.xlu0 %4498
    %v4500 = vsel %vm473, %v4497, %v4499
    %v4501 = vsel %vm473, %v4495, %v4497
    %v4502 = vsel %vm473, %v4493, %v4495
    %v4503 = vsel %vm473, %v4499, %v4493
    %v4504 = vmul.f32 %v4503, %v484
    %v4505 = vmul.f32 %v4502, %v488
    %v4506 = vmul.f32 %v4501, %v492
    %v4507 = vmul.f32 %v4500, %v496
    %v4508 = vadd.f32 %v4488, %v4504
    %v4509 = vadd.f32 %v4489, %v4505
    %v4510 = vadd.f32 %v4490, %v4506
    %v4511 = vadd.f32 %v4491, %v4507
    %v4516 = vrot.slane %v4179, 2
    %v4517 = vrot.slane %v4181, 2
    %v4518 = vrot.slane %v4250, 2
    %v4519 = vrot.slane %v4252, 2
    %4524 = vrot.lane.b32.xlu0 %v4516, 5
    %v4525 = vpop.permute.xlu0 %4524
    %4526 = vrot.lane.b32.xlu0 %v4517, 5
    %v4527 = vpop.permute.xlu0 %4526
    %4528 = vrot.lane.b32.xlu0 %v4518, 5
    %v4529 = vpop.permute.xlu0 %4528
    %4530 = vrot.lane.b32.xlu0 %v4519, 5
    %v4531 = vpop.permute.xlu0 %4530
    %v4532 = vsel %vm513, %v4529, %v4531
    %v4533 = vsel %vm513, %v4527, %v4529
    %v4534 = vsel %vm513, %v4525, %v4527
    %v4535 = vsel %vm513, %v4531, %v4525
    %v4536 = vmul.f32 %v4535, %v524
    %v4537 = vmul.f32 %v4534, %v528
    %v4538 = vmul.f32 %v4533, %v532
    %v4539 = vmul.f32 %v4532, %v536
    %v4540 = vadd.f32 %v4508, %v4536
    %v4541 = vadd.f32 %v4509, %v4537
    %v4542 = vadd.f32 %v4510, %v4538
    %v4543 = vadd.f32 %v4511, %v4539
    %v4544 = vrot.slane %v4179, 4
    %v4545 = vrot.slane %v4181, 4
    %v4546 = vrot.slane %v4250, 4
    %v4547 = vrot.slane %v4252, 4
    %4552 = vrot.lane.b32.xlu0 %v4544, 4
    %v4553 = vpop.permute.xlu0 %4552
    %4554 = vrot.lane.b32.xlu0 %v4545, 4
    %v4555 = vpop.permute.xlu0 %4554
    %4556 = vrot.lane.b32.xlu0 %v4546, 4
    %v4557 = vpop.permute.xlu0 %4556
    %4558 = vrot.lane.b32.xlu0 %v4547, 4
    %v4559 = vpop.permute.xlu0 %4558
    %v4560 = vsel %vm553, %v4557, %v4559
    %v4561 = vsel %vm553, %v4555, %v4557
    %v4562 = vsel %vm553, %v4553, %v4555
    %v4563 = vsel %vm553, %v4559, %v4553
    %v4564 = vmul.f32 %v4563, %v564
    %v4565 = vmul.f32 %v4562, %v568
    %v4566 = vmul.f32 %v4561, %v572
    %v4567 = vmul.f32 %v4560, %v576
    %v4568 = vadd.f32 %v4540, %v4564
    %v4569 = vadd.f32 %v4541, %v4565
    %v4570 = vadd.f32 %v4542, %v4566
    %v4571 = vadd.f32 %v4543, %v4567
    %v4572 = vrot.slane %v4179, 6
    %v4573 = vrot.slane %v4181, 6
    %v4574 = vrot.slane %v4250, 6
    %v4575 = vrot.slane %v4252, 6
    %4580 = vrot.lane.b32.xlu0 %v4572, 3
    %v4581 = vpop.permute.xlu0 %4580
    %4582 = vrot.lane.b32.xlu0 %v4573, 3
    %v4583 = vpop.permute.xlu0 %4582
    %4584 = vrot.lane.b32.xlu0 %v4574, 3
    %v4585 = vpop.permute.xlu0 %4584
    %4586 = vrot.lane.b32.xlu0 %v4575, 3
    %v4587 = vpop.permute.xlu0 %4586
    %v4588 = vsel %vm593, %v4585, %v4587
    %v4589 = vsel %vm593, %v4583, %v4585
    %v4590 = vsel %vm593, %v4581, %v4583
    %v4591 = vsel %vm593, %v4587, %v4581
    %v4592 = vmul.f32 %v4591, %v604
    %v4593 = vmul.f32 %v4590, %v608
    %v4594 = vmul.f32 %v4589, %v612
    %v4595 = vmul.f32 %v4588, %v616
    %v4596 = vadd.f32 %v4568, %v4592
    %v4597 = vadd.f32 %v4569, %v4593
    %v4598 = vadd.f32 %v4570, %v4594
    %v4599 = vadd.f32 %v4571, %v4595
    %4600 = vrot.lane.b32.xlu0 %v4183, 1
    %v4601 = vpop.permute.xlu0 %4600
    %4602 = vrot.lane.b32.xlu0 %v4185, 1
    %v4603 = vpop.permute.xlu0 %4602
    %4604 = vrot.lane.b32.xlu0 %v4254, 1
    %v4605 = vpop.permute.xlu0 %4604
    %4606 = vrot.lane.b32.xlu0 %v4256, 1
    %v4607 = vpop.permute.xlu0 %4606
    %v4608 = vsel %vm633, %v4605, %v4607
    %v4609 = vsel %vm633, %v4603, %v4605
    %v4610 = vsel %vm633, %v4601, %v4603
    %v4611 = vsel %vm633, %v4607, %v4601
    %v4612 = vmul.f32 %v4611, %v644
    %v4613 = vmul.f32 %v4610, %v648
    %v4614 = vmul.f32 %v4609, %v652
    %v4615 = vmul.f32 %v4608, %v656
    %v4616 = vadd.f32 %v4596, %v4612
    %v4617 = vadd.f32 %v4597, %v4613
    %v4618 = vadd.f32 %v4598, %v4614
    %v4619 = vadd.f32 %v4599, %v4615
    %v4620 = vmul.f32 %v4183, %v671
    %v4621 = vmul.f32 %v4185, %v675
    %v4622 = vmul.f32 %v4254, %v679
    %v4623 = vmul.f32 %v4256, %v683
    %v4628 = vrot.slane %v4620, 2
    %v4629 = vrot.slane %v4621, 2
    %v4630 = vrot.slane %v4622, 2
    %v4631 = vrot.slane %v4623, 2
    %v4636 = vadd.f32 %v4616, %v4628
    %v4637 = vadd.f32 %v4617, %v4629
    %v4638 = vadd.f32 %v4618, %v4630
    %v4639 = vadd.f32 %v4619, %v4631
    %v4644 = vrot.slane %v4183, 4
    %v4645 = vrot.slane %v4185, 4
    %v4646 = vrot.slane %v4254, 4
    %v4647 = vrot.slane %v4256, 4
    %4652 = vrot.lane.b32.xlu0 %v4644, 127
    %v4653 = vpop.permute.xlu0 %4652
    %4654 = vrot.lane.b32.xlu0 %v4645, 127
    %v4655 = vpop.permute.xlu0 %4654
    %4656 = vrot.lane.b32.xlu0 %v4646, 127
    %v4657 = vpop.permute.xlu0 %4656
    %4658 = vrot.lane.b32.xlu0 %v4647, 127
    %v4659 = vpop.permute.xlu0 %4658
    %v4660 = vsel %vm715, %v4657, %v4659
    %v4661 = vsel %vm715, %v4655, %v4657
    %v4662 = vsel %vm715, %v4653, %v4655
    %v4663 = vsel %vm715, %v4659, %v4653
    %v4664 = vmul.f32 %v4662, %v726
    %v4665 = vmul.f32 %v4661, %v730
    %v4666 = vmul.f32 %v4660, %v734
    %v4667 = vmul.f32 %v4663, %v738
    %v4668 = vadd.f32 %v4636, %v4664
    %v4669 = vadd.f32 %v4637, %v4665
    %v4670 = vadd.f32 %v4638, %v4666
    %v4671 = vadd.f32 %v4639, %v4667
    %v4672 = vrot.slane %v4183, 6
    %v4673 = vrot.slane %v4185, 6
    %v4674 = vrot.slane %v4254, 6
    %v4675 = vrot.slane %v4256, 6
    %4680 = vrot.lane.b32.xlu0 %v4672, 125
    %v4681 = vpop.permute.xlu0 %4680
    %4682 = vrot.lane.b32.xlu0 %v4673, 125
    %v4683 = vpop.permute.xlu0 %4682
    %4684 = vrot.lane.b32.xlu0 %v4674, 125
    %v4685 = vpop.permute.xlu0 %4684
    %4686 = vrot.lane.b32.xlu0 %v4675, 125
    %v4687 = vpop.permute.xlu0 %4686
    %v4688 = vsel %vm755, %v4685, %v4687
    %v4689 = vsel %vm755, %v4683, %v4685
    %v4690 = vsel %vm755, %v4681, %v4683
    %v4691 = vsel %vm755, %v4687, %v4681
    %v4692 = vmul.f32 %v4690, %v766
    %v4693 = vmul.f32 %v4689, %v770
    %v4694 = vmul.f32 %v4688, %v774
    %v4695 = vmul.f32 %v4691, %v778
    %v4696 = vadd.f32 %v4668, %v4692
    %v4697 = vadd.f32 %v4669, %v4693
    %v4698 = vadd.f32 %v4670, %v4694
    %v4699 = vadd.f32 %v4671, %v4695
    %4700 = vrot.lane.b32.xlu0 %v4189, 124
    %v4701 = vpop.permute.xlu0 %4700
    %4702 = vrot.lane.b32.xlu0 %v4191, 124
    %v4703 = vpop.permute.xlu0 %4702
    %4704 = vrot.lane.b32.xlu0 %v4260, 124
    %v4705 = vpop.permute.xlu0 %4704
    %4706 = vrot.lane.b32.xlu0 %v4262, 124
    %v4707 = vpop.permute.xlu0 %4706
    %v4708 = vsel %vm795, %v4705, %v4707
    %v4709 = vsel %vm795, %v4703, %v4705
    %v4710 = vsel %vm795, %v4701, %v4703
    %v4711 = vsel %vm795, %v4707, %v4701
    %v4712 = vmul.f32 %v4710, %v806
    %v4713 = vmul.f32 %v4709, %v810
    %v4714 = vmul.f32 %v4708, %v814
    %v4715 = vmul.f32 %v4711, %v818
    %v4716 = vadd.f32 %v4696, %v4712
    %v4717 = vadd.f32 %v4697, %v4713
    %v4718 = vadd.f32 %v4698, %v4714
    %v4719 = vadd.f32 %v4699, %v4715
    %v4724 = vrot.slane %v4189, 2
    %v4725 = vrot.slane %v4191, 2
    %v4726 = vrot.slane %v4260, 2
    %v4727 = vrot.slane %v4262, 2
    %4732 = vrot.lane.b32.xlu0 %v4724, 123
    %v4733 = vpop.permute.xlu0 %4732
    %4734 = vrot.lane.b32.xlu0 %v4725, 123
    %v4735 = vpop.permute.xlu0 %4734
    %4736 = vrot.lane.b32.xlu0 %v4726, 123
    %v4737 = vpop.permute.xlu0 %4736
    %4738 = vrot.lane.b32.xlu0 %v4727, 123
    %v4739 = vpop.permute.xlu0 %4738
    %v4740 = vsel %vm835, %v4737, %v4739
    %v4741 = vsel %vm835, %v4735, %v4737
    %v4742 = vsel %vm835, %v4733, %v4735
    %v4743 = vsel %vm835, %v4739, %v4733
    %v4744 = vmul.f32 %v4742, %v846
    %v4745 = vmul.f32 %v4741, %v850
    %v4746 = vmul.f32 %v4740, %v854
    %v4747 = vmul.f32 %v4743, %v858
    %v4748 = vadd.f32 %v4716, %v4744
    %v4749 = vadd.f32 %v4717, %v4745
    %v4750 = vadd.f32 %v4718, %v4746
    %v4751 = vadd.f32 %v4719, %v4747
    %v4752 = vrot.slane %v4189, 4
    %v4753 = vrot.slane %v4191, 4
    %v4754 = vrot.slane %v4260, 4
    %v4755 = vrot.slane %v4262, 4
    %4760 = vrot.lane.b32.xlu0 %v4752, 101
    %v4761 = vpop.permute.xlu0 %4760
    %4762 = vrot.lane.b32.xlu0 %v4753, 101
    %v4763 = vpop.permute.xlu0 %4762
    %4764 = vrot.lane.b32.xlu0 %v4754, 101
    %v4765 = vpop.permute.xlu0 %4764
    %4766 = vrot.lane.b32.xlu0 %v4755, 101
    %v4767 = vpop.permute.xlu0 %4766
    %v4768 = vsel %vm875, %v4765, %v4767
    %v4769 = vsel %vm875, %v4763, %v4765
    %v4770 = vsel %vm875, %v4761, %v4763
    %v4771 = vsel %vm875, %v4767, %v4761
    %v4772 = vmul.f32 %v4770, %v886
    %v4773 = vmul.f32 %v4769, %v890
    %v4774 = vmul.f32 %v4768, %v894
    %v4775 = vmul.f32 %v4771, %v898
    %v4776 = vadd.f32 %v4748, %v4772
    %v4777 = vadd.f32 %v4749, %v4773
    %v4778 = vadd.f32 %v4750, %v4774
    %v4779 = vadd.f32 %v4751, %v4775
    %v4780 = vrot.slane %v4189, 6
    %v4781 = vrot.slane %v4191, 6
    %v4782 = vrot.slane %v4260, 6
    %v4783 = vrot.slane %v4262, 6
    %4788 = vrot.lane.b32.xlu0 %v4780, 100
    %v4789 = vpop.permute.xlu0 %4788
    %4790 = vrot.lane.b32.xlu0 %v4781, 100
    %v4791 = vpop.permute.xlu0 %4790
    %4792 = vrot.lane.b32.xlu0 %v4782, 100
    %v4793 = vpop.permute.xlu0 %4792
    %4794 = vrot.lane.b32.xlu0 %v4783, 100
    %v4795 = vpop.permute.xlu0 %4794
    %v4796 = vsel %vm915, %v4793, %v4795
    %v4797 = vsel %vm915, %v4791, %v4793
    %v4798 = vsel %vm915, %v4789, %v4791
    %v4799 = vsel %vm915, %v4795, %v4789
    %v4800 = vmul.f32 %v4798, %v926
    %v4801 = vmul.f32 %v4797, %v930
    %v4802 = vmul.f32 %v4796, %v934
    %v4803 = vmul.f32 %v4799, %v938
    %v4804 = vadd.f32 %v4776, %v4800
    %v4805 = vadd.f32 %v4777, %v4801
    %v4806 = vadd.f32 %v4778, %v4802
    %v4807 = vadd.f32 %v4779, %v4803
    %4808 = vrot.lane.b32.xlu0 %v4193, 99
    %v4809 = vpop.permute.xlu0 %4808
    %4810 = vrot.lane.b32.xlu0 %v4195, 99
    %v4811 = vpop.permute.xlu0 %4810
    %4812 = vrot.lane.b32.xlu0 %v4264, 99
    %v4813 = vpop.permute.xlu0 %4812
    %4814 = vrot.lane.b32.xlu0 %v4266, 99
    %v4815 = vpop.permute.xlu0 %4814
    %v4816 = vsel %vm955, %v4813, %v4815
    %v4817 = vsel %vm955, %v4811, %v4813
    %v4818 = vsel %vm955, %v4809, %v4811
    %v4819 = vsel %vm955, %v4815, %v4809
    %v4820 = vmul.f32 %v4818, %v966
    %v4821 = vmul.f32 %v4817, %v970
    %v4822 = vmul.f32 %v4816, %v974
    %v4823 = vmul.f32 %v4819, %v978
    %v4824 = vadd.f32 %v4804, %v4820
    %v4825 = vadd.f32 %v4805, %v4821
    %v4826 = vadd.f32 %v4806, %v4822
    %v4827 = vadd.f32 %v4807, %v4823
    %v4832 = vrot.slane %v4193, 2
    %v4833 = vrot.slane %v4195, 2
    %v4834 = vrot.slane %v4264, 2
    %v4835 = vrot.slane %v4266, 2
    %4840 = vrot.lane.b32.xlu0 %v4832, 97
    %v4841 = vpop.permute.xlu0 %4840
    %4842 = vrot.lane.b32.xlu0 %v4833, 97
    %v4843 = vpop.permute.xlu0 %4842
    %4844 = vrot.lane.b32.xlu0 %v4834, 97
    %v4845 = vpop.permute.xlu0 %4844
    %4846 = vrot.lane.b32.xlu0 %v4835, 97
    %v4847 = vpop.permute.xlu0 %4846
    %v4848 = vsel %vm995, %v4845, %v4847
    %v4849 = vsel %vm995, %v4843, %v4845
    %v4850 = vsel %vm995, %v4841, %v4843
    %v4851 = vsel %vm995, %v4847, %v4841
    %v4852 = vmul.f32 %v4850, %v1006
    %v4853 = vmul.f32 %v4849, %v1010
    %v4854 = vmul.f32 %v4848, %v1014
    %v4855 = vmul.f32 %v4851, %v1018
    %v4856 = vadd.f32 %v4824, %v4852
    %v4857 = vadd.f32 %v4825, %v4853
    %v4858 = vadd.f32 %v4826, %v4854
    %v4859 = vadd.f32 %v4827, %v4855
    %v4860 = vrot.slane %v4193, 4
    %v4861 = vrot.slane %v4195, 4
    %v4862 = vrot.slane %v4264, 4
    %v4863 = vrot.slane %v4266, 4
    %4868 = vrot.lane.b32.xlu0 %v4860, 96
    %v4869 = vpop.permute.xlu0 %4868
    %4870 = vrot.lane.b32.xlu0 %v4861, 96
    %v4871 = vpop.permute.xlu0 %4870
    %4872 = vrot.lane.b32.xlu0 %v4862, 96
    %v4873 = vpop.permute.xlu0 %4872
    %4874 = vrot.lane.b32.xlu0 %v4863, 96
    %v4875 = vpop.permute.xlu0 %4874
    %v4876 = vsel %vm1035, %v4873, %v4875
    %v4877 = vsel %vm1035, %v4871, %v4873
    %v4878 = vsel %vm1035, %v4869, %v4871
    %v4879 = vsel %vm1035, %v4875, %v4869
    %v4880 = vmul.f32 %v4878, %v1046
    %v4881 = vmul.f32 %v4877, %v1050
    %v4882 = vmul.f32 %v4876, %v1054
    %v4883 = vmul.f32 %v4879, %v1058
    %v4884 = vadd.f32 %v4856, %v4880
    %v4885 = vadd.f32 %v4857, %v4881
    %v4886 = vadd.f32 %v4858, %v4882
    %v4887 = vadd.f32 %v4859, %v4883
    %v4888 = vrot.slane %v4193, 6
    %v4889 = vrot.slane %v4195, 6
    %v4890 = vrot.slane %v4264, 6
    %v4891 = vrot.slane %v4266, 6
    %4896 = vrot.lane.b32.xlu0 %v4888, 95
    %v4897 = vpop.permute.xlu0 %4896
    %4898 = vrot.lane.b32.xlu0 %v4889, 95
    %v4899 = vpop.permute.xlu0 %4898
    %4900 = vrot.lane.b32.xlu0 %v4890, 95
    %v4901 = vpop.permute.xlu0 %4900
    %4902 = vrot.lane.b32.xlu0 %v4891, 95
    %v4903 = vpop.permute.xlu0 %4902
    %v4904 = vsel %vm1075, %v4901, %v4903
    %v4905 = vsel %vm1075, %v4899, %v4901
    %v4906 = vsel %vm1075, %v4897, %v4899
    %v4907 = vsel %vm1075, %v4903, %v4897
    %v4908 = vmul.f32 %v4906, %v1086
    %v4909 = vmul.f32 %v4905, %v1090
    %v4910 = vmul.f32 %v4904, %v1094
    %v4911 = vmul.f32 %v4907, %v1098
    %v4912 = vadd.f32 %v4884, %v4908
    %v4913 = vadd.f32 %v4885, %v4909
    %v4914 = vadd.f32 %v4886, %v4910
    %v4915 = vadd.f32 %v4887, %v4911
    %4916 = vrot.lane.b32.xlu0 %v4199, 93
    %v4917 = vpop.permute.xlu0 %4916
    %4918 = vrot.lane.b32.xlu0 %v4201, 93
    %v4919 = vpop.permute.xlu0 %4918
    %4920 = vrot.lane.b32.xlu0 %v4270, 93
    %v4921 = vpop.permute.xlu0 %4920
    %4922 = vrot.lane.b32.xlu0 %v4272, 93
    %v4923 = vpop.permute.xlu0 %4922
    %v4924 = vsel %vm1115, %v4921, %v4923
    %v4925 = vsel %vm1115, %v4919, %v4921
    %v4926 = vsel %vm1115, %v4917, %v4919
    %v4927 = vsel %vm1115, %v4923, %v4917
    %v4928 = vmul.f32 %v4926, %v1126
    %v4929 = vmul.f32 %v4925, %v1130
    %v4930 = vmul.f32 %v4924, %v1134
    %v4931 = vmul.f32 %v4927, %v1138
    %v4932 = vadd.f32 %v4912, %v4928
    %v4933 = vadd.f32 %v4913, %v4929
    %v4934 = vadd.f32 %v4914, %v4930
    %v4935 = vadd.f32 %v4915, %v4931
    %v4940 = vrot.slane %v4199, 2
    %v4941 = vrot.slane %v4201, 2
    %v4942 = vrot.slane %v4270, 2
    %v4943 = vrot.slane %v4272, 2
    %4948 = vrot.lane.b32.xlu0 %v4940, 92
    %v4949 = vpop.permute.xlu0 %4948
    %4950 = vrot.lane.b32.xlu0 %v4941, 92
    %v4951 = vpop.permute.xlu0 %4950
    %4952 = vrot.lane.b32.xlu0 %v4942, 92
    %v4953 = vpop.permute.xlu0 %4952
    %4954 = vrot.lane.b32.xlu0 %v4943, 92
    %v4955 = vpop.permute.xlu0 %4954
    %v4956 = vsel %vm1155, %v4953, %v4955
    %v4957 = vsel %vm1155, %v4951, %v4953
    %v4958 = vsel %vm1155, %v4949, %v4951
    %v4959 = vsel %vm1155, %v4955, %v4949
    %v4960 = vmul.f32 %v4958, %v1166
    %v4961 = vmul.f32 %v4957, %v1170
    %v4962 = vmul.f32 %v4956, %v1174
    %v4963 = vmul.f32 %v4959, %v1178
    %v4964 = vadd.f32 %v4932, %v4960
    %v4965 = vadd.f32 %v4933, %v4961
    %v4966 = vadd.f32 %v4934, %v4962
    %v4967 = vadd.f32 %v4935, %v4963
    %v4968 = vrot.slane %v4199, 4
    %v4969 = vrot.slane %v4201, 4
    %v4970 = vrot.slane %v4270, 4
    %v4971 = vrot.slane %v4272, 4
    %4976 = vrot.lane.b32.xlu0 %v4968, 91
    %v4977 = vpop.permute.xlu0 %4976
    %4978 = vrot.lane.b32.xlu0 %v4969, 91
    %v4979 = vpop.permute.xlu0 %4978
    %4980 = vrot.lane.b32.xlu0 %v4970, 91
    %v4981 = vpop.permute.xlu0 %4980
    %4982 = vrot.lane.b32.xlu0 %v4971, 91
    %v4983 = vpop.permute.xlu0 %4982
    %v4984 = vsel %vm1195, %v4981, %v4983
    %v4985 = vsel %vm1195, %v4979, %v4981
    %v4986 = vsel %vm1195, %v4977, %v4979
    %v4987 = vsel %vm1195, %v4983, %v4977
    %v4988 = vmul.f32 %v4986, %v1206
    %v4989 = vmul.f32 %v4985, %v1210
    %v4990 = vmul.f32 %v4984, %v1214
    %v4991 = vmul.f32 %v4987, %v1218
    %v4992 = vadd.f32 %v4964, %v4988
    %v4993 = vadd.f32 %v4965, %v4989
    %v4994 = vadd.f32 %v4966, %v4990
    %v4995 = vadd.f32 %v4967, %v4991
    %v4996 = vld [vmem:[#allocation7] sm:$0x3]
    %4998 = vset.pattern.permute.xlu0 0
    %4999 = vperm.xlu0 %4998, %v4996
    %v5000 = vpop.permute.xlu0 %4999
    %v5002 = vadd.f32 %v4992, %v5000
    %v5003 = vadd.f32 %v4993, %v5000
    %v5004 = vadd.f32 %v4994, %v5000
    %v5005 = vadd.f32 %v4995, %v5000
    %v5006 = vmax.f32 %v5002, 0.0
    %v5007 = vmax.f32 %v5003, 0.0
    %v5008 = vmax.f32 %v5004, 0.0
    %v5009 = vmax.f32 %v5005, 0.0
    %v5010 = vld [vmem:[%s9] sm:$0xff]
    %v5011 = vld [vmem:[%s9 + $0x8] sm:$0xff]
    %v5012 = vld [vmem:[%s9 + $0x10] sm:$0xff]
    %v5013 = vld [vmem:[%s9 + $0x18] sm:$0xff]
    %v5014 = vld [vmem:[%s9 + $0x20] sm:$0xff]
    %v5015 = vld [vmem:[%s9 + $0x28] sm:$0xff]
    %v5016 = vld [vmem:[%s9 + $0x30] sm:$0xff]
    %v5017 = vld [vmem:[%s9 + $0x38] sm:$0xff]
    %v5018 = vld [vmem:[%s9 + $0x40] sm:$0xff]
    %v5019 = vld [vmem:[%s9 + $0x48] sm:$0xff]
    %v5020 = vld [vmem:[%s9 + $0x50] sm:$0xff]
    %v5021 = vld [vmem:[%s9 + $0x58] sm:$0xff]
    %v5022 = vld [vmem:[%s9 + $0x60] sm:$0xff]
    %v5023 = vld [vmem:[%s9 + $0x68] sm:$0xff]
    %v5024 = vld [vmem:[%s9 + $0x70] sm:$0xff]
    %v5025 = vld [vmem:[%s9 + $0x78] sm:$0xff]
    %v5026 = vld [vmem:[%s9 + $0x80] sm:$0xff]
    %v5027 = vld [vmem:[%s9 + $0x88] sm:$0xff]
    %v5028 = vld [vmem:[%s9 + $0x90] sm:$0xff]
    %v5029 = vld [vmem:[%s9 + $0x98] sm:$0xff]
    %v5030 = vld [vmem:[%s9 + $0xa0] sm:$0xff]
    %v5031 = vld [vmem:[%s9 + $0xa8] sm:$0xff]
    %v5032 = vld [vmem:[%s9 + $0xb0] sm:$0xff]
    %v5033 = vld [vmem:[%s9 + $0xb8] sm:$0xff]
    %v5034 = vld [vmem:[%s9 + $0xc0] sm:$0xff]
    %v5035 = vld [vmem:[%s9 + $0xc8] sm:$0xff]
    %v5036 = vld [vmem:[%s9 + $0xd0] sm:$0xff]
    %v5037 = vld [vmem:[%s9 + $0xd8] sm:$0xff]
    %v5038 = vld [vmem:[%s9 + $0xe0] sm:$0xff]
    %v5039 = vld [vmem:[%s9 + $0xe8] sm:$0xff]
    %v5040 = vld [vmem:[%s9 + $0xf0] sm:$0xff]
    %v5041 = vld [vmem:[%s9 + $0xf8] sm:$0xff]
    %v5042 = vld [vmem:[%s9 + $0x100] sm:$0xff]
    %v5043 = vld [vmem:[%s9 + $0x108] sm:$0xff]
    %v5044 = vld [vmem:[%s9 + $0x110] sm:$0xff]
    %v5045 = vld [vmem:[%s9 + $0x118] sm:$0xff]
    %v5046 = vld [vmem:[%s9 + $0x120] sm:$0xff]
    %v5047 = vld [vmem:[%s9 + $0x128] sm:$0xff]
    %v5048 = vld [vmem:[%s9 + $0x130] sm:$0xff]
    %v5049 = vld [vmem:[%s9 + $0x138] sm:$0xff]
    %v5050 = vld [vmem:[%s9 + $0x140] sm:$0xff]
    %v5051 = vld [vmem:[%s9 + $0x148] sm:$0xff]
    %v5052 = vld [vmem:[%s9 + $0x150] sm:$0xff]
    %v5053 = vld [vmem:[%s9 + $0x158] sm:$0xff]
    %v5054 = vld [vmem:[%s9 + $0x160] sm:$0xff]
    %v5055 = vld [vmem:[%s9 + $0x168] sm:$0xff]
    %v5056 = vld [vmem:[%s9 + $0x170] sm:$0xff]
    %v5057 = vld [vmem:[%s9 + $0x178] sm:$0xff]
    %v5058 = vld [vmem:[%s9 + $0x180] sm:$0xff]
    %v5059 = vld [vmem:[%s9 + $0x188] sm:$0xff]
    %v5060 = vld [vmem:[%s9 + $0x190] sm:$0xff]
    %v5061 = vld [vmem:[%s9 + $0x198] sm:$0xff]
    %v5062 = vld [vmem:[%s9 + $0x1a0] sm:$0xff]
    %v5063 = vld [vmem:[%s9 + $0x1a8] sm:$0xff]
    %v5064 = vld [vmem:[%s9 + $0x1b0] sm:$0xff]
    %v5065 = vld [vmem:[%s9 + $0x1b8] sm:$0xff]
    %v5066 = vld [vmem:[%s9 + $0x1c0] sm:$0xff]
    %v5067 = vld [vmem:[%s9 + $0x1c8] sm:$0xff]
    %v5068 = vld [vmem:[%s9 + $0x1d0] sm:$0xff]
    %v5069 = vld [vmem:[%s9 + $0x1d8] sm:$0xff]
    %v5070 = vld [vmem:[%s9 + $0x1e0] sm:$0xff]
    %v5071 = vld [vmem:[%s9 + $0x1e8] sm:$0xff]
    %v5072 = vld [vmem:[%s9 + $0x1f0] sm:$0xff]
    %v5073 = vld [vmem:[%s9 + $0x1f8] sm:$0xff]
    %s5074 = scalar_lea.vmem %s9, 512
    %v5075 = vld [vmem:[%s5074] sm:$0xff]
    %v5076 = vld [vmem:[%s5074 + $0x8] sm:$0xff]
    %v5077 = vld [vmem:[%s5074 + $0x10] sm:$0xff]
    %v5078 = vld [vmem:[%s5074 + $0x18] sm:$0xff]
    %v5079 = vld [vmem:[%s5074 + $0x20] sm:$0xff]
    %v5080 = vld [vmem:[%s5074 + $0x28] sm:$0xff]
    %v5081 = vld [vmem:[%s5074 + $0x30] sm:$0xff]
    %v5082 = vld [vmem:[%s5074 + $0x38] sm:$0xff]
    %v5083 = vld [vmem:[%s5074 + $0x40] sm:$0xff]
    %v5084 = vld [vmem:[%s5074 + $0x48] sm:$0xff]
    %v5085 = vld [vmem:[%s5074 + $0x50] sm:$0xff]
    %v5086 = vld [vmem:[%s5074 + $0x58] sm:$0xff]
    %v5087 = vld [vmem:[%s5074 + $0x60] sm:$0xff]
    %v5088 = vld [vmem:[%s5074 + $0x68] sm:$0xff]
    %v5089 = vld [vmem:[%s5074 + $0x70] sm:$0xff]
    %v5090 = vld [vmem:[%s5074 + $0x78] sm:$0xff]
    %v5091 = vld [vmem:[%s5074 + $0x80] sm:$0xff]
    %v5092 = vld [vmem:[%s5074 + $0x88] sm:$0xff]
    %v5093 = vld [vmem:[%s5074 + $0x90] sm:$0xff]
    %v5094 = vld [vmem:[%s5074 + $0x98] sm:$0xff]
    %v5095 = vld [vmem:[%s5074 + $0xa0] sm:$0xff]
    %v5096 = vld [vmem:[%s5074 + $0xa8] sm:$0xff]
    %v5097 = vld [vmem:[%s5074 + $0xb0] sm:$0xff]
    %v5098 = vld [vmem:[%s5074 + $0xb8] sm:$0xff]
    %v5099 = vld [vmem:[%s5074 + $0xc0] sm:$0xff]
    %v5100 = vld [vmem:[%s5074 + $0xc8] sm:$0xff]
    %v5101 = vld [vmem:[%s5074 + $0xd0] sm:$0xff]
    %v5102 = vld [vmem:[%s5074 + $0xd8] sm:$0xff]
    %v5103 = vld [vmem:[%s5074 + $0xe0] sm:$0xff]
    %v5104 = vld [vmem:[%s5074 + $0xe8] sm:$0xff]
    %v5105 = vld [vmem:[%s5074 + $0xf0] sm:$0xff]
    %v5106 = vld [vmem:[%s5074 + $0xf8] sm:$0xff]
    %v5107 = vld [vmem:[%s5074 + $0x100] sm:$0xff]
    %v5108 = vld [vmem:[%s5074 + $0x108] sm:$0xff]
    %v5109 = vld [vmem:[%s5074 + $0x110] sm:$0xff]
    %v5110 = vld [vmem:[%s5074 + $0x118] sm:$0xff]
    %v5111 = vld [vmem:[%s5074 + $0x120] sm:$0xff]
    %v5112 = vld [vmem:[%s5074 + $0x128] sm:$0xff]
    %v5113 = vld [vmem:[%s5074 + $0x130] sm:$0xff]
    %v5114 = vld [vmem:[%s5074 + $0x138] sm:$0xff]
    %v5115 = vld [vmem:[%s5074 + $0x140] sm:$0xff]
    %v5116 = vld [vmem:[%s5074 + $0x148] sm:$0xff]
    %v5117 = vld [vmem:[%s5074 + $0x150] sm:$0xff]
    %v5118 = vld [vmem:[%s5074 + $0x158] sm:$0xff]
    %v5119 = vld [vmem:[%s5074 + $0x160] sm:$0xff]
    %v5120 = vld [vmem:[%s5074 + $0x168] sm:$0xff]
    %v5121 = vld [vmem:[%s5074 + $0x170] sm:$0xff]
    %v5122 = vld [vmem:[%s5074 + $0x178] sm:$0xff]
    %v5123 = vld [vmem:[%s5074 + $0x180] sm:$0xff]
    %v5124 = vld [vmem:[%s5074 + $0x188] sm:$0xff]
    %v5125 = vld [vmem:[%s5074 + $0x190] sm:$0xff]
    %v5126 = vld [vmem:[%s5074 + $0x198] sm:$0xff]
    %v5127 = vld [vmem:[%s5074 + $0x1a0] sm:$0xff]
    %v5128 = vld [vmem:[%s5074 + $0x1a8] sm:$0xff]
    %v5129 = vld [vmem:[%s5074 + $0x1b0] sm:$0xff]
    %v5130 = vld [vmem:[%s5074 + $0x1b8] sm:$0xff]
    %v5131 = vld [vmem:[%s5074 + $0x1c0] sm:$0xff]
    %v5132 = vld [vmem:[%s5074 + $0x1c8] sm:$0xff]
    %v5133 = vld [vmem:[%s5074 + $0x1d0] sm:$0xff]
    %v5134 = vld [vmem:[%s5074 + $0x1d8] sm:$0xff]
    %v5135 = vld [vmem:[%s5074 + $0x1e0] sm:$0xff]
    %v5136 = vld [vmem:[%s5074 + $0x1e8] sm:$0xff]
    %v5137 = vld [vmem:[%s5074 + $0x1f0] sm:$0xff]
    %v5138 = vld [vmem:[%s5074 + $0x1f8] sm:$0xff]
    %v5143 = vrot.slane %v5006, 1
    %v5144 = vrot.slane %v5007, 1
    %v5145 = vrot.slane %v5008, 1
    %v5146 = vrot.slane %v5009, 1
    %5151 = vmatprep.subr.mxu0 0.0
    %5152 = vmatpush1.msra.mxu0 %v5075
    %5153 = vmatprep.subr.mxu0 0.0
    %5154 = vmatpush1.msra.mxu0 %v5076
    %5155 = vmatprep.subr.mxu0 0.0
    %5156 = vmatpush1.msra.mxu0 %v5077
    %5157 = vmatprep.subr.mxu0 0.0
    %5158 = vmatpush1.msra.mxu0 %v5078
    %5159 = vmatprep.subr.mxu0 0.0
    %5160 = vmatpush1.msra.mxu0 %v5079
    %5161 = vmatprep.subr.mxu0 0.0
    %5162 = vmatpush1.msra.mxu0 %v5080
    %5163 = vmatprep.subr.mxu0 0.0
    %5164 = vmatpush1.msra.mxu0 %v5081
    %5165 = vmatprep.subr.mxu0 0.0
    %5166 = vmatpush1.msra.mxu0 %v5082
    %5167 = vmatprep.subr.mxu0 0.0
    %5168 = vmatpush1.msra.mxu0 %v5083
    %5169 = vmatprep.subr.mxu0 0.0
    %5170 = vmatpush1.msra.mxu0 %v5084
    %5171 = vmatprep.subr.mxu0 0.0
    %5172 = vmatpush1.msra.mxu0 %v5085
    %5173 = vmatprep.subr.mxu0 0.0
    %5174 = vmatpush1.msra.mxu0 %v5086
    %5175 = vmatprep.subr.mxu0 0.0
    %5176 = vmatpush1.msra.mxu0 %v5087
    %5177 = vmatprep.subr.mxu0 0.0
    %5178 = vmatpush1.msra.mxu0 %v5088
    %5179 = vmatprep.subr.mxu0 0.0
    %5180 = vmatpush1.msra.mxu0 %v5089
    %5181 = vmatprep.subr.mxu0 0.0
    %5182 = vmatpush1.msra.mxu0 %v5090
    %5183 = vmatprep.subr.mxu0 0.0
    %5184 = vmatpush1.msra.mxu0 %v5091
    %5185 = vmatprep.subr.mxu0 0.0
    %5186 = vmatpush1.msra.mxu0 %v5092
    %5187 = vmatprep.subr.mxu0 0.0
    %5188 = vmatpush1.msra.mxu0 %v5093
    %5189 = vmatprep.subr.mxu0 0.0
    %5190 = vmatpush1.msra.mxu0 %v5094
    %5191 = vmatprep.subr.mxu0 0.0
    %5192 = vmatpush1.msra.mxu0 %v5095
    %5193 = vmatprep.subr.mxu0 0.0
    %5194 = vmatpush1.msra.mxu0 %v5096
    %5195 = vmatprep.subr.mxu0 0.0
    %5196 = vmatpush1.msra.mxu0 %v5097
    %5197 = vmatprep.subr.mxu0 0.0
    %5198 = vmatpush1.msra.mxu0 %v5098
    %5199 = vmatprep.subr.mxu0 0.0
    %5200 = vmatpush1.msra.mxu0 %v5099
    %5201 = vmatprep.subr.mxu0 0.0
    %5202 = vmatpush1.msra.mxu0 %v5100
    %5203 = vmatprep.subr.mxu0 0.0
    %5204 = vmatpush1.msra.mxu0 %v5101
    %5205 = vmatprep.subr.mxu0 0.0
    %5206 = vmatpush1.msra.mxu0 %v5102
    %5207 = vmatprep.subr.mxu0 0.0
    %5208 = vmatpush1.msra.mxu0 %v5103
    %5209 = vmatprep.subr.mxu0 0.0
    %5210 = vmatpush1.msra.mxu0 %v5104
    %5211 = vmatprep.subr.mxu0 0.0
    %5212 = vmatpush1.msra.mxu0 %v5105
    %5213 = vmatprep.subr.mxu0 0.0
    %5214 = vmatpush1.msra.mxu0 %v5106
    %5215 = vmatprep.mubr.f32.mxu0 %v5144
    %5216 = vmatmul.mubr.f32.gmra.mrb[0].mxu0 %v5143
    %v5217 = vpop.f32.mrb[0].mxu0
    %v5218 = vadd.f32 0.0, %v5217
    %v5219 = vpop.f32.mrb[0].mxu0
    %5220 = vdwg.mxu0
    %5221 = vmatprep.subr.mxu0 0.0
    %5222 = vmatpush1.msra.mxu0 %v5107
    %5223 = vmatprep.subr.mxu0 0.0
    %5224 = vmatpush1.msra.mxu0 %v5108
    %5225 = vmatprep.subr.mxu0 0.0
    %5226 = vmatpush1.msra.mxu0 %v5109
    %5227 = vmatprep.subr.mxu0 0.0
    %5228 = vmatpush1.msra.mxu0 %v5110
    %5229 = vmatprep.subr.mxu0 0.0
    %5230 = vmatpush1.msra.mxu0 %v5111
    %5231 = vmatprep.subr.mxu0 0.0
    %5232 = vmatpush1.msra.mxu0 %v5112
    %5233 = vmatprep.subr.mxu0 0.0
    %5234 = vmatpush1.msra.mxu0 %v5113
    %5235 = vmatprep.subr.mxu0 0.0
    %5236 = vmatpush1.msra.mxu0 %v5114
    %5237 = vmatprep.subr.mxu0 0.0
    %5238 = vmatpush1.msra.mxu0 %v5115
    %5239 = vmatprep.subr.mxu0 0.0
    %5240 = vmatpush1.msra.mxu0 %v5116
    %5241 = vmatprep.subr.mxu0 0.0
    %5242 = vmatpush1.msra.mxu0 %v5117
    %5243 = vmatprep.subr.mxu0 0.0
    %5244 = vmatpush1.msra.mxu0 %v5118
    %5245 = vmatprep.subr.mxu0 0.0
    %5246 = vmatpush1.msra.mxu0 %v5119
    %5247 = vmatprep.subr.mxu0 0.0
    %5248 = vmatpush1.msra.mxu0 %v5120
    %5249 = vmatprep.subr.mxu0 0.0
    %5250 = vmatpush1.msra.mxu0 %v5121
    %5251 = vmatprep.subr.mxu0 0.0
    %5252 = vmatpush1.msra.mxu0 %v5122
    %5253 = vmatprep.subr.mxu0 0.0
    %5254 = vmatpush1.msra.mxu0 %v5123
    %5255 = vmatprep.subr.mxu0 0.0
    %5256 = vmatpush1.msra.mxu0 %v5124
    %5257 = vmatprep.subr.mxu0 0.0
    %5258 = vmatpush1.msra.mxu0 %v5125
    %5259 = vmatprep.subr.mxu0 0.0
    %5260 = vmatpush1.msra.mxu0 %v5126
    %5261 = vmatprep.subr.mxu0 0.0
    %5262 = vmatpush1.msra.mxu0 %v5127
    %5263 = vmatprep.subr.mxu0 0.0
    %5264 = vmatpush1.msra.mxu0 %v5128
    %5265 = vmatprep.subr.mxu0 0.0
    %5266 = vmatpush1.msra.mxu0 %v5129
    %5267 = vmatprep.subr.mxu0 0.0
    %5268 = vmatpush1.msra.mxu0 %v5130
    %5269 = vmatprep.subr.mxu0 0.0
    %5270 = vmatpush1.msra.mxu0 %v5131
    %5271 = vmatprep.subr.mxu0 0.0
    %5272 = vmatpush1.msra.mxu0 %v5132
    %5273 = vmatprep.subr.mxu0 0.0
    %5274 = vmatpush1.msra.mxu0 %v5133
    %5275 = vmatprep.subr.mxu0 0.0
    %5276 = vmatpush1.msra.mxu0 %v5134
    %5277 = vmatprep.subr.mxu0 0.0
    %5278 = vmatpush1.msra.mxu0 %v5135
    %5279 = vmatprep.subr.mxu0 0.0
    %5280 = vmatpush1.msra.mxu0 %v5136
    %5281 = vmatprep.subr.mxu0 0.0
    %5282 = vmatpush1.msra.mxu0 %v5137
    %5283 = vmatprep.subr.mxu0 0.0
    %5284 = vmatpush1.msra.mxu0 %v5138
    %5285 = vmatprep.mubr.f32.mxu0 %v5146
    %5286 = vmatmul.mubr.f32.gmra.mrb[0].mxu0 %v5145
    %v5287 = vpop.f32.mrb[0].mxu0
    %v5288 = vadd.f32 %v5218, %v5287
    %v5289 = vpop.f32.mrb[0].mxu0
    %5290 = vdwg.mxu0
    %5291 = vmatprep.subr.mxu0 0.0
    %5292 = vmatpush1.msra.mxu0 %v5010
    %5293 = vmatprep.subr.mxu0 0.0
    %5294 = vmatpush1.msra.mxu0 %v5011
    %5295 = vmatprep.subr.mxu0 0.0
    %5296 = vmatpush1.msra.mxu0 %v5012
    %5297 = vmatprep.subr.mxu0 0.0
    %5298 = vmatpush1.msra.mxu0 %v5013
    %5299 = vmatprep.subr.mxu0 0.0
    %5300 = vmatpush1.msra.mxu0 %v5014
    %5301 = vmatprep.subr.mxu0 0.0
    %5302 = vmatpush1.msra.mxu0 %v5015
    %5303 = vmatprep.subr.mxu0 0.0
    %5304 = vmatpush1.msra.mxu0 %v5016
    %5305 = vmatprep.subr.mxu0 0.0
    %5306 = vmatpush1.msra.mxu0 %v5017
    %5307 = vmatprep.subr.mxu0 0.0
    %5308 = vmatpush1.msra.mxu0 %v5018
    %5309 = vmatprep.subr.mxu0 0.0
    %5310 = vmatpush1.msra.mxu0 %v5019
    %5311 = vmatprep.subr.mxu0 0.0
    %5312 = vmatpush1.msra.mxu0 %v5020
    %5313 = vmatprep.subr.mxu0 0.0
    %5314 = vmatpush1.msra.mxu0 %v5021
    %5315 = vmatprep.subr.mxu0 0.0
    %5316 = vmatpush1.msra.mxu0 %v5022
    %5317 = vmatprep.subr.mxu0 0.0
    %5318 = vmatpush1.msra.mxu0 %v5023
    %5319 = vmatprep.subr.mxu0 0.0
    %5320 = vmatpush1.msra.mxu0 %v5024
    %5321 = vmatprep.subr.mxu0 0.0
    %5322 = vmatpush1.msra.mxu0 %v5025
    %5323 = vmatprep.subr.mxu0 0.0
    %5324 = vmatpush1.msra.mxu0 %v5026
    %5325 = vmatprep.subr.mxu0 0.0
    %5326 = vmatpush1.msra.mxu0 %v5027
    %5327 = vmatprep.subr.mxu0 0.0
    %5328 = vmatpush1.msra.mxu0 %v5028
    %5329 = vmatprep.subr.mxu0 0.0
    %5330 = vmatpush1.msra.mxu0 %v5029
    %5331 = vmatprep.subr.mxu0 0.0
    %5332 = vmatpush1.msra.mxu0 %v5030
    %5333 = vmatprep.subr.mxu0 0.0
    %5334 = vmatpush1.msra.mxu0 %v5031
    %5335 = vmatprep.subr.mxu0 0.0
    %5336 = vmatpush1.msra.mxu0 %v5032
    %5337 = vmatprep.subr.mxu0 0.0
    %5338 = vmatpush1.msra.mxu0 %v5033
    %5339 = vmatprep.subr.mxu0 0.0
    %5340 = vmatpush1.msra.mxu0 %v5034
    %5341 = vmatprep.subr.mxu0 0.0
    %5342 = vmatpush1.msra.mxu0 %v5035
    %5343 = vmatprep.subr.mxu0 0.0
    %5344 = vmatpush1.msra.mxu0 %v5036
    %5345 = vmatprep.subr.mxu0 0.0
    %5346 = vmatpush1.msra.mxu0 %v5037
    %5347 = vmatprep.subr.mxu0 0.0
    %5348 = vmatpush1.msra.mxu0 %v5038
    %5349 = vmatprep.subr.mxu0 0.0
    %5350 = vmatpush1.msra.mxu0 %v5039
    %5351 = vmatprep.subr.mxu0 0.0
    %5352 = vmatpush1.msra.mxu0 %v5040
    %5353 = vmatprep.subr.mxu0 0.0
    %5354 = vmatpush1.msra.mxu0 %v5041
    %5355 = vmatprep.mubr.f32.mxu0 %v5007
    %5356 = vmatmul.mubr.f32.gmra.mrb[0].mxu0 %v5006
    %v5357 = vpop.f32.mrb[0].mxu0
    %v5358 = vadd.f32 %v5288, %v5357
    %v5359 = vpop.f32.mrb[0].mxu0
    %5360 = vdwg.mxu0
    %5361 = vmatprep.subr.mxu0 0.0
    %5362 = vmatpush1.msra.mxu0 %v5042
    %5363 = vmatprep.subr.mxu0 0.0
    %5364 = vmatpush1.msra.mxu0 %v5043
    %5365 = vmatprep.subr.mxu0 0.0
    %5366 = vmatpush1.msra.mxu0 %v5044
    %5367 = vmatprep.subr.mxu0 0.0
    %5368 = vmatpush1.msra.mxu0 %v5045
    %5369 = vmatprep.subr.mxu0 0.0
    %5370 = vmatpush1.msra.mxu0 %v5046
    %5371 = vmatprep.subr.mxu0 0.0
    %5372 = vmatpush1.msra.mxu0 %v5047
    %5373 = vmatprep.subr.mxu0 0.0
    %5374 = vmatpush1.msra.mxu0 %v5048
    %5375 = vmatprep.subr.mxu0 0.0
    %5376 = vmatpush1.msra.mxu0 %v5049
    %5377 = vmatprep.subr.mxu0 0.0
    %5378 = vmatpush1.msra.mxu0 %v5050
    %5379 = vmatprep.subr.mxu0 0.0
    %5380 = vmatpush1.msra.mxu0 %v5051
    %5381 = vmatprep.subr.mxu0 0.0
    %5382 = vmatpush1.msra.mxu0 %v5052
    %5383 = vmatprep.subr.mxu0 0.0
    %5384 = vmatpush1.msra.mxu0 %v5053
    %5385 = vmatprep.subr.mxu0 0.0
    %5386 = vmatpush1.msra.mxu0 %v5054
    %5387 = vmatprep.subr.mxu0 0.0
    %5388 = vmatpush1.msra.mxu0 %v5055
    %5389 = vmatprep.subr.mxu0 0.0
    %5390 = vmatpush1.msra.mxu0 %v5056
    %5391 = vmatprep.subr.mxu0 0.0
    %5392 = vmatpush1.msra.mxu0 %v5057
    %5393 = vmatprep.subr.mxu0 0.0
    %5394 = vmatpush1.msra.mxu0 %v5058
    %5395 = vmatprep.subr.mxu0 0.0
    %5396 = vmatpush1.msra.mxu0 %v5059
    %5397 = vmatprep.subr.mxu0 0.0
    %5398 = vmatpush1.msra.mxu0 %v5060
    %5399 = vmatprep.subr.mxu0 0.0
    %5400 = vmatpush1.msra.mxu0 %v5061
    %5401 = vmatprep.subr.mxu0 0.0
    %5402 = vmatpush1.msra.mxu0 %v5062
    %5403 = vmatprep.subr.mxu0 0.0
    %5404 = vmatpush1.msra.mxu0 %v5063
    %5405 = vmatprep.subr.mxu0 0.0
    %5406 = vmatpush1.msra.mxu0 %v5064
    %5407 = vmatprep.subr.mxu0 0.0
    %5408 = vmatpush1.msra.mxu0 %v5065
    %5409 = vmatprep.subr.mxu0 0.0
    %5410 = vmatpush1.msra.mxu0 %v5066
    %5411 = vmatprep.subr.mxu0 0.0
    %5412 = vmatpush1.msra.mxu0 %v5067
    %5413 = vmatprep.subr.mxu0 0.0
    %5414 = vmatpush1.msra.mxu0 %v5068
    %5415 = vmatprep.subr.mxu0 0.0
    %5416 = vmatpush1.msra.mxu0 %v5069
    %5417 = vmatprep.subr.mxu0 0.0
    %5418 = vmatpush1.msra.mxu0 %v5070
    %5419 = vmatprep.subr.mxu0 0.0
    %5420 = vmatpush1.msra.mxu0 %v5071
    %5421 = vmatprep.subr.mxu0 0.0
    %5422 = vmatpush1.msra.mxu0 %v5072
    %5423 = vmatprep.subr.mxu0 0.0
    %5424 = vmatpush1.msra.mxu0 %v5073
    %5425 = vmatprep.mubr.f32.mxu0 %v5009
    %5426 = vmatmul.mubr.f32.gmra.mrb[0].mxu0 %v5008
    %v5427 = vpop.f32.mrb[0].mxu0
    %v5428 = vadd.f32 %v5358, %v5427
    %v5429 = vpop.f32.mrb[0].mxu0
    %5430 = vdwg.mxu0
    %v5431 = vld [vmem:[#allocation9] sm:$0x1]
    %v5432 = vadd.f32 %v5428, %v5431
    %v5433 = vmax.f32 %v5432, 0.0
    %v5434 = vld [vmem:[%s11] sm:$0xf]
    %v5435 = vld [vmem:[#allocation10] sm:$0x1]
    %vm5436 = vcmask 31744
    %v5438 = vsel %vm5436, %v5433, 0
    %v5441 = vsel %vm1386, %v5434, 0
    %5443 = vmatprep.subr.mxu0 0.0
    %5444 = vmatpush1.msra.mxu0 %v5441
    %5445 = vmatprep.subr.mxu0 0.0
    %5446 = vmatpush1.msra.mxu0 0.0
    %5447 = vmatprep.subr.mxu0 0.0
    %5448 = vmatpush1.msra.mxu0 0.0
    %5449 = vmatprep.subr.mxu0 0.0
    %5450 = vmatpush1.msra.mxu0 0.0
    %5451 = vmatprep.subr.mxu0 0.0
    %5452 = vmatpush1.msra.mxu0 0.0
    %5453 = vmatprep.subr.mxu0 0.0
    %5454 = vmatpush1.msra.mxu0 0.0
    %5455 = vmatprep.subr.mxu0 0.0
    %5456 = vmatpush1.msra.mxu0 0.0
    %5457 = vmatprep.subr.mxu0 0.0
    %5458 = vmatpush1.msra.mxu0 0.0
    %5459 = vmatprep.subr.mxu0 0.0
    %5460 = vmatpush1.msra.mxu0 0.0
    %5461 = vmatprep.subr.mxu0 0.0
    %5462 = vmatpush1.msra.mxu0 0.0
    %5463 = vmatprep.subr.mxu0 0.0
    %5464 = vmatpush1.msra.mxu0 0.0
    %5465 = vmatprep.subr.mxu0 0.0
    %5466 = vmatpush1.msra.mxu0 0.0
    %5467 = vmatprep.subr.mxu0 0.0
    %5468 = vmatpush1.msra.mxu0 0.0
    %5469 = vmatprep.subr.mxu0 0.0
    %5470 = vmatpush1.msra.mxu0 0.0
    %5471 = vmatprep.subr.mxu0 0.0
    %5472 = vmatpush1.msra.mxu0 0.0
    %5473 = vmatprep.subr.mxu0 0.0
    %5474 = vmatpush1.msra.mxu0 0.0
    %5475 = vmatprep.subr.mxu0 0.0
    %5476 = vmatpush1.msra.mxu0 0.0
    %5477 = vmatprep.subr.mxu0 0.0
    %5478 = vmatpush1.msra.mxu0 0.0
    %5479 = vmatprep.subr.mxu0 0.0
    %5480 = vmatpush1.msra.mxu0 0.0
    %5481 = vmatprep.subr.mxu0 0.0
    %5482 = vmatpush1.msra.mxu0 0.0
    %5483 = vmatprep.subr.mxu0 0.0
    %5484 = vmatpush1.msra.mxu0 0.0
    %5485 = vmatprep.subr.mxu0 0.0
    %5486 = vmatpush1.msra.mxu0 0.0
    %5487 = vmatprep.subr.mxu0 0.0
    %5488 = vmatpush1.msra.mxu0 0.0
    %5489 = vmatprep.subr.mxu0 0.0
    %5490 = vmatpush1.msra.mxu0 0.0
    %5491 = vmatprep.subr.mxu0 0.0
    %5492 = vmatpush1.msra.mxu0 0.0
    %5493 = vmatprep.subr.mxu0 0.0
    %5494 = vmatpush1.msra.mxu0 0.0
    %5495 = vmatprep.subr.mxu0 0.0
    %5496 = vmatpush1.msra.mxu0 0.0
    %5497 = vmatprep.subr.mxu0 0.0
    %5498 = vmatpush1.msra.mxu0 0.0
    %5499 = vmatprep.subr.mxu0 0.0
    %5500 = vmatpush1.msra.mxu0 0.0
    %5501 = vmatprep.subr.mxu0 0.0
    %5502 = vmatpush1.msra.mxu0 0.0
    %5503 = vmatprep.subr.mxu0 0.0
    %5504 = vmatpush1.msra.mxu0 0.0
    %5505 = vmatprep.subr.mxu0 0.0
    %5506 = vmatpush1.msra.mxu0 0.0
    %5507 = vmatprep.mubr.f32.mxu0 0.0
    %5508 = vmatmul.mubr.f32.gmra.mrb[0].mxu0 %v5438
    %v5509 = vpop.f32.mrb[0].mxu0
    %v5510 = vadd.f32 %v5435, %v5509
    %v5511 = vpop.f32.mrb[0].mxu0
    %5512 = vdwg.mxu0
    %vm5513 = vcmask 155648
    %5514 = vst.msk [vmem:[%s13] sm:$0x1] %vm5513, %v5510
    // Predicated region
    $region78: #{_lambda_.1} parent=1 // pred_check
      _
    $region79: #{_lambda_.1} parent=1 // pred_check_branch
      %5516 = sbr.rel (0) target = $region81
    $region80: #{_lambda_.1} parent=1 // pred_region
      _
    $region81: #{_lambda_.1} parent=1 // pred_fallthru
      _
    // Predicated region
    $region82: #{_lambda_.1} parent=1 // pred_check
      _
    $region83: #{_lambda_.1} parent=1 // pred_check_branch
      %5518 = sbr.rel (0) target = $region85
    $region84: #{_lambda_.1} parent=1 // pred_region
      _
    $region85: #{_lambda_.1} parent=1 // pred_fallthru
      _
    %5519 = vsyncpa [#allocation3], 1
    %5520 = vsyncpa [#allocation5], 1
    %5521 = vsyncpa [#allocation8], 1
    %5522 = vsyncpa [#allocation11], 1

</llo_original>
